<compile_context>
chip_gen: v6e
topology: v6e:2x2x1
jax: 0.10.0
libtpu: 0.0.40
codegen_flags: <defaults>
</compile_context>

<pallas_src>
import jax
import jax.numpy as jnp
from jax.experimental import pallas as pl
from jax.experimental.pallas import tpu as pltpu


LATENT_DIM = 20
LAT_PAD = 128          # lane-aligned latent slab width (mu cols 0:20, logvar 128:148)
ML_PAD = 2 * LAT_PAD   # fused mu|logvar output width
NUM_CLASSES = 10
EMB_DIM = 10
IN_DIM = 784
HID_DIM = 400
HID_PAD = 512          # hidden dim padded to a lane/MXU multiple


# --------------------------------------------------------------------------- #
# Kernels
# --------------------------------------------------------------------------- #
def _cvae_body(x, ye_h1, ye_h3, eps,
               w1a_ref, b1_ref, w21_22_ref, b21_22_ref,
               w3a_ref, b3_ref, w4_ref, b4_ref,
               recon_ref, ml_ref):
    """Shared fused forward body.

    x:      [TB, 784] f32
    ye_h1:  [TB, 512] f32   (y_emb @ fc1_y_rows, zero-padded past col 400)
    ye_h3:  [TB, 512] f32   (y_emb @ fc3_y_rows, zero-padded past col 400)
    eps:    [TB, 128] f32   (zeros past col 20)
    """
    w1a = w1a_ref[...]
    wdt = w1a.dtype                              # bf16 weight compute dtype

    # ---- encode: h = relu(fc1(cat(x, y_emb)))  (split-cat matmul) -----------
    h = jnp.dot(x.astype(wdt), w1a, preferred_element_type=jnp.float32)
    h = jnp.maximum(h + ye_h1 + b1_ref[...], 0.0)            # [TB, 512]

    # ---- fused fc21/fc22 in f32 (tiny weight; keeps mu/logvar precise) ------
    # ml layout: cols 0:20 = mu, cols 128:148 = logvar, everything else 0.
    ml = (jnp.dot(h, w21_22_ref[...], preferred_element_type=jnp.float32)
          + b21_22_ref[...])                                  # [TB, 256]
    ml_ref[...] = ml                                          # lane-dense store

    # ---- reparameterize in the padded 128-wide frame -------------------------
    # Cols 20:128 of ml/eps are exact zeros, so z cols 20:128 stay exactly 0
    # and hit zero rows of the padded fc3 weight below.
    z = ml[:, :LAT_PAD] + eps * jnp.exp(0.5 * ml[:, LAT_PAD:])  # [TB, 128]

    # ---- decode: sigmoid(fc4(relu(fc3(cat(z, y_emb))))) ----------------------
    h3 = jnp.dot(z.astype(wdt), w3a_ref[...], preferred_element_type=jnp.float32)
    h3 = jnp.maximum(h3 + ye_h3 + b3_ref[...], 0.0)           # [TB, 512]

    logits = (jnp.dot(h3.astype(wdt), w4_ref[...],
                      preferred_element_type=jnp.float32)
              + b4_ref[...])                                   # [TB, 784]
    recon_ref[...] = jax.nn.sigmoid(logits).astype(recon_ref.dtype)  # bf16 out


def cvae_kernel_table(x_ref, yeh_ref, eps_ref,
                      w1a_ref, b1_ref, w21_22_ref, b21_22_ref,
                      w3a_ref, b3_ref, w4_ref, b4_ref,
                      recon_ref, ml_ref):
    """Small-batch path: y-emb projections precomputed & gathered in wrapper."""
    yeh = yeh_ref[...].astype(jnp.float32)        # [TB, 1024]
    _cvae_body(x_ref[...], yeh[:, :HID_PAD], yeh[:, HID_PAD:], eps_ref[...],
               w1a_ref, b1_ref, w21_22_ref, b21_22_ref,
               w3a_ref, b3_ref, w4_ref, b4_ref, recon_ref, ml_ref)


def cvae_kernel_matmul(x_ref, ye_ref, eps_ref,
                       w1a_ref, wyb_ref, b1_ref, w21_22_ref, b21_22_ref,
                       w3a_ref, b3_ref, w4_ref, b4_ref,
                       recon_ref, ml_ref):
    """Large-batch path: one fused K=10 MXU pass for both y-emb projections."""
    wyb = wyb_ref[...]                            # [10, 1024] bf16
    yeh = jnp.dot(ye_ref[...].astype(wyb.dtype), wyb,
                  preferred_element_type=jnp.float32)          # [TB, 1024]
    _cvae_body(x_ref[...], yeh[:, :HID_PAD], yeh[:, HID_PAD:], eps_ref[...],
               w1a_ref, b1_ref, w21_22_ref, b21_22_ref,
               w3a_ref, b3_ref, w4_ref, b4_ref, recon_ref, ml_ref)


# --------------------------------------------------------------------------- #
# Wrapper
# --------------------------------------------------------------------------- #
def _pick_tb(B, tb):
    """Batch tile: >=2 grid steps when possible (both v7x cores), divisor of B
    (avoids the jnp.pad HBM copy), 256 cap (fills the 256-wide MXU M dim)."""
    if tb is not None:
        return max(1, min(tb, B))
    if B >= 512:
        return 256
    for cand in range(min(256, B // 2), 7, -1):   # largest 8-aligned divisor
        if cand % 8 == 0 and B % cand == 0:
            return cand
    return B                                      # tiny/odd batch: single step


def cvae_forward(x_img, y_labels, kp, eps, *, tb=None, use_emb_table=None):
    """x_img: [B,1,28,28] f32, y_labels: [B] int32, eps: [B, 20] f32.

    kp: packed params from pack_params().  Returns (recon[bf16], mu, logvar).
    """
    B = x_img.shape[0]
    x_flat = x_img.reshape(B, IN_DIM)                    # glue: x.view(-1, 784)
    eps_pad = jnp.pad(eps, ((0, 0), (0, LAT_PAD - LATENT_DIM)))

    if use_emb_table is None:
        use_emb_table = B <= 256                         # latency vs throughput

    if use_emb_table:
        # glue: embedding gather of precomputed (emb @ [w1b|w3b]) rows
        y_act = jnp.take(kp["yeh_table"], y_labels, axis=0)     # [B, 1024] bf16
        act_dims = (IN_DIM, 2 * HID_PAD, LAT_PAD)
        weights = (kp["w1a"], kp["b1"], kp["w21_22"], kp["b21_22"],
                   kp["w3a"], kp["b3"], kp["w4"], kp["b4"])
        kernel = cvae_kernel_table
    else:
        y_act = jnp.take(kp["emb"], y_labels, axis=0)           # [B, 10] f32
        act_dims = (IN_DIM, EMB_DIM, LAT_PAD)
        weights = (kp["w1a"], kp["wyb"], kp["b1"], kp["w21_22"], kp["b21_22"],
                   kp["w3a"], kp["b3"], kp["w4"], kp["b4"])
        kernel = cvae_kernel_matmul

    tb = _pick_tb(B, tb)
    grid_b = pl.cdiv(B, tb)
    Bp = grid_b * tb
    acts = [x_flat, y_act, eps_pad]
    if Bp != B:  # only reachable with an explicit non-divisor tb
        acts = [jnp.pad(a, ((0, Bp - B), (0, 0))) for a in acts]

    def act_spec(d):
        return pl.BlockSpec((tb, d), lambda i: (i, 0))

    def resident_spec(w):
        # Full-array block + constant index_map: DMA'd once, VMEM-resident
        # across all batch-grid steps.
        return pl.BlockSpec(w.shape, lambda i: (0, 0))

    recon, ml = pl.pallas_call(
        kernel,
        grid=(grid_b,),
        in_specs=[act_spec(d) for d in act_dims]
        + [resident_spec(w) for w in weights],
        out_specs=(act_spec(IN_DIM), act_spec(ML_PAD)),
        out_shape=(
            jax.ShapeDtypeStruct((Bp, IN_DIM), jnp.bfloat16),   # bf16 recon
            jax.ShapeDtypeStruct((Bp, ML_PAD), jnp.float32),    # mu|logvar slab
        ),
        compiler_params=pltpu.CompilerParams(
            dimension_semantics=("parallel",),       # batch axis -> both v7x TCs
            vmem_limit_bytes=32 * 1024 * 1024,       # TB=256 fits on v5e too
        ),
    )(*acts, *weights)

    recon = recon[:B]
    mu = ml[:B, :LATENT_DIM]
    logvar = ml[:B, LAT_PAD:LAT_PAD + LATENT_DIM]
    return recon, mu, logvar


# --------------------------------------------------------------------------- #
# Parameters
# --------------------------------------------------------------------------- #
def init_params(key):
    """Canonical (torch-like) f32 parameters mirroring the nn.Module layout."""
    ks = jax.random.split(key, 11)

    def linear(kw, kb, fan_in, fan_out):
        bound = 1.0 / jnp.sqrt(jnp.float32(fan_in))
        # Stored already transposed to [in, out] so forward is x @ W.
        w = jax.random.uniform(kw, (fan_in, fan_out), jnp.float32, -bound, bound)
        b = jax.random.uniform(kb, (1, fan_out), jnp.float32, -bound, bound)
        return w, b

    emb = jax.random.normal(ks[0], (NUM_CLASSES, EMB_DIM), jnp.float32)
    w1, b1 = linear(ks[1], ks[2], IN_DIM + EMB_DIM, HID_DIM)       # fc1
    w21, b21 = linear(ks[3], ks[4], HID_DIM, LATENT_DIM)           # fc21
    w22, b22 = linear(ks[5], ks[6], HID_DIM, LATENT_DIM)           # fc22
    w3, b3 = linear(ks[7], ks[8], LATENT_DIM + EMB_DIM, HID_DIM)   # fc3
    w4, b4 = linear(ks[9], ks[10], HID_DIM, IN_DIM)                # fc4
    return dict(emb=emb, w1=w1, b1=b1, w21=w21, b21=b21, w22=w22, b22=b22,
                w3=w3, b3=b3, w4=w4, b4=b4)


def pack_params(p, weight_dtype=jnp.bfloat16):
    """Split/fuse/zero-pad/cast canonical params into the kernel layout."""
    f32 = jnp.float32
    w1a = jnp.zeros((IN_DIM, HID_PAD), f32).at[:, :HID_DIM].set(p["w1"][:IN_DIM])
    w1b = p["w1"][IN_DIM:]                                   # [10, 400]
    w3a = jnp.zeros((LAT_PAD, HID_PAD), f32)
    w3a = w3a.at[:LATENT_DIM, :HID_DIM].set(p["w3"][:LATENT_DIM])
    w3b = p["w3"][LATENT_DIM:]                               # [10, 400]

    b1 = jnp.zeros((1, HID_PAD), f32).at[:, :HID_DIM].set(p["b1"])
    b3 = jnp.zeros((1, HID_PAD), f32).at[:, :HID_DIM].set(p["b3"])

    # Fused fc21/fc22: lane-aligned [512, 256] slab (mu cols 0:20, logvar 128:148).
    w21_22 = jnp.zeros((HID_PAD, ML_PAD), f32)
    w21_22 = w21_22.at[:HID_DIM, :LATENT_DIM].set(p["w21"])
    w21_22 = w21_22.at[:HID_DIM, LAT_PAD:LAT_PAD + LATENT_DIM].set(p["w22"])
    b21_22 = jnp.zeros((1, ML_PAD), f32)
    b21_22 = b21_22.at[:, :LATENT_DIM].set(p["b21"])
    b21_22 = b21_22.at[:, LAT_PAD:LAT_PAD + LATENT_DIM].set(p["b22"])

    w4 = jnp.zeros((HID_PAD, IN_DIM), f32).at[:HID_DIM, :].set(p["w4"])

    # Fused y-embedding weight: fc1 half at col 0, fc3 half at col 512.
    wyb = jnp.zeros((EMB_DIM, 2 * HID_PAD), f32)
    wyb = wyb.at[:, :HID_DIM].set(w1b)
    wyb = wyb.at[:, HID_PAD:HID_PAD + HID_DIM].set(w3b)

    # Small-batch path: precomputed emb @ [w1b | w3b] lookup table.
    yeh_table = jnp.zeros((NUM_CLASSES, 2 * HID_PAD), f32)
    yeh_table = yeh_table.at[:, :HID_DIM].set(p["emb"] @ w1b)
    yeh_table = yeh_table.at[:, HID_PAD:HID_PAD + HID_DIM].set(p["emb"] @ w3b)

    cast = lambda w: w.astype(weight_dtype)
    return dict(
        emb=p["emb"],                                   # f32, gather done outside
        w1a=cast(w1a), wyb=cast(wyb), yeh_table=cast(yeh_table),
        b1=b1, b3=b3,
        w21_22=w21_22, b21_22=b21_22,                   # kept f32 (precision, tiny)
        w3a=cast(w3a), w4=cast(w4), b4=p["b4"],
    )


# --------------------------------------------------------------------------- #
# References
# --------------------------------------------------------------------------- #
def reference_forward(x_img, y_labels, p, eps):
    """Pure-JAX f32 reference mirroring the PyTorch module exactly."""
    B = x_img.shape[0]
    x = x_img.reshape(B, IN_DIM)
    ye = jnp.take(p["emb"], y_labels, axis=0)
    xi = jnp.concatenate([x, ye], axis=1)
    h = jnp.maximum(xi @ p["w1"] + p["b1"], 0.0)
    mu = h @ p["w21"] + p["b21"]
    logvar = h @ p["w22"] + p["b22"]
    z = mu + eps * jnp.exp(0.5 * logvar)
    zi = jnp.concatenate([z, ye], axis=1)
    h3 = jnp.maximum(zi @ p["w3"] + p["b3"], 0.0)
    recon = jax.nn.sigmoid(h3 @ p["w4"] + p["b4"])
    return recon, mu, logvar


def reference_forward_matched(x_img, y_labels, kp, eps):
    """Pure-JAX reference mirroring the kernel's table path (bf16/fused/padded)."""
    wdt = kp["w1a"].dtype
    B = x_img.shape[0]
    x = x_img.reshape(B, IN_DIM)
    yeh = jnp.take(kp["yeh_table"], y_labels, axis=0).astype(jnp.float32)
    eps_p = jnp.pad(eps, ((0, 0), (0, LAT_PAD - LATENT_DIM)))
    mm = lambda a, w: jnp.dot(a.astype(wdt), w, preferred_element_type=jnp.float32)

    h = jnp.maximum(mm(x, kp["w1a"]) + yeh[:, :HID_PAD] + kp["b1"], 0.0)
    ml = jnp.dot(h, kp["w21_22"], preferred_element_type=jnp.float32) + kp["b21_22"]
    mu = ml[:, :LATENT_DIM]
    logvar = ml[:, LAT_PAD:LAT_PAD + LATENT_DIM]
    z = ml[:, :LAT_PAD] + eps_p * jnp.exp(0.5 * ml[:, LAT_PAD:])
    h3 = jnp.maximum(mm(z, kp["w3a"]) + yeh[:, HID_PAD:] + kp["b3"], 0.0)
    recon = jax.nn.sigmoid(mm(h3, kp["w4"]) + kp["b4"]).astype(jnp.bfloat16)
    return recon, mu, logvar


# --------------------------------------------------------------------------- #
if __name__ == "__main__":
    key = jax.random.PRNGKey(0)
    k_params, k_x, k_y, k_eps = jax.random.split(key, 4)

    B = 16
    x_img = jax.random.uniform(k_x, (B, 1, 28, 28), jnp.float32)        # NCHW
    y_labels = jax.random.randint(k_y, (B,), 0, NUM_CLASSES, jnp.int32)
    # TODO(synk): torch.randn_like(std) noise is generated in plain JAX and fed
    # in (deterministic, testable) rather than drawn in-kernel with pltpu.prng_*.
    eps = jax.random.normal(k_eps, (B, LATENT_DIM), jnp.float32)

    params = init_params(k_params)                      # canonical f32 params
    kparams = pack_params(params, weight_dtype=jnp.bfloat16)

    # Small-batch (latency) path: precomputed y-emb table, auto tb=8 -> grid=(2,).
    recon_t, mu_t, lv_t = jax.block_until_ready(
        cvae_forward(x_img, y_labels, kparams, eps))
    # Large-batch (throughput) path: in-kernel fused K=10 embedding matmul.
    recon_m, mu_m, lv_m = jax.block_until_ready(
        cvae_forward(x_img, y_labels, kparams, eps, use_emb_table=False))

    assert recon_t.shape == (B, IN_DIM) and recon_t.dtype == jnp.bfloat16
    assert mu_t.shape == (B, LATENT_DIM) and lv_t.shape == (B, LATENT_DIM)

    f32 = lambda a: jnp.asarray(a, jnp.float32)

    # Tight check: table-path kernel vs matched bf16/fused reference.
    r_ref, mu_ref, lv_ref = reference_forward_matched(x_img, y_labels, kparams, eps)
    assert jnp.allclose(f32(recon_t), f32(r_ref), atol=8e-3)
    assert jnp.allclose(mu_t, mu_ref, atol=2e-3)
    assert jnp.allclose(lv_t, lv_ref, atol=2e-3)

    # Both kernel paths agree (only bf16 rounding order differs).
    assert jnp.allclose(f32(recon_t), f32(recon_m), atol=1e-2)
    assert jnp.allclose(mu_t, mu_m, atol=5e-3)
    assert jnp.allclose(lv_t, lv_m, atol=5e-3)

    # Loose check vs the full-f32 PyTorch-equivalent reference (bf16 rounding only).
    r_f, mu_f, lv_f = reference_forward(x_img, y_labels, params, eps)
    assert jnp.allclose(f32(recon_t), r_f, atol=3e-2)
    assert jnp.allclose(mu_t, mu_f, atol=3e-2)
    assert jnp.allclose(lv_t, lv_f, atol=3e-2)

    print("KERNEL_OK")
</pallas_src>

<mosaic_0001>
module attributes {stable_mosaic.version = 11 : i64} {
  func.func @cvae_kernel_table(%arg0: i32, %arg1: memref<8x784xf32, #tpu.memory_space<vmem>>, %arg2: memref<8x1024xbf16, #tpu.memory_space<vmem>>, %arg3: memref<8x128xf32, #tpu.memory_space<vmem>>, %arg4: memref<784x512xbf16, #tpu.memory_space<vmem>>, %arg5: memref<1x512xf32, #tpu.memory_space<vmem>>, %arg6: memref<512x256xf32, #tpu.memory_space<vmem>>, %arg7: memref<1x256xf32, #tpu.memory_space<vmem>>, %arg8: memref<128x512xbf16, #tpu.memory_space<vmem>>, %arg9: memref<1x512xf32, #tpu.memory_space<vmem>>, %arg10: memref<512x784xbf16, #tpu.memory_space<vmem>>, %arg11: memref<1x784xf32, #tpu.memory_space<vmem>>, %arg12: memref<8x784xbf16, #tpu.memory_space<vmem>>, %arg13: memref<8x256xf32, #tpu.memory_space<vmem>>) attributes {dimension_semantics = [#tpu.dimension_semantics<parallel>], iteration_bounds = array<i64: 2>, scalar_prefetch = 0 : i64, scratch_operands = 0 : i64, tpu.core_type = #tpu.core_type<tc>, window_params = [{transform_indices = @transform_0, window_bounds = array<i64: 8, 784>}, {transform_indices = @transform_1, window_bounds = array<i64: 8, 1024>}, {transform_indices = @transform_2, window_bounds = array<i64: 8, 128>}, {pipeline_mode = #tpu.pipeline_mode<synchronous>, transform_indices = @transform_3, window_bounds = array<i64: 784, 512>}, {pipeline_mode = #tpu.pipeline_mode<synchronous>, transform_indices = @transform_4, window_bounds = array<i64: 1, 512>}, {pipeline_mode = #tpu.pipeline_mode<synchronous>, transform_indices = @transform_5, window_bounds = array<i64: 512, 256>}, {pipeline_mode = #tpu.pipeline_mode<synchronous>, transform_indices = @transform_6, window_bounds = array<i64: 1, 256>}, {pipeline_mode = #tpu.pipeline_mode<synchronous>, transform_indices = @transform_7, window_bounds = array<i64: 128, 512>}, {pipeline_mode = #tpu.pipeline_mode<synchronous>, transform_indices = @transform_8, window_bounds = array<i64: 1, 512>}, {pipeline_mode = #tpu.pipeline_mode<synchronous>, transform_indices = @transform_9, window_bounds = array<i64: 512, 784>}, {pipeline_mode = #tpu.pipeline_mode<synchronous>, transform_indices = @transform_10, window_bounds = array<i64: 1, 784>}, {transform_indices = @transform_11, window_bounds = array<i64: 8, 784>}, {transform_indices = @transform_12, window_bounds = array<i64: 8, 256>}]} {
    %c0 = arith.constant 0 : index
    %c0_0 = arith.constant 0 : index
    %0 = vector.load %arg2[%c0, %c0_0] : memref<8x1024xbf16, #tpu.memory_space<vmem>>, vector<8x1024xbf16>
    %1 = arith.extf %0 : vector<8x1024xbf16> to vector<8x1024xf32>
    %c0_1 = arith.constant 0 : index
    %c0_2 = arith.constant 0 : index
    %2 = vector.load %arg1[%c0_1, %c0_2] : memref<8x784xf32, #tpu.memory_space<vmem>>, vector<8x784xf32>
    %3 = vector.extract_strided_slice %1 {offsets = [0, 0], sizes = [8, 512], strides = [1, 1]} : vector<8x1024xf32> to vector<8x512xf32>
    %4 = vector.extract_strided_slice %1 {offsets = [0, 512], sizes = [8, 512], strides = [1, 1]} : vector<8x1024xf32> to vector<8x512xf32>
    %c0_3 = arith.constant 0 : index
    %c0_4 = arith.constant 0 : index
    %5 = vector.load %arg3[%c0_3, %c0_4] : memref<8x128xf32, #tpu.memory_space<vmem>>, vector<8x128xf32>
    %c0_5 = arith.constant 0 : index
    %c0_6 = arith.constant 0 : index
    %6 = vector.load %arg4[%c0_5, %c0_6] : memref<784x512xbf16, #tpu.memory_space<vmem>>, vector<784x512xbf16>
    %7 = arith.truncf %2 : vector<8x784xf32> to vector<8x784xbf16>
    %cst = arith.constant dense<0.000000e+00> : vector<8x512xf32>
    %8 = tpu.matmul %7, %6, %cst {dimension_numbers = #tpu.dot_dimension_numbers<[1], [0], [0], [1], [0, 0, 1, 1], [], []>} : vector<8x784xbf16>, vector<784x512xbf16>, vector<8x512xf32> -> vector<8x512xf32>
    %9 = arith.addf %8, %3 : vector<8x512xf32>
    %c0_7 = arith.constant 0 : index
    %c0_8 = arith.constant 0 : index
    %10 = vector.load %arg5[%c0_7, %c0_8] : memref<1x512xf32, #tpu.memory_space<vmem>>, vector<1x512xf32>
    %11 = vector.broadcast %10 : vector<1x512xf32> to vector<8x512xf32>
    %12 = arith.addf %9, %11 : vector<8x512xf32>
    %cst_9 = arith.constant 0.000000e+00 : f32
    %13 = vector.broadcast %cst_9 : f32 to vector<8x512xf32>
    %14 = arith.maximumf %12, %13 : vector<8x512xf32>
    %c0_10 = arith.constant 0 : index
    %c0_11 = arith.constant 0 : index
    %15 = vector.load %arg6[%c0_10, %c0_11] : memref<512x256xf32, #tpu.memory_space<vmem>>, vector<512x256xf32>
    %cst_12 = arith.constant dense<0.000000e+00> : vector<8x256xf32>
    %16 = tpu.matmul %14, %15, %cst_12 {dimension_numbers = #tpu.dot_dimension_numbers<[1], [0], [0], [1], [0, 0, 1, 1], [], []>} : vector<8x512xf32>, vector<512x256xf32>, vector<8x256xf32> -> vector<8x256xf32>
    %c0_13 = arith.constant 0 : index
    %c0_14 = arith.constant 0 : index
    %17 = vector.load %arg7[%c0_13, %c0_14] : memref<1x256xf32, #tpu.memory_space<vmem>>, vector<1x256xf32>
    %18 = vector.broadcast %17 : vector<1x256xf32> to vector<8x256xf32>
    %19 = arith.addf %16, %18 : vector<8x256xf32>
    %c0_15 = arith.constant 0 : index
    %c0_16 = arith.constant 0 : index
    %20 = vector.load %arg13[%c0_15, %c0_16] : memref<8x256xf32, #tpu.memory_space<vmem>>, vector<8x256xf32>
    tpu.vector_store %arg13[%c0_15, %c0_16], %19 {strides = array<i32>} : memref<8x256xf32, #tpu.memory_space<vmem>>, vector<8x256xf32>,
    %21 = vector.extract_strided_slice %19 {offsets = [0, 0], sizes = [8, 128], strides = [1, 1]} : vector<8x256xf32> to vector<8x128xf32>
    %22 = vector.extract_strided_slice %19 {offsets = [0, 128], sizes = [8, 128], strides = [1, 1]} : vector<8x256xf32> to vector<8x128xf32>
    %cst_17 = arith.constant 5.000000e-01 : f32
    %23 = vector.broadcast %cst_17 : f32 to vector<8x128xf32>
    %24 = arith.mulf %23, %22 : vector<8x128xf32>
    %25 = math.exp %24 : vector<8x128xf32>
    %26 = arith.mulf %5, %25 : vector<8x128xf32>
    %27 = arith.addf %21, %26 : vector<8x128xf32>
    %28 = arith.truncf %27 : vector<8x128xf32> to vector<8x128xbf16>
    %c0_18 = arith.constant 0 : index
    %c0_19 = arith.constant 0 : index
    %29 = vector.load %arg8[%c0_18, %c0_19] : memref<128x512xbf16, #tpu.memory_space<vmem>>, vector<128x512xbf16>
    %cst_20 = arith.constant dense<0.000000e+00> : vector<8x512xf32>
    %30 = tpu.matmul %28, %29, %cst_20 {dimension_numbers = #tpu.dot_dimension_numbers<[1], [0], [0], [1], [0, 0, 1, 1], [], []>} : vector<8x128xbf16>, vector<128x512xbf16>, vector<8x512xf32> -> vector<8x512xf32>
    %31 = arith.addf %30, %4 : vector<8x512xf32>
    %c0_21 = arith.constant 0 : index
    %c0_22 = arith.constant 0 : index
    %32 = vector.load %arg9[%c0_21, %c0_22] : memref<1x512xf32, #tpu.memory_space<vmem>>, vector<1x512xf32>
    %33 = vector.broadcast %32 : vector<1x512xf32> to vector<8x512xf32>
    %34 = arith.addf %31, %33 : vector<8x512xf32>
    %cst_23 = arith.constant 0.000000e+00 : f32
    %35 = vector.broadcast %cst_23 : f32 to vector<8x512xf32>
    %36 = arith.maximumf %34, %35 : vector<8x512xf32>
    %37 = arith.truncf %36 : vector<8x512xf32> to vector<8x512xbf16>
    %c0_24 = arith.constant 0 : index
    %c0_25 = arith.constant 0 : index
    %38 = vector.load %arg10[%c0_24, %c0_25] : memref<512x784xbf16, #tpu.memory_space<vmem>>, vector<512x784xbf16>
    %cst_26 = arith.constant dense<0.000000e+00> : vector<8x784xf32>
    %39 = tpu.matmul %37, %38, %cst_26 {dimension_numbers = #tpu.dot_dimension_numbers<[1], [0], [0], [1], [0, 0, 1, 1], [], []>} : vector<8x512xbf16>, vector<512x784xbf16>, vector<8x784xf32> -> vector<8x784xf32>
    %c0_27 = arith.constant 0 : index
    %c0_28 = arith.constant 0 : index
    %40 = vector.load %arg11[%c0_27, %c0_28] : memref<1x784xf32, #tpu.memory_space<vmem>>, vector<1x784xf32>
    %41 = vector.broadcast %40 : vector<1x784xf32> to vector<8x784xf32>
    %42 = arith.addf %39, %41 : vector<8x784xf32>
    %43 = arith.negf %42 : vector<8x784xf32>
    %44 = math.exp %43 : vector<8x784xf32>
    %cst_29 = arith.constant 1.000000e+00 : f32
    %45 = vector.broadcast %cst_29 : f32 to vector<8x784xf32>
    %46 = arith.addf %45, %44 : vector<8x784xf32>
    %47 = arith.divf %45, %46 : vector<8x784xf32>
    %48 = arith.truncf %47 : vector<8x784xf32> to vector<8x784xbf16>
    %c0_30 = arith.constant 0 : index
    %c0_31 = arith.constant 0 : index
    %49 = vector.load %arg12[%c0_30, %c0_31] : memref<8x784xbf16, #tpu.memory_space<vmem>>, vector<8x784xbf16>
    tpu.vector_store %arg12[%c0_30, %c0_31], %48 {strides = array<i32>} : memref<8x784xbf16, #tpu.memory_space<vmem>>, vector<8x784xbf16>,
    return
  }
  func.func @transform_0(%arg0: i32) -> (i32, i32) {
    %c0_i32 = arith.constant 0 : i32
    %c0_i32_0 = arith.constant 0 : i32
    return %arg0, %c0_i32 : i32, i32
  }
  func.func @transform_1(%arg0: i32) -> (i32, i32) {
    %c0_i32 = arith.constant 0 : i32
    %c0_i32_0 = arith.constant 0 : i32
    return %arg0, %c0_i32 : i32, i32
  }
  func.func @transform_2(%arg0: i32) -> (i32, i32) {
    %c0_i32 = arith.constant 0 : i32
    %c0_i32_0 = arith.constant 0 : i32
    return %arg0, %c0_i32 : i32, i32
  }
  func.func @transform_3(%arg0: i32) -> (i32, i32) {
    %c0_i32 = arith.constant 0 : i32
    %c0_i32_0 = arith.constant 0 : i32
    %c0_i32_1 = arith.constant 0 : i32
    return %c0_i32, %c0_i32_0 : i32, i32
  }
  func.func @transform_4(%arg0: i32) -> (i32, i32) {
    %c0_i32 = arith.constant 0 : i32
    %c0_i32_0 = arith.constant 0 : i32
    %c0_i32_1 = arith.constant 0 : i32
    return %c0_i32, %c0_i32_0 : i32, i32
  }
  func.func @transform_5(%arg0: i32) -> (i32, i32) {
    %c0_i32 = arith.constant 0 : i32
    %c0_i32_0 = arith.constant 0 : i32
    %c0_i32_1 = arith.constant 0 : i32
    return %c0_i32, %c0_i32_0 : i32, i32
  }
  func.func @transform_6(%arg0: i32) -> (i32, i32) {
    %c0_i32 = arith.constant 0 : i32
    %c0_i32_0 = arith.constant 0 : i32
    %c0_i32_1 = arith.constant 0 : i32
    return %c0_i32, %c0_i32_0 : i32, i32
  }
  func.func @transform_7(%arg0: i32) -> (i32, i32) {
    %c0_i32 = arith.constant 0 : i32
    %c0_i32_0 = arith.constant 0 : i32
    %c0_i32_1 = arith.constant 0 : i32
    return %c0_i32, %c0_i32_0 : i32, i32
  }
  func.func @transform_8(%arg0: i32) -> (i32, i32) {
    %c0_i32 = arith.constant 0 : i32
    %c0_i32_0 = arith.constant 0 : i32
    %c0_i32_1 = arith.constant 0 : i32
    return %c0_i32, %c0_i32_0 : i32, i32
  }
  func.func @transform_9(%arg0: i32) -> (i32, i32) {
    %c0_i32 = arith.constant 0 : i32
    %c0_i32_0 = arith.constant 0 : i32
    %c0_i32_1 = arith.constant 0 : i32
    return %c0_i32, %c0_i32_0 : i32, i32
  }
  func.func @transform_10(%arg0: i32) -> (i32, i32) {
    %c0_i32 = arith.constant 0 : i32
    %c0_i32_0 = arith.constant 0 : i32
    %c0_i32_1 = arith.constant 0 : i32
    return %c0_i32, %c0_i32_0 : i32, i32
  }
  func.func @transform_11(%arg0: i32) -> (i32, i32) {
    %c0_i32 = arith.constant 0 : i32
    %c0_i32_0 = arith.constant 0 : i32
    return %arg0, %c0_i32 : i32, i32
  }
  func.func @transform_12(%arg0: i32) -> (i32, i32) {
    %c0_i32 = arith.constant 0 : i32
    %c0_i32_0 = arith.constant 0 : i32
    return %arg0, %c0_i32 : i32, i32
  }
}

</mosaic_0001>

<llo_original>
// kernel: tpu_custom_call.1
$region0: #{tpu_custom_call.1}
  #allocation0 [shape = 'u32[]', space=smem, size = 0x4, offset = 0x4, fixed_abs, tag = 'smem constant byte address 0x4 - core index']
  #allocation1 [shape = 'u32[144,128]{1,0:T(1,128)}', space=vmem, size = 0x12000, scoped, tag = 'internal scratch']
  %s0 = inlined_call_operand.vmem [shape: f32[16,784], index: 0, kind: input, shape index: {}]
  %s1 = inlined_call_operand.vmem [shape: bf16[16,1024], index: 1, kind: input, shape index: {}]
  %s2 = inlined_call_operand.vmem [shape: f32[16,128], index: 2, kind: input, shape index: {}]
  %s3 = inlined_call_operand.vmem [shape: bf16[784,512], index: 3, kind: input, shape index: {}]
  %s4 = inlined_call_operand.vmem [shape: f32[1,512], index: 4, kind: input, shape index: {}]
  %s5 = inlined_call_operand.vmem [shape: f32[512,256], index: 5, kind: input, shape index: {}]
  %s6 = inlined_call_operand.vmem [shape: f32[1,256], index: 6, kind: input, shape index: {}]
  %s7 = inlined_call_operand.vmem [shape: bf16[128,512], index: 7, kind: input, shape index: {}]
  %s8 = inlined_call_operand.vmem [shape: f32[1,512], index: 8, kind: input, shape index: {}]
  %s9 = inlined_call_operand.vmem [shape: bf16[512,784], index: 9, kind: input, shape index: {}]
  %s10 = inlined_call_operand.vmem [shape: f32[1,784], index: 10, kind: input, shape index: {}]
  %s11 = inlined_call_operand.hbm [shape: bf16[16,784], index: 11, kind: output, shape index: {0}]
  %s12 = inlined_call_operand.hbm [shape: f32[16,256], index: 12, kind: output, shape index: {1}]
  %13 = xla_tuple %s11, %s12
  %s14 = sld [smem:[#allocation0]]
  $region85: #{tpu_custom_call.1} parent=0
    _
  %s16 = ssub.s32 1, %s14
  %s17 = scalar_select 0, %s16, %s14
  $region1: #{tpu_custom_call.1} parent=0
    #allocation2 [shape = 'u8[28672]{0}', space=vmem, size = 0x7000, scoped, tag = 'output window, operand 0']
    #allocation3 [shape = 's32[2]{0}', space=sflag, size = 0x8, scoped, tag = 'scoped memory for tpu_custom_call.1']
    #allocation4 [shape = 'u8[16384]{0}', space=vmem, size = 0x4000, scoped, tag = 'output window, operand 1']
    #allocation5 [shape = 's32[2]{0}', space=sflag, size = 0x8, scoped, tag = 'scoped memory for tpu_custom_call.1']
    %18 = vsyncpa [#allocation3], 0
    %s19 = scalar_lea.sflag [#allocation3], 1
    %20 = vsyncpa %s19, 0
    %21 = vsyncpa [#allocation5], 0
    %s22 = scalar_lea.sflag [#allocation5], 1
    %23 = vsyncpa %s22, 0
    loop: start=0, step=1, limit=4
    $region2: #{tpu_custom_call.1} parent=1 // loop_pre_header
      _
    $region3: #{tpu_custom_call.1} parent=1 // loop_header
      %s25 = sphi 0, %s29
      %p26 = scmp.ge.s32.totalorder %s25, 4
      %s35 = sphi 0, %s37
      %s38 = sphi 0, %s35
      %s39 = sphi 0, %s38
      %s55 = sphi 0, %s39
      %s61 = sphi 0, %s63
      %s64 = sphi 0, %s61
      %s65 = sphi 0, %s64
      %s81 = sphi 0, %s65
      %s87 = sphi 0, %s89
      %s90 = sphi 0, %s87
      %s91 = sphi 0, %s90
      %s107 = sphi 0, %s91
      %s111 = sphi 0, %s111
      %s113 = sphi 0, %s111
      %s114 = sphi 0, %s113
      %s128 = sphi 0, %s114
      %s132 = sphi 0, %s132
      %s134 = sphi 0, %s132
      %s135 = sphi 0, %s134
      %s149 = sphi 0, %s135
      %s153 = sphi 0, %s153
      %s155 = sphi 0, %s153
      %s156 = sphi 0, %s155
      %s170 = sphi 0, %s156
      %s174 = sphi 0, %s174
      %s176 = sphi 0, %s174
      %s177 = sphi 0, %s176
      %s191 = sphi 0, %s177
      %s195 = sphi 0, %s195
      %s197 = sphi 0, %s195
      %s198 = sphi 0, %s197
      %s212 = sphi 0, %s198
      %s216 = sphi 0, %s216
      %s218 = sphi 0, %s216
      %s219 = sphi 0, %s218
      %s233 = sphi 0, %s219
      %s237 = sphi 0, %s237
      %s239 = sphi 0, %s237
      %s240 = sphi 0, %s239
      %s254 = sphi 0, %s240
      %s258 = sphi 0, %s258
      %s260 = sphi 0, %s258
      %s261 = sphi 0, %s260
      %s275 = sphi 0, %s261
      %s281 = sphi 0, %s283
      %s284 = sphi 0, %s281
      %s285 = sphi 0, %s284
      %s301 = sphi 0, %s285
      %s307 = sphi 0, %s309
      %s310 = sphi 0, %s307
      %s311 = sphi 0, %s310
      %s327 = sphi 0, %s311
    $region4: #{tpu_custom_call.1} parent=1 // loop_header_branch
      %28 = sbr.rel (%p26) target = $region8
    $region5: #{tpu_custom_call.1} parent=1 // loop_body
      %s30 = ssub.s32 %s25, 1
      %s31 = ssub.s32 %s25, 2
      %s32 = sadd.s32 %s25, 1
      %s33 = ssub.s32 %s25, %s32
      %p34 = scmp.eq.s32.totalorder %s33, 0
      %s36 = sadd.s32 %s35, 1
      %s37 = scalar_select %p34, %s35, %s36
      %p40 = pneg %p34
      %p41 = scmp.eq.s32.totalorder %s25, 1
      %p42 = por %p40, %p41
      %p43 = scmp.ne.s32.totalorder %s35, %s38
      %p44 = scmp.eq.s32.totalorder %s25, 0
      %p45 = por %p43, %p44
      %p46 = scmp.ne.s32.totalorder %s35, %s38
      %p47 = scmp.eq.s32.totalorder %s30, 1
      %p48 = por %p46, %p47
      %p49 = scmp.ne.s32.totalorder %s38, %s39
      %p50 = scmp.eq.s32.totalorder %s30, 0
      %p51 = por %p49, %p50
      %p52 = scmp.ne.s32.totalorder %s38, %s39
      %p53 = scmp.eq.s32.totalorder %s31, 1
      %p54 = por %p52, %p53
      %p56 = scmp.ne.s32.totalorder %s39, %s55
      %p57 = scmp.eq.s32.totalorder %s31, 0
      %p58 = por %p56, %p57
      %s59 = ssub.s32 %s25, %s32
      %p60 = scmp.eq.s32.totalorder %s59, 0
      %s62 = sadd.s32 %s61, 1
      %s63 = scalar_select %p60, %s61, %s62
      %p66 = pneg %p60
      %p67 = scmp.eq.s32.totalorder %s25, 1
      %p68 = por %p66, %p67
      %p69 = scmp.ne.s32.totalorder %s61, %s64
      %p70 = scmp.eq.s32.totalorder %s25, 0
      %p71 = por %p69, %p70
      %p72 = scmp.ne.s32.totalorder %s61, %s64
      %p73 = scmp.eq.s32.totalorder %s30, 1
      %p74 = por %p72, %p73
      %p75 = scmp.ne.s32.totalorder %s64, %s65
      %p76 = scmp.eq.s32.totalorder %s30, 0
      %p77 = por %p75, %p76
      %p78 = scmp.ne.s32.totalorder %s64, %s65
      %p79 = scmp.eq.s32.totalorder %s31, 1
      %p80 = por %p78, %p79
      %p82 = scmp.ne.s32.totalorder %s65, %s81
      %p83 = scmp.eq.s32.totalorder %s31, 0
      %p84 = por %p82, %p83
      %s85 = ssub.s32 %s25, %s32
      %p86 = scmp.eq.s32.totalorder %s85, 0
      %s88 = sadd.s32 %s87, 1
      %s89 = scalar_select %p86, %s87, %s88
      %p92 = pneg %p86
      %p93 = scmp.eq.s32.totalorder %s25, 1
      %p94 = por %p92, %p93
      %p95 = scmp.ne.s32.totalorder %s87, %s90
      %p96 = scmp.eq.s32.totalorder %s25, 0
      %p97 = por %p95, %p96
      %p98 = scmp.ne.s32.totalorder %s87, %s90
      %p99 = scmp.eq.s32.totalorder %s30, 1
      %p100 = por %p98, %p99
      %p101 = scmp.ne.s32.totalorder %s90, %s91
      %p102 = scmp.eq.s32.totalorder %s30, 0
      %p103 = por %p101, %p102
      %p104 = scmp.ne.s32.totalorder %s90, %s91
      %p105 = scmp.eq.s32.totalorder %s31, 1
      %p106 = por %p104, %p105
      %p108 = scmp.ne.s32.totalorder %s91, %s107
      %p109 = scmp.eq.s32.totalorder %s31, 0
      %p110 = por %p108, %p109
      %s112 = sadd.s32 %s111, 1
      %p115 = scmp.eq.s32.totalorder %s25, 1
      %p116 = scmp.ne.s32.totalorder %s111, %s113
      %p117 = scmp.eq.s32.totalorder %s25, 0
      %p118 = por %p116, %p117
      %p119 = scmp.ne.s32.totalorder %s111, %s113
      %p120 = scmp.eq.s32.totalorder %s30, 1
      %p121 = por %p119, %p120
      %p122 = scmp.ne.s32.totalorder %s113, %s114
      %p123 = scmp.eq.s32.totalorder %s30, 0
      %p124 = por %p122, %p123
      %p125 = scmp.ne.s32.totalorder %s113, %s114
      %p126 = scmp.eq.s32.totalorder %s31, 1
      %p127 = por %p125, %p126
      %p129 = scmp.ne.s32.totalorder %s114, %s128
      %p130 = scmp.eq.s32.totalorder %s31, 0
      %p131 = por %p129, %p130
      %s133 = sadd.s32 %s132, 1
      %p136 = scmp.eq.s32.totalorder %s25, 1
      %p137 = scmp.ne.s32.totalorder %s132, %s134
      %p138 = scmp.eq.s32.totalorder %s25, 0
      %p139 = por %p137, %p138
      %p140 = scmp.ne.s32.totalorder %s132, %s134
      %p141 = scmp.eq.s32.totalorder %s30, 1
      %p142 = por %p140, %p141
      %p143 = scmp.ne.s32.totalorder %s134, %s135
      %p144 = scmp.eq.s32.totalorder %s30, 0
      %p145 = por %p143, %p144
      %p146 = scmp.ne.s32.totalorder %s134, %s135
      %p147 = scmp.eq.s32.totalorder %s31, 1
      %p148 = por %p146, %p147
      %p150 = scmp.ne.s32.totalorder %s135, %s149
      %p151 = scmp.eq.s32.totalorder %s31, 0
      %p152 = por %p150, %p151
      %s154 = sadd.s32 %s153, 1
      %p157 = scmp.eq.s32.totalorder %s25, 1
      %p158 = scmp.ne.s32.totalorder %s153, %s155
      %p159 = scmp.eq.s32.totalorder %s25, 0
      %p160 = por %p158, %p159
      %p161 = scmp.ne.s32.totalorder %s153, %s155
      %p162 = scmp.eq.s32.totalorder %s30, 1
      %p163 = por %p161, %p162
      %p164 = scmp.ne.s32.totalorder %s155, %s156
      %p165 = scmp.eq.s32.totalorder %s30, 0
      %p166 = por %p164, %p165
      %p167 = scmp.ne.s32.totalorder %s155, %s156
      %p168 = scmp.eq.s32.totalorder %s31, 1
      %p169 = por %p167, %p168
      %p171 = scmp.ne.s32.totalorder %s156, %s170
      %p172 = scmp.eq.s32.totalorder %s31, 0
      %p173 = por %p171, %p172
      %s175 = sadd.s32 %s174, 1
      %p178 = scmp.eq.s32.totalorder %s25, 1
      %p179 = scmp.ne.s32.totalorder %s174, %s176
      %p180 = scmp.eq.s32.totalorder %s25, 0
      %p181 = por %p179, %p180
      %p182 = scmp.ne.s32.totalorder %s174, %s176
      %p183 = scmp.eq.s32.totalorder %s30, 1
      %p184 = por %p182, %p183
      %p185 = scmp.ne.s32.totalorder %s176, %s177
      %p186 = scmp.eq.s32.totalorder %s30, 0
      %p187 = por %p185, %p186
      %p188 = scmp.ne.s32.totalorder %s176, %s177
      %p189 = scmp.eq.s32.totalorder %s31, 1
      %p190 = por %p188, %p189
      %p192 = scmp.ne.s32.totalorder %s177, %s191
      %p193 = scmp.eq.s32.totalorder %s31, 0
      %p194 = por %p192, %p193
      %s196 = sadd.s32 %s195, 1
      %p199 = scmp.eq.s32.totalorder %s25, 1
      %p200 = scmp.ne.s32.totalorder %s195, %s197
      %p201 = scmp.eq.s32.totalorder %s25, 0
      %p202 = por %p200, %p201
      %p203 = scmp.ne.s32.totalorder %s195, %s197
      %p204 = scmp.eq.s32.totalorder %s30, 1
      %p205 = por %p203, %p204
      %p206 = scmp.ne.s32.totalorder %s197, %s198
      %p207 = scmp.eq.s32.totalorder %s30, 0
      %p208 = por %p206, %p207
      %p209 = scmp.ne.s32.totalorder %s197, %s198
      %p210 = scmp.eq.s32.totalorder %s31, 1
      %p211 = por %p209, %p210
      %p213 = scmp.ne.s32.totalorder %s198, %s212
      %p214 = scmp.eq.s32.totalorder %s31, 0
      %p215 = por %p213, %p214
      %s217 = sadd.s32 %s216, 1
      %p220 = scmp.eq.s32.totalorder %s25, 1
      %p221 = scmp.ne.s32.totalorder %s216, %s218
      %p222 = scmp.eq.s32.totalorder %s25, 0
      %p223 = por %p221, %p222
      %p224 = scmp.ne.s32.totalorder %s216, %s218
      %p225 = scmp.eq.s32.totalorder %s30, 1
      %p226 = por %p224, %p225
      %p227 = scmp.ne.s32.totalorder %s218, %s219
      %p228 = scmp.eq.s32.totalorder %s30, 0
      %p229 = por %p227, %p228
      %p230 = scmp.ne.s32.totalorder %s218, %s219
      %p231 = scmp.eq.s32.totalorder %s31, 1
      %p232 = por %p230, %p231
      %p234 = scmp.ne.s32.totalorder %s219, %s233
      %p235 = scmp.eq.s32.totalorder %s31, 0
      %p236 = por %p234, %p235
      %s238 = sadd.s32 %s237, 1
      %p241 = scmp.eq.s32.totalorder %s25, 1
      %p242 = scmp.ne.s32.totalorder %s237, %s239
      %p243 = scmp.eq.s32.totalorder %s25, 0
      %p244 = por %p242, %p243
      %p245 = scmp.ne.s32.totalorder %s237, %s239
      %p246 = scmp.eq.s32.totalorder %s30, 1
      %p247 = por %p245, %p246
      %p248 = scmp.ne.s32.totalorder %s239, %s240
      %p249 = scmp.eq.s32.totalorder %s30, 0
      %p250 = por %p248, %p249
      %p251 = scmp.ne.s32.totalorder %s239, %s240
      %p252 = scmp.eq.s32.totalorder %s31, 1
      %p253 = por %p251, %p252
      %p255 = scmp.ne.s32.totalorder %s240, %s254
      %p256 = scmp.eq.s32.totalorder %s31, 0
      %p257 = por %p255, %p256
      %s259 = sadd.s32 %s258, 1
      %p262 = scmp.eq.s32.totalorder %s25, 1
      %p263 = scmp.ne.s32.totalorder %s258, %s260
      %p264 = scmp.eq.s32.totalorder %s25, 0
      %p265 = por %p263, %p264
      %p266 = scmp.ne.s32.totalorder %s258, %s260
      %p267 = scmp.eq.s32.totalorder %s30, 1
      %p268 = por %p266, %p267
      %p269 = scmp.ne.s32.totalorder %s260, %s261
      %p270 = scmp.eq.s32.totalorder %s30, 0
      %p271 = por %p269, %p270
      %p272 = scmp.ne.s32.totalorder %s260, %s261
      %p273 = scmp.eq.s32.totalorder %s31, 1
      %p274 = por %p272, %p273
      %p276 = scmp.ne.s32.totalorder %s261, %s275
      %p277 = scmp.eq.s32.totalorder %s31, 0
      %p278 = por %p276, %p277
      %s279 = ssub.s32 %s25, %s32
      %p280 = scmp.eq.s32.totalorder %s279, 0
      %s282 = sadd.s32 %s281, 1
      %s283 = scalar_select %p280, %s281, %s282
      %p286 = pneg %p280
      %p287 = scmp.eq.s32.totalorder %s25, 1
      %p288 = por %p286, %p287
      %p289 = scmp.ne.s32.totalorder %s281, %s284
      %p290 = scmp.eq.s32.totalorder %s25, 0
      %p291 = por %p289, %p290
      %p292 = scmp.ne.s32.totalorder %s281, %s284
      %p293 = scmp.eq.s32.totalorder %s30, 1
      %p294 = por %p292, %p293
      %p295 = scmp.ne.s32.totalorder %s284, %s285
      %p296 = scmp.eq.s32.totalorder %s30, 0
      %p297 = por %p295, %p296
      %p298 = scmp.ne.s32.totalorder %s284, %s285
      %p299 = scmp.eq.s32.totalorder %s31, 1
      %p300 = por %p298, %p299
      %p302 = scmp.ne.s32.totalorder %s285, %s301
      %p303 = scmp.eq.s32.totalorder %s31, 0
      %p304 = por %p302, %p303
      %s305 = ssub.s32 %s25, %s32
      %p306 = scmp.eq.s32.totalorder %s305, 0
      %s308 = sadd.s32 %s307, 1
      %s309 = scalar_select %p306, %s307, %s308
      %p312 = pneg %p306
      %p313 = scmp.eq.s32.totalorder %s25, 1
      %p314 = por %p312, %p313
      %p315 = scmp.ne.s32.totalorder %s307, %s310
      %p316 = scmp.eq.s32.totalorder %s25, 0
      %p317 = por %p315, %p316
      %p318 = scmp.ne.s32.totalorder %s307, %s310
      %p319 = scmp.eq.s32.totalorder %s30, 1
      %p320 = por %p318, %p319
      %p321 = scmp.ne.s32.totalorder %s310, %s311
      %p322 = scmp.eq.s32.totalorder %s30, 0
      %p323 = por %p321, %p322
      %p324 = scmp.ne.s32.totalorder %s310, %s311
      %p325 = scmp.eq.s32.totalorder %s31, 1
      %p326 = por %p324, %p325
      %p328 = scmp.ne.s32.totalorder %s311, %s327
      %p329 = scmp.eq.s32.totalorder %s31, 0
      %p330 = por %p328, %p329
      %p331 = scmp.le.s32.totalorder 1, %s25
      %p332 = scmp.lt.s32.totalorder %s25, 3
      %p333 = pnand %p331, %p332
      %p334 = pneg %p333
      // Predicated region
      $region9: #{tpu_custom_call.1} parent=5 // pred_check
        _
      $region10: #{tpu_custom_call.1} parent=5 // pred_check_branch
        %336 = sbr.rel (%p333) target = $region12
      $region11: #{tpu_custom_call.1} parent=5 // pred_region
        %s337 = ssub.s32 %s25, 1
        // Predicated region
        $region13: #{tpu_custom_call.1} parent=11 // pred_check
          %p338 = pneg %p124
        $region14: #{tpu_custom_call.1} parent=11 // pred_check_branch
          %340 = sbr.rel (%p338) target = $region16
        $region15: #{tpu_custom_call.1} parent=11 // pred_region
          _
        $region16: #{tpu_custom_call.1} parent=11 // pred_fallthru
          _
        // Predicated region
        $region17: #{tpu_custom_call.1} parent=11 // pred_check
          %p341 = pneg %p145
        $region18: #{tpu_custom_call.1} parent=11 // pred_check_branch
          %343 = sbr.rel (%p341) target = $region20
        $region19: #{tpu_custom_call.1} parent=11 // pred_region
          _
        $region20: #{tpu_custom_call.1} parent=11 // pred_fallthru
          _
        // Predicated region
        $region21: #{tpu_custom_call.1} parent=11 // pred_check
          %p344 = pneg %p166
        $region22: #{tpu_custom_call.1} parent=11 // pred_check_branch
          %346 = sbr.rel (%p344) target = $region24
        $region23: #{tpu_custom_call.1} parent=11 // pred_region
          _
        $region24: #{tpu_custom_call.1} parent=11 // pred_fallthru
          _
        // Predicated region
        $region25: #{tpu_custom_call.1} parent=11 // pred_check
          %p347 = pneg %p187
        $region26: #{tpu_custom_call.1} parent=11 // pred_check_branch
          %349 = sbr.rel (%p347) target = $region28
        $region27: #{tpu_custom_call.1} parent=11 // pred_region
          _
        $region28: #{tpu_custom_call.1} parent=11 // pred_fallthru
          _
        // Predicated region
        $region29: #{tpu_custom_call.1} parent=11 // pred_check
          %p350 = pneg %p208
        $region30: #{tpu_custom_call.1} parent=11 // pred_check_branch
          %352 = sbr.rel (%p350) target = $region32
        $region31: #{tpu_custom_call.1} parent=11 // pred_region
          _
        $region32: #{tpu_custom_call.1} parent=11 // pred_fallthru
          _
        // Predicated region
        $region33: #{tpu_custom_call.1} parent=11 // pred_check
          %p353 = pneg %p229
        $region34: #{tpu_custom_call.1} parent=11 // pred_check_branch
          %355 = sbr.rel (%p353) target = $region36
        $region35: #{tpu_custom_call.1} parent=11 // pred_region
          _
        $region36: #{tpu_custom_call.1} parent=11 // pred_fallthru
          _
        // Predicated region
        $region37: #{tpu_custom_call.1} parent=11 // pred_check
          %p356 = pneg %p250
        $region38: #{tpu_custom_call.1} parent=11 // pred_check_branch
          %358 = sbr.rel (%p356) target = $region40
        $region39: #{tpu_custom_call.1} parent=11 // pred_region
          _
        $region40: #{tpu_custom_call.1} parent=11 // pred_fallthru
          _
        // Predicated region
        $region41: #{tpu_custom_call.1} parent=11 // pred_check
          %p359 = pneg %p271
        $region42: #{tpu_custom_call.1} parent=11 // pred_check_branch
          %361 = sbr.rel (%p359) target = $region44
        $region43: #{tpu_custom_call.1} parent=11 // pred_region
          _
        $region44: #{tpu_custom_call.1} parent=11 // pred_fallthru
          _
      $region12: #{tpu_custom_call.1} parent=5 // pred_fallthru
        _
      %p362 = scmp.lt.s32.totalorder %s25, 2
      // Predicated region
      $region45: #{tpu_custom_call.1} parent=5 // pred_check
        %p363 = pneg %p362
      $region46: #{tpu_custom_call.1} parent=5 // pred_check_branch
        %365 = sbr.rel (%p363) target = $region48
      $region47: #{tpu_custom_call.1} parent=5 // pred_region
        // Predicated region
        $region49: #{tpu_custom_call.1} parent=47 // pred_check
          %p366 = pneg %p45
        $region50: #{tpu_custom_call.1} parent=47 // pred_check_branch
          %368 = sbr.rel (%p366) target = $region52
        $region51: #{tpu_custom_call.1} parent=47 // pred_region
          %p369 = scmp.lt.s32.totalorder %s25, 1
          %s370 = scalar_select %p369, %s25, 1
          %s371 = smul.addr %s370, 7
          %s372 = smul.addr %s371, 8
          %s373 = scalar_lea.vmem %s0, %s372
        $region52: #{tpu_custom_call.1} parent=47 // pred_fallthru
          _
        // Predicated region
        $region53: #{tpu_custom_call.1} parent=47 // pred_check
          %p374 = pneg %p71
        $region54: #{tpu_custom_call.1} parent=47 // pred_check_branch
          %376 = sbr.rel (%p374) target = $region56
        $region55: #{tpu_custom_call.1} parent=47 // pred_region
          %p377 = scmp.lt.s32.totalorder %s25, 1
          %s378 = scalar_select %p377, %s25, 1
          %s379 = smul.addr %s378, 8
          %s380 = smul.addr %s379, 4
          %s381 = scalar_lea.vmem %s1, %s380
        $region56: #{tpu_custom_call.1} parent=47 // pred_fallthru
          _
        // Predicated region
        $region57: #{tpu_custom_call.1} parent=47 // pred_check
          %p382 = pneg %p97
        $region58: #{tpu_custom_call.1} parent=47 // pred_check_branch
          %384 = sbr.rel (%p382) target = $region60
        $region59: #{tpu_custom_call.1} parent=47 // pred_region
          %p385 = scmp.lt.s32.totalorder %s25, 1
          %s386 = scalar_select %p385, %s25, 1
          %s387 = smul.addr %s386, 8
          %s388 = scalar_lea.vmem %s2, %s387
        $region60: #{tpu_custom_call.1} parent=47 // pred_fallthru
          _
      $region48: #{tpu_custom_call.1} parent=5 // pred_fallthru
        _
      %p389 = scmp.le.s32.totalorder 1, %s25
      %p390 = scmp.lt.s32.totalorder %s25, 3
      %p391 = pnand %p389, %p390
      %p392 = pneg %p391
      // Predicated region
      $region61: #{tpu_custom_call.1} parent=5 // pred_check
        _
      $region62: #{tpu_custom_call.1} parent=5 // pred_check_branch
        %394 = sbr.rel (%p391) target = $region64
      $region63: #{tpu_custom_call.1} parent=5 // pred_region
        %s395 = ssub.s32 %s25, 1
        %p396 = scmp.lt.s32.totalorder %s30, 1
        %s397 = scalar_select %p396, %s30, 1
        %s398 = smul.addr %s397, 7
        %s399 = smul.addr %s398, 8
        %s400 = scalar_lea.vmem %s0, %s399
        %p401 = pneg %p51
        %p402 = pneg %p48
        %p403 = scmp.lt.s32.totalorder %s30, 1
        %s404 = scalar_select %p403, %s30, 1
        %s405 = smul.addr %s404, 8
        %s406 = smul.addr %s405, 4
        %s407 = scalar_lea.vmem %s1, %s406
        %p408 = pneg %p77
        %p409 = pneg %p74
        %p410 = scmp.lt.s32.totalorder %s30, 1
        %s411 = scalar_select %p410, %s30, 1
        %s412 = smul.addr %s411, 8
        %s413 = scalar_lea.vmem %s2, %s412
        %p414 = pneg %p103
        %p415 = pneg %p100
        %p416 = pneg %p124
        %p417 = pneg %p121
        %p418 = pneg %p145
        %p419 = pneg %p142
        %p420 = pneg %p166
        %p421 = pneg %p163
        %p422 = pneg %p187
        %p423 = pneg %p184
        %p424 = pneg %p208
        %p425 = pneg %p205
        %p426 = pneg %p229
        %p427 = pneg %p226
        %p428 = pneg %p250
        %p429 = pneg %p247
        %p430 = pneg %p271
        %p431 = pneg %p268
        %p432 = pneg %p297
        %p433 = pneg %p294
        %s434 = sand.u32 %s284, 1
        %s435 = scalar_lea.sflag [#allocation3], %s434
        %s436 = sand.u32 %s284, 1
        %s437 = smul.addr %s436, 28
        %s438 = scalar_lea.vmem [#allocation2], %s437
        %p439 = pneg %p323
        %p440 = pneg %p320
        %s441 = sand.u32 %s310, 1
        %s442 = scalar_lea.sflag [#allocation5], %s441
        %s443 = sand.u32 %s310, 1
        %s444 = smul.addr %s443, 16
        %s445 = scalar_lea.vmem [#allocation4], %s444
        %p446 = scmp.lt.s32.totalorder %s30, 1
        %s447 = scalar_select %p446, %s30, 1
        %s448 = smul.addr %s447, 7
        %s449 = smul.addr %s448, 8
        %s450 = scalar_lea.vmem %s0, %s449
        %p451 = scmp.lt.s32.totalorder %s30, 1
        %s452 = scalar_select %p451, %s30, 1
        %s453 = smul.addr %s452, 8
        %s454 = smul.addr %s453, 4
        %s455 = scalar_lea.vmem %s1, %s454
        %p456 = scmp.lt.s32.totalorder %s30, 1
        %s457 = scalar_select %p456, %s30, 1
        %s458 = smul.addr %s457, 8
        %s459 = scalar_lea.vmem %s2, %s458
        %v461 = vld [vmem:[%s455] sm:$0xff]
        %v462 = vld [vmem:[%s455 + $0x8] sm:$0xff]
        %v463 = vld [vmem:[%s455 + $0x10] sm:$0xff]
        %v464 = vld [vmem:[%s455 + $0x18] sm:$0xff]
        %v465 = vunpack.c.l.bf16 %v461
        %v466 = vunpack.c.h.bf16 %v461
        %v467 = vunpack.c.l.bf16 %v462
        %v468 = vunpack.c.h.bf16 %v462
        %v469 = vunpack.c.l.bf16 %v463
        %v470 = vunpack.c.h.bf16 %v463
        %v471 = vunpack.c.l.bf16 %v464
        %v472 = vunpack.c.h.bf16 %v464
        %v473 = vld [vmem:[%s450] sm:$0xff]
        %v474 = vld [vmem:[%s450 + $0x8] sm:$0xff]
        %v475 = vld [vmem:[%s450 + $0x10] sm:$0xff]
        %v476 = vld [vmem:[%s450 + $0x18] sm:$0xff]
        %v477 = vld [vmem:[%s450 + $0x20] sm:$0xff]
        %v478 = vld [vmem:[%s450 + $0x28] sm:$0xff]
        %v479 = vld [vmem:[%s450 + $0x30] sm:$0xff]
        %v480 = vld [vmem:[%s459] sm:$0xff]
        %v481 = vld [vmem:[%s3] sm:$0xff]
        %v482 = vld [vmem:[%s3 + $0x8] sm:$0xff]
        %v483 = vld [vmem:[%s3 + $0x10] sm:$0xff]
        %v484 = vld [vmem:[%s3 + $0x18] sm:$0xff]
        %v485 = vld [vmem:[%s3 + $0x20] sm:$0xff]
        %v486 = vld [vmem:[%s3 + $0x28] sm:$0xff]
        %v487 = vld [vmem:[%s3 + $0x30] sm:$0xff]
        %v488 = vld [vmem:[%s3 + $0x38] sm:$0xff]
        %v489 = vld [vmem:[%s3 + $0x40] sm:$0xff]
        %v490 = vld [vmem:[%s3 + $0x48] sm:$0xff]
        %v491 = vld [vmem:[%s3 + $0x50] sm:$0xff]
        %v492 = vld [vmem:[%s3 + $0x58] sm:$0xff]
        %v493 = vld [vmem:[%s3 + $0x60] sm:$0xff]
        %v494 = vld [vmem:[%s3 + $0x68] sm:$0xff]
        %v495 = vld [vmem:[%s3 + $0x70] sm:$0xff]
        %v496 = vld [vmem:[%s3 + $0x78] sm:$0xff]
        %v497 = vld [vmem:[%s3 + $0x80] sm:$0xff]
        %v498 = vld [vmem:[%s3 + $0x88] sm:$0xff]
        %v499 = vld [vmem:[%s3 + $0x90] sm:$0xff]
        %v500 = vld [vmem:[%s3 + $0x98] sm:$0xff]
        %v501 = vld [vmem:[%s3 + $0xa0] sm:$0xff]
        %v502 = vld [vmem:[%s3 + $0xa8] sm:$0xff]
        %v503 = vld [vmem:[%s3 + $0xb0] sm:$0xff]
        %v504 = vld [vmem:[%s3 + $0xb8] sm:$0xff]
        %v505 = vld [vmem:[%s3 + $0xc0] sm:$0xff]
        %v506 = vld [vmem:[%s3 + $0xc8] sm:$0xff]
        %v507 = vld [vmem:[%s3 + $0xd0] sm:$0xff]
        %v508 = vld [vmem:[%s3 + $0xd8] sm:$0xff]
        %v509 = vld [vmem:[%s3 + $0xe0] sm:$0xff]
        %v510 = vld [vmem:[%s3 + $0xe8] sm:$0xff]
        %v511 = vld [vmem:[%s3 + $0xf0] sm:$0xff]
        %v512 = vld [vmem:[%s3 + $0xf8] sm:$0xff]
        %v513 = vld [vmem:[%s3 + $0x100] sm:$0xff]
        %v514 = vld [vmem:[%s3 + $0x108] sm:$0xff]
        %v515 = vld [vmem:[%s3 + $0x110] sm:$0xff]
        %v516 = vld [vmem:[%s3 + $0x118] sm:$0xff]
        %v517 = vld [vmem:[%s3 + $0x120] sm:$0xff]
        %v518 = vld [vmem:[%s3 + $0x128] sm:$0xff]
        %v519 = vld [vmem:[%s3 + $0x130] sm:$0xff]
        %v520 = vld [vmem:[%s3 + $0x138] sm:$0xff]
        %v521 = vld [vmem:[%s3 + $0x140] sm:$0xff]
        %v522 = vld [vmem:[%s3 + $0x148] sm:$0xff]
        %v523 = vld [vmem:[%s3 + $0x150] sm:$0xff]
        %v524 = vld [vmem:[%s3 + $0x158] sm:$0xff]
        %v525 = vld [vmem:[%s3 + $0x160] sm:$0xff]
        %v526 = vld [vmem:[%s3 + $0x168] sm:$0xff]
        %v527 = vld [vmem:[%s3 + $0x170] sm:$0xff]
        %v528 = vld [vmem:[%s3 + $0x178] sm:$0xff]
        %v529 = vld [vmem:[%s3 + $0x180] sm:$0xff]
        %v530 = vld [vmem:[%s3 + $0x188] sm:$0xff]
        %v531 = vld [vmem:[%s3 + $0x190] sm:$0xff]
        %v532 = vld [vmem:[%s3 + $0x198] sm:$0xff]
        %v533 = vld [vmem:[%s3 + $0x1a0] sm:$0xff]
        %v534 = vld [vmem:[%s3 + $0x1a8] sm:$0xff]
        %v535 = vld [vmem:[%s3 + $0x1b0] sm:$0xff]
        %v536 = vld [vmem:[%s3 + $0x1b8] sm:$0xff]
        %v537 = vld [vmem:[%s3 + $0x1c0] sm:$0xff]
        %v538 = vld [vmem:[%s3 + $0x1c8] sm:$0xff]
        %v539 = vld [vmem:[%s3 + $0x1d0] sm:$0xff]
        %v540 = vld [vmem:[%s3 + $0x1d8] sm:$0xff]
        %v541 = vld [vmem:[%s3 + $0x1e0] sm:$0xff]
        %v542 = vld [vmem:[%s3 + $0x1e8] sm:$0xff]
        %v543 = vld [vmem:[%s3 + $0x1f0] sm:$0xff]
        %v544 = vld [vmem:[%s3 + $0x1f8] sm:$0xff]
        %v545 = vld [vmem:[%s3 + $0x200] sm:$0xff]
        %v546 = vld [vmem:[%s3 + $0x208] sm:$0xff]
        %v547 = vld [vmem:[%s3 + $0x210] sm:$0xff]
        %v548 = vld [vmem:[%s3 + $0x218] sm:$0xff]
        %v549 = vld [vmem:[%s3 + $0x220] sm:$0xff]
        %v550 = vld [vmem:[%s3 + $0x228] sm:$0xff]
        %v551 = vld [vmem:[%s3 + $0x230] sm:$0xff]
        %v552 = vld [vmem:[%s3 + $0x238] sm:$0xff]
        %v553 = vld [vmem:[%s3 + $0x240] sm:$0xff]
        %v554 = vld [vmem:[%s3 + $0x248] sm:$0xff]
        %v555 = vld [vmem:[%s3 + $0x250] sm:$0xff]
        %v556 = vld [vmem:[%s3 + $0x258] sm:$0xff]
        %v557 = vld [vmem:[%s3 + $0x260] sm:$0xff]
        %v558 = vld [vmem:[%s3 + $0x268] sm:$0xff]
        %v559 = vld [vmem:[%s3 + $0x270] sm:$0xff]
        %v560 = vld [vmem:[%s3 + $0x278] sm:$0xff]
        %v561 = vld [vmem:[%s3 + $0x280] sm:$0xff]
        %v562 = vld [vmem:[%s3 + $0x288] sm:$0xff]
        %v563 = vld [vmem:[%s3 + $0x290] sm:$0xff]
        %v564 = vld [vmem:[%s3 + $0x298] sm:$0xff]
        %v565 = vld [vmem:[%s3 + $0x2a0] sm:$0xff]
        %v566 = vld [vmem:[%s3 + $0x2a8] sm:$0xff]
        %v567 = vld [vmem:[%s3 + $0x2b0] sm:$0xff]
        %v568 = vld [vmem:[%s3 + $0x2b8] sm:$0xff]
        %v569 = vld [vmem:[%s3 + $0x2c0] sm:$0xff]
        %v570 = vld [vmem:[%s3 + $0x2c8] sm:$0xff]
        %v571 = vld [vmem:[%s3 + $0x2d0] sm:$0xff]
        %v572 = vld [vmem:[%s3 + $0x2d8] sm:$0xff]
        %v573 = vld [vmem:[%s3 + $0x2e0] sm:$0xff]
        %v574 = vld [vmem:[%s3 + $0x2e8] sm:$0xff]
        %v575 = vld [vmem:[%s3 + $0x2f0] sm:$0xff]
        %v576 = vld [vmem:[%s3 + $0x2f8] sm:$0xff]
        %v577 = vld [vmem:[%s3 + $0x300] sm:$0xff]
        %v578 = vld [vmem:[%s3 + $0x308] sm:$0xff]
        %v579 = vld [vmem:[%s3 + $0x310] sm:$0xff]
        %v580 = vld [vmem:[%s3 + $0x318] sm:$0xff]
        %v581 = vld [vmem:[%s3 + $0x320] sm:$0xff]
        %v582 = vld [vmem:[%s3 + $0x328] sm:$0xff]
        %v583 = vld [vmem:[%s3 + $0x330] sm:$0xff]
        %v584 = vld [vmem:[%s3 + $0x338] sm:$0xff]
        %v585 = vld [vmem:[%s3 + $0x340] sm:$0xff]
        %v586 = vld [vmem:[%s3 + $0x348] sm:$0xff]
        %v587 = vld [vmem:[%s3 + $0x350] sm:$0xff]
        %v588 = vld [vmem:[%s3 + $0x358] sm:$0xff]
        %v589 = vld [vmem:[%s3 + $0x360] sm:$0xff]
        %v590 = vld [vmem:[%s3 + $0x368] sm:$0xff]
        %v591 = vld [vmem:[%s3 + $0x370] sm:$0xff]
        %v592 = vld [vmem:[%s3 + $0x378] sm:$0xff]
        %v593 = vld [vmem:[%s3 + $0x380] sm:$0xff]
        %v594 = vld [vmem:[%s3 + $0x388] sm:$0xff]
        %v595 = vld [vmem:[%s3 + $0x390] sm:$0xff]
        %v596 = vld [vmem:[%s3 + $0x398] sm:$0xff]
        %v597 = vld [vmem:[%s3 + $0x3a0] sm:$0xff]
        %v598 = vld [vmem:[%s3 + $0x3a8] sm:$0xff]
        %v599 = vld [vmem:[%s3 + $0x3b0] sm:$0xff]
        %v600 = vld [vmem:[%s3 + $0x3b8] sm:$0xff]
        %v601 = vld [vmem:[%s3 + $0x3c0] sm:$0xff]
        %v602 = vld [vmem:[%s3 + $0x3c8] sm:$0xff]
        %v603 = vld [vmem:[%s3 + $0x3d0] sm:$0xff]
        %v604 = vld [vmem:[%s3 + $0x3d8] sm:$0xff]
        %v605 = vld [vmem:[%s3 + $0x3e0] sm:$0xff]
        %v606 = vld [vmem:[%s3 + $0x3e8] sm:$0xff]
        %v607 = vld [vmem:[%s3 + $0x3f0] sm:$0xff]
        %v608 = vld [vmem:[%s3 + $0x3f8] sm:$0xff]
        %v609 = vld [vmem:[%s3 + $0x400] sm:$0xff]
        %v610 = vld [vmem:[%s3 + $0x408] sm:$0xff]
        %v611 = vld [vmem:[%s3 + $0x410] sm:$0xff]
        %v612 = vld [vmem:[%s3 + $0x418] sm:$0xff]
        %v613 = vld [vmem:[%s3 + $0x420] sm:$0xff]
        %v614 = vld [vmem:[%s3 + $0x428] sm:$0xff]
        %v615 = vld [vmem:[%s3 + $0x430] sm:$0xff]
        %v616 = vld [vmem:[%s3 + $0x438] sm:$0xff]
        %v617 = vld [vmem:[%s3 + $0x440] sm:$0xff]
        %v618 = vld [vmem:[%s3 + $0x448] sm:$0xff]
        %v619 = vld [vmem:[%s3 + $0x450] sm:$0xff]
        %v620 = vld [vmem:[%s3 + $0x458] sm:$0xff]
        %v621 = vld [vmem:[%s3 + $0x460] sm:$0xff]
        %v622 = vld [vmem:[%s3 + $0x468] sm:$0xff]
        %v623 = vld [vmem:[%s3 + $0x470] sm:$0xff]
        %v624 = vld [vmem:[%s3 + $0x478] sm:$0xff]
        %v625 = vld [vmem:[%s3 + $0x480] sm:$0xff]
        %v626 = vld [vmem:[%s3 + $0x488] sm:$0xff]
        %v627 = vld [vmem:[%s3 + $0x490] sm:$0xff]
        %v628 = vld [vmem:[%s3 + $0x498] sm:$0xff]
        %v629 = vld [vmem:[%s3 + $0x4a0] sm:$0xff]
        %v630 = vld [vmem:[%s3 + $0x4a8] sm:$0xff]
        %v631 = vld [vmem:[%s3 + $0x4b0] sm:$0xff]
        %v632 = vld [vmem:[%s3 + $0x4b8] sm:$0xff]
        %v633 = vld [vmem:[%s3 + $0x4c0] sm:$0xff]
        %v634 = vld [vmem:[%s3 + $0x4c8] sm:$0xff]
        %v635 = vld [vmem:[%s3 + $0x4d0] sm:$0xff]
        %v636 = vld [vmem:[%s3 + $0x4d8] sm:$0xff]
        %v637 = vld [vmem:[%s3 + $0x4e0] sm:$0xff]
        %v638 = vld [vmem:[%s3 + $0x4e8] sm:$0xff]
        %v639 = vld [vmem:[%s3 + $0x4f0] sm:$0xff]
        %v640 = vld [vmem:[%s3 + $0x4f8] sm:$0xff]
        %v641 = vld [vmem:[%s3 + $0x500] sm:$0xff]
        %v642 = vld [vmem:[%s3 + $0x508] sm:$0xff]
        %v643 = vld [vmem:[%s3 + $0x510] sm:$0xff]
        %v644 = vld [vmem:[%s3 + $0x518] sm:$0xff]
        %v645 = vld [vmem:[%s3 + $0x520] sm:$0xff]
        %v646 = vld [vmem:[%s3 + $0x528] sm:$0xff]
        %v647 = vld [vmem:[%s3 + $0x530] sm:$0xff]
        %v648 = vld [vmem:[%s3 + $0x538] sm:$0xff]
        %v649 = vld [vmem:[%s3 + $0x540] sm:$0xff]
        %v650 = vld [vmem:[%s3 + $0x548] sm:$0xff]
        %v651 = vld [vmem:[%s3 + $0x550] sm:$0xff]
        %v652 = vld [vmem:[%s3 + $0x558] sm:$0xff]
        %v653 = vld [vmem:[%s3 + $0x560] sm:$0xff]
        %v654 = vld [vmem:[%s3 + $0x568] sm:$0xff]
        %v655 = vld [vmem:[%s3 + $0x570] sm:$0xff]
        %v656 = vld [vmem:[%s3 + $0x578] sm:$0xff]
        %v657 = vld [vmem:[%s3 + $0x580] sm:$0xff]
        %v658 = vld [vmem:[%s3 + $0x588] sm:$0xff]
        %v659 = vld [vmem:[%s3 + $0x590] sm:$0xff]
        %v660 = vld [vmem:[%s3 + $0x598] sm:$0xff]
        %v661 = vld [vmem:[%s3 + $0x5a0] sm:$0xff]
        %v662 = vld [vmem:[%s3 + $0x5a8] sm:$0xff]
        %v663 = vld [vmem:[%s3 + $0x5b0] sm:$0xff]
        %v664 = vld [vmem:[%s3 + $0x5b8] sm:$0xff]
        %v665 = vld [vmem:[%s3 + $0x5c0] sm:$0xff]
        %v666 = vld [vmem:[%s3 + $0x5c8] sm:$0xff]
        %v667 = vld [vmem:[%s3 + $0x5d0] sm:$0xff]
        %v668 = vld [vmem:[%s3 + $0x5d8] sm:$0xff]
        %v669 = vld [vmem:[%s3 + $0x5e0] sm:$0xff]
        %v670 = vld [vmem:[%s3 + $0x5e8] sm:$0xff]
        %v671 = vld [vmem:[%s3 + $0x5f0] sm:$0xff]
        %v672 = vld [vmem:[%s3 + $0x5f8] sm:$0xff]
        %v673 = vld [vmem:[%s3 + $0x600] sm:$0xff]
        %v674 = vld [vmem:[%s3 + $0x608] sm:$0xff]
        %v675 = vld [vmem:[%s3 + $0x610] sm:$0xff]
        %v676 = vld [vmem:[%s3 + $0x618] sm:$0xff]
        %v677 = vpack.c.bf16 %v473, %v473
        %v678 = vpack.c.bf16 %v474, %v474
        %v679 = vpack.c.bf16 %v475, %v475
        %v680 = vpack.c.bf16 %v476, %v476
        %v681 = vpack.c.bf16 %v477, %v477
        %v682 = vpack.c.bf16 %v478, %v478
        %v683 = vpack.c.bf16 %v479, %v479
        %v880 = vunpack.c.l.b16 %v481
        %v881 = vunpack.c.h.b16 %v481
        %v882 = vunpack.c.l.b16 %v482
        %v883 = vunpack.c.h.b16 %v482
        %v884 = vunpack.c.l.b16 %v483
        %v885 = vunpack.c.h.b16 %v483
        %v886 = vunpack.c.l.b16 %v484
        %v887 = vunpack.c.h.b16 %v484
        %v888 = vunpack.c.l.b16 %v485
        %v889 = vunpack.c.h.b16 %v485
        %v890 = vunpack.c.l.b16 %v486
        %v891 = vunpack.c.h.b16 %v486
        %v892 = vunpack.c.l.b16 %v487
        %v893 = vunpack.c.h.b16 %v487
        %v894 = vunpack.c.l.b16 %v488
        %v895 = vunpack.c.h.b16 %v488
        %v896 = vunpack.c.l.b16 %v489
        %v897 = vunpack.c.h.b16 %v489
        %v898 = vunpack.c.l.b16 %v490
        %v899 = vunpack.c.h.b16 %v490
        %v900 = vunpack.c.l.b16 %v491
        %v901 = vunpack.c.h.b16 %v491
        %v902 = vunpack.c.l.b16 %v492
        %v903 = vunpack.c.h.b16 %v492
        %v904 = vunpack.c.l.b16 %v493
        %v905 = vunpack.c.h.b16 %v493
        %v906 = vunpack.c.l.b16 %v494
        %v907 = vunpack.c.h.b16 %v494
        %v908 = vunpack.c.l.b16 %v495
        %v909 = vunpack.c.h.b16 %v495
        %v910 = vunpack.c.l.b16 %v496
        %v911 = vunpack.c.h.b16 %v496
        %v912 = vunpack.c.l.b16 %v497
        %v913 = vunpack.c.h.b16 %v497
        %v914 = vunpack.c.l.b16 %v498
        %v915 = vunpack.c.h.b16 %v498
        %v916 = vunpack.c.l.b16 %v499
        %v917 = vunpack.c.h.b16 %v499
        %v918 = vunpack.c.l.b16 %v500
        %v919 = vunpack.c.h.b16 %v500
        %v920 = vunpack.c.l.b16 %v501
        %v921 = vunpack.c.h.b16 %v501
        %v922 = vunpack.c.l.b16 %v502
        %v923 = vunpack.c.h.b16 %v502
        %v924 = vunpack.c.l.b16 %v503
        %v925 = vunpack.c.h.b16 %v503
        %v926 = vunpack.c.l.b16 %v504
        %v927 = vunpack.c.h.b16 %v504
        %v928 = vunpack.c.l.b16 %v505
        %v929 = vunpack.c.h.b16 %v505
        %v930 = vunpack.c.l.b16 %v506
        %v931 = vunpack.c.h.b16 %v506
        %v932 = vunpack.c.l.b16 %v507
        %v933 = vunpack.c.h.b16 %v507
        %v934 = vunpack.c.l.b16 %v508
        %v935 = vunpack.c.h.b16 %v508
        %v936 = vunpack.c.l.b16 %v509
        %v937 = vunpack.c.h.b16 %v509
        %v938 = vunpack.c.l.b16 %v510
        %v939 = vunpack.c.h.b16 %v510
        %v940 = vunpack.c.l.b16 %v511
        %v941 = vunpack.c.h.b16 %v511
        %v942 = vunpack.c.l.b16 %v512
        %v943 = vunpack.c.h.b16 %v512
        %v944 = vunpack.c.l.b16 %v513
        %v945 = vunpack.c.h.b16 %v513
        %v946 = vunpack.c.l.b16 %v514
        %v947 = vunpack.c.h.b16 %v514
        %v948 = vunpack.c.l.b16 %v515
        %v949 = vunpack.c.h.b16 %v515
        %v950 = vunpack.c.l.b16 %v516
        %v951 = vunpack.c.h.b16 %v516
        %v952 = vunpack.c.l.b16 %v517
        %v953 = vunpack.c.h.b16 %v517
        %v954 = vunpack.c.l.b16 %v518
        %v955 = vunpack.c.h.b16 %v518
        %v956 = vunpack.c.l.b16 %v519
        %v957 = vunpack.c.h.b16 %v519
        %v958 = vunpack.c.l.b16 %v520
        %v959 = vunpack.c.h.b16 %v520
        %v960 = vunpack.c.l.b16 %v521
        %v961 = vunpack.c.h.b16 %v521
        %v962 = vunpack.c.l.b16 %v522
        %v963 = vunpack.c.h.b16 %v522
        %v964 = vunpack.c.l.b16 %v523
        %v965 = vunpack.c.h.b16 %v523
        %v966 = vunpack.c.l.b16 %v524
        %v967 = vunpack.c.h.b16 %v524
        %v968 = vunpack.c.l.b16 %v525
        %v969 = vunpack.c.h.b16 %v525
        %v970 = vunpack.c.l.b16 %v526
        %v971 = vunpack.c.h.b16 %v526
        %v972 = vunpack.c.l.b16 %v527
        %v973 = vunpack.c.h.b16 %v527
        %v974 = vunpack.c.l.b16 %v528
        %v975 = vunpack.c.h.b16 %v528
        %v976 = vunpack.c.l.b16 %v529
        %v977 = vunpack.c.h.b16 %v529
        %v978 = vunpack.c.l.b16 %v530
        %v979 = vunpack.c.h.b16 %v530
        %v980 = vunpack.c.l.b16 %v531
        %v981 = vunpack.c.h.b16 %v531
        %v982 = vunpack.c.l.b16 %v532
        %v983 = vunpack.c.h.b16 %v532
        %v984 = vunpack.c.l.b16 %v533
        %v985 = vunpack.c.h.b16 %v533
        %v986 = vunpack.c.l.b16 %v534
        %v987 = vunpack.c.h.b16 %v534
        %v988 = vunpack.c.l.b16 %v535
        %v989 = vunpack.c.h.b16 %v535
        %v990 = vunpack.c.l.b16 %v536
        %v991 = vunpack.c.h.b16 %v536
        %v992 = vunpack.c.l.b16 %v537
        %v993 = vunpack.c.h.b16 %v537
        %v994 = vunpack.c.l.b16 %v538
        %v995 = vunpack.c.h.b16 %v538
        %v996 = vunpack.c.l.b16 %v539
        %v997 = vunpack.c.h.b16 %v539
        %v998 = vunpack.c.l.b16 %v540
        %v999 = vunpack.c.h.b16 %v540
        %v1000 = vunpack.c.l.b16 %v541
        %v1001 = vunpack.c.h.b16 %v541
        %v1002 = vunpack.c.l.b16 %v542
        %v1003 = vunpack.c.h.b16 %v542
        %v1004 = vunpack.c.l.b16 %v543
        %v1005 = vunpack.c.h.b16 %v543
        %v1006 = vunpack.c.l.b16 %v544
        %v1007 = vunpack.c.h.b16 %v544
        %v1008 = vunpack.c.l.b16 %v545
        %v1009 = vunpack.c.h.b16 %v545
        %v1010 = vunpack.c.l.b16 %v546
        %v1011 = vunpack.c.h.b16 %v546
        %v1012 = vunpack.c.l.b16 %v547
        %v1013 = vunpack.c.h.b16 %v547
        %v1014 = vunpack.c.l.b16 %v548
        %v1015 = vunpack.c.h.b16 %v548
        %v1016 = vunpack.c.l.b16 %v549
        %v1017 = vunpack.c.h.b16 %v549
        %v1018 = vunpack.c.l.b16 %v550
        %v1019 = vunpack.c.h.b16 %v550
        %v1020 = vunpack.c.l.b16 %v551
        %v1021 = vunpack.c.h.b16 %v551
        %v1022 = vunpack.c.l.b16 %v552
        %v1023 = vunpack.c.h.b16 %v552
        %v1024 = vunpack.c.l.b16 %v553
        %v1025 = vunpack.c.h.b16 %v553
        %v1026 = vunpack.c.l.b16 %v554
        %v1027 = vunpack.c.h.b16 %v554
        %v1028 = vunpack.c.l.b16 %v555
        %v1029 = vunpack.c.h.b16 %v555
        %v1030 = vunpack.c.l.b16 %v556
        %v1031 = vunpack.c.h.b16 %v556
        %v1032 = vunpack.c.l.b16 %v557
        %v1033 = vunpack.c.h.b16 %v557
        %v1034 = vunpack.c.l.b16 %v558
        %v1035 = vunpack.c.h.b16 %v558
        %v1036 = vunpack.c.l.b16 %v559
        %v1037 = vunpack.c.h.b16 %v559
        %v1038 = vunpack.c.l.b16 %v560
        %v1039 = vunpack.c.h.b16 %v560
        %v1040 = vunpack.c.l.b16 %v561
        %v1041 = vunpack.c.h.b16 %v561
        %v1042 = vunpack.c.l.b16 %v562
        %v1043 = vunpack.c.h.b16 %v562
        %v1044 = vunpack.c.l.b16 %v563
        %v1045 = vunpack.c.h.b16 %v563
        %v1046 = vunpack.c.l.b16 %v564
        %v1047 = vunpack.c.h.b16 %v564
        %v1048 = vunpack.c.l.b16 %v565
        %v1049 = vunpack.c.h.b16 %v565
        %v1050 = vunpack.c.l.b16 %v566
        %v1051 = vunpack.c.h.b16 %v566
        %v1052 = vunpack.c.l.b16 %v567
        %v1053 = vunpack.c.h.b16 %v567
        %v1054 = vunpack.c.l.b16 %v568
        %v1055 = vunpack.c.h.b16 %v568
        %v1056 = vunpack.c.l.b16 %v569
        %v1057 = vunpack.c.h.b16 %v569
        %v1058 = vunpack.c.l.b16 %v570
        %v1059 = vunpack.c.h.b16 %v570
        %v1060 = vunpack.c.l.b16 %v571
        %v1061 = vunpack.c.h.b16 %v571
        %v1062 = vunpack.c.l.b16 %v572
        %v1063 = vunpack.c.h.b16 %v572
        %v1064 = vunpack.c.l.b16 %v573
        %v1065 = vunpack.c.h.b16 %v573
        %v1066 = vunpack.c.l.b16 %v574
        %v1067 = vunpack.c.h.b16 %v574
        %v1068 = vunpack.c.l.b16 %v575
        %v1069 = vunpack.c.h.b16 %v575
        %v1070 = vunpack.c.l.b16 %v576
        %v1071 = vunpack.c.h.b16 %v576
        %v1072 = vunpack.c.l.b16 %v577
        %v1073 = vunpack.c.h.b16 %v577
        %v1074 = vunpack.c.l.b16 %v578
        %v1075 = vunpack.c.h.b16 %v578
        %v1076 = vunpack.c.l.b16 %v579
        %v1077 = vunpack.c.h.b16 %v579
        %v1078 = vunpack.c.l.b16 %v580
        %v1079 = vunpack.c.h.b16 %v580
        %v1080 = vunpack.c.l.b16 %v581
        %v1081 = vunpack.c.h.b16 %v581
        %v1082 = vunpack.c.l.b16 %v582
        %v1083 = vunpack.c.h.b16 %v582
        %v1084 = vunpack.c.l.b16 %v583
        %v1085 = vunpack.c.h.b16 %v583
        %v1086 = vunpack.c.l.b16 %v584
        %v1087 = vunpack.c.h.b16 %v584
        %v1088 = vunpack.c.l.b16 %v585
        %v1089 = vunpack.c.h.b16 %v585
        %v1090 = vunpack.c.l.b16 %v586
        %v1091 = vunpack.c.h.b16 %v586
        %v1092 = vunpack.c.l.b16 %v587
        %v1093 = vunpack.c.h.b16 %v587
        %v1094 = vunpack.c.l.b16 %v588
        %v1095 = vunpack.c.h.b16 %v588
        %v1096 = vunpack.c.l.b16 %v589
        %v1097 = vunpack.c.h.b16 %v589
        %v1098 = vunpack.c.l.b16 %v590
        %v1099 = vunpack.c.h.b16 %v590
        %v1100 = vunpack.c.l.b16 %v591
        %v1101 = vunpack.c.h.b16 %v591
        %v1102 = vunpack.c.l.b16 %v592
        %v1103 = vunpack.c.h.b16 %v592
        %v1104 = vunpack.c.l.b16 %v593
        %v1105 = vunpack.c.h.b16 %v593
        %v1106 = vunpack.c.l.b16 %v594
        %v1107 = vunpack.c.h.b16 %v594
        %v1108 = vunpack.c.l.b16 %v595
        %v1109 = vunpack.c.h.b16 %v595
        %v1110 = vunpack.c.l.b16 %v596
        %v1111 = vunpack.c.h.b16 %v596
        %v1112 = vunpack.c.l.b16 %v597
        %v1113 = vunpack.c.h.b16 %v597
        %v1114 = vunpack.c.l.b16 %v598
        %v1115 = vunpack.c.h.b16 %v598
        %v1116 = vunpack.c.l.b16 %v599
        %v1117 = vunpack.c.h.b16 %v599
        %v1118 = vunpack.c.l.b16 %v600
        %v1119 = vunpack.c.h.b16 %v600
        %v1120 = vunpack.c.l.b16 %v601
        %v1121 = vunpack.c.h.b16 %v601
        %v1122 = vunpack.c.l.b16 %v602
        %v1123 = vunpack.c.h.b16 %v602
        %v1124 = vunpack.c.l.b16 %v603
        %v1125 = vunpack.c.h.b16 %v603
        %v1126 = vunpack.c.l.b16 %v604
        %v1127 = vunpack.c.h.b16 %v604
        %v1128 = vunpack.c.l.b16 %v605
        %v1129 = vunpack.c.h.b16 %v605
        %v1130 = vunpack.c.l.b16 %v606
        %v1131 = vunpack.c.h.b16 %v606
        %v1132 = vunpack.c.l.b16 %v607
        %v1133 = vunpack.c.h.b16 %v607
        %v1134 = vunpack.c.l.b16 %v608
        %v1135 = vunpack.c.h.b16 %v608
        %v1136 = vunpack.c.l.b16 %v609
        %v1137 = vunpack.c.h.b16 %v609
        %v1138 = vunpack.c.l.b16 %v610
        %v1139 = vunpack.c.h.b16 %v610
        %v1140 = vunpack.c.l.b16 %v611
        %v1141 = vunpack.c.h.b16 %v611
        %v1142 = vunpack.c.l.b16 %v612
        %v1143 = vunpack.c.h.b16 %v612
        %v1144 = vunpack.c.l.b16 %v613
        %v1145 = vunpack.c.h.b16 %v613
        %v1146 = vunpack.c.l.b16 %v614
        %v1147 = vunpack.c.h.b16 %v614
        %v1148 = vunpack.c.l.b16 %v615
        %v1149 = vunpack.c.h.b16 %v615
        %v1150 = vunpack.c.l.b16 %v616
        %v1151 = vunpack.c.h.b16 %v616
        %v1152 = vunpack.c.l.b16 %v617
        %v1153 = vunpack.c.h.b16 %v617
        %v1154 = vunpack.c.l.b16 %v618
        %v1155 = vunpack.c.h.b16 %v618
        %v1156 = vunpack.c.l.b16 %v619
        %v1157 = vunpack.c.h.b16 %v619
        %v1158 = vunpack.c.l.b16 %v620
        %v1159 = vunpack.c.h.b16 %v620
        %v1160 = vunpack.c.l.b16 %v621
        %v1161 = vunpack.c.h.b16 %v621
        %v1162 = vunpack.c.l.b16 %v622
        %v1163 = vunpack.c.h.b16 %v622
        %v1164 = vunpack.c.l.b16 %v623
        %v1165 = vunpack.c.h.b16 %v623
        %v1166 = vunpack.c.l.b16 %v624
        %v1167 = vunpack.c.h.b16 %v624
        %v1168 = vunpack.c.l.b16 %v625
        %v1169 = vunpack.c.h.b16 %v625
        %v1170 = vunpack.c.l.b16 %v626
        %v1171 = vunpack.c.h.b16 %v626
        %v1172 = vunpack.c.l.b16 %v627
        %v1173 = vunpack.c.h.b16 %v627
        %v1174 = vunpack.c.l.b16 %v628
        %v1175 = vunpack.c.h.b16 %v628
        %v1176 = vunpack.c.l.b16 %v629
        %v1177 = vunpack.c.h.b16 %v629
        %v1178 = vunpack.c.l.b16 %v630
        %v1179 = vunpack.c.h.b16 %v630
        %v1180 = vunpack.c.l.b16 %v631
        %v1181 = vunpack.c.h.b16 %v631
        %v1182 = vunpack.c.l.b16 %v632
        %v1183 = vunpack.c.h.b16 %v632
        %v1184 = vunpack.c.l.b16 %v633
        %v1185 = vunpack.c.h.b16 %v633
        %v1186 = vunpack.c.l.b16 %v634
        %v1187 = vunpack.c.h.b16 %v634
        %v1188 = vunpack.c.l.b16 %v635
        %v1189 = vunpack.c.h.b16 %v635
        %v1190 = vunpack.c.l.b16 %v636
        %v1191 = vunpack.c.h.b16 %v636
        %v1192 = vunpack.c.l.b16 %v637
        %v1193 = vunpack.c.h.b16 %v637
        %v1194 = vunpack.c.l.b16 %v638
        %v1195 = vunpack.c.h.b16 %v638
        %v1196 = vunpack.c.l.b16 %v639
        %v1197 = vunpack.c.h.b16 %v639
        %v1198 = vunpack.c.l.b16 %v640
        %v1199 = vunpack.c.h.b16 %v640
        %v1200 = vunpack.c.l.b16 %v641
        %v1201 = vunpack.c.h.b16 %v641
        %v1202 = vunpack.c.l.b16 %v642
        %v1203 = vunpack.c.h.b16 %v642
        %v1204 = vunpack.c.l.b16 %v643
        %v1205 = vunpack.c.h.b16 %v643
        %v1206 = vunpack.c.l.b16 %v644
        %v1207 = vunpack.c.h.b16 %v644
        %v1208 = vunpack.c.l.b16 %v645
        %v1209 = vunpack.c.h.b16 %v645
        %v1210 = vunpack.c.l.b16 %v646
        %v1211 = vunpack.c.h.b16 %v646
        %v1212 = vunpack.c.l.b16 %v647
        %v1213 = vunpack.c.h.b16 %v647
        %v1214 = vunpack.c.l.b16 %v648
        %v1215 = vunpack.c.h.b16 %v648
        %v1216 = vunpack.c.l.b16 %v649
        %v1217 = vunpack.c.h.b16 %v649
        %v1218 = vunpack.c.l.b16 %v650
        %v1219 = vunpack.c.h.b16 %v650
        %v1220 = vunpack.c.l.b16 %v651
        %v1221 = vunpack.c.h.b16 %v651
        %v1222 = vunpack.c.l.b16 %v652
        %v1223 = vunpack.c.h.b16 %v652
        %v1224 = vunpack.c.l.b16 %v653
        %v1225 = vunpack.c.h.b16 %v653
        %v1226 = vunpack.c.l.b16 %v654
        %v1227 = vunpack.c.h.b16 %v654
        %v1228 = vunpack.c.l.b16 %v655
        %v1229 = vunpack.c.h.b16 %v655
        %v1230 = vunpack.c.l.b16 %v656
        %v1231 = vunpack.c.h.b16 %v656
        %v1232 = vunpack.c.l.b16 %v657
        %v1233 = vunpack.c.h.b16 %v657
        %v1234 = vunpack.c.l.b16 %v658
        %v1235 = vunpack.c.h.b16 %v658
        %v1236 = vunpack.c.l.b16 %v659
        %v1237 = vunpack.c.h.b16 %v659
        %v1238 = vunpack.c.l.b16 %v660
        %v1239 = vunpack.c.h.b16 %v660
        %v1240 = vunpack.c.l.b16 %v661
        %v1241 = vunpack.c.h.b16 %v661
        %v1242 = vunpack.c.l.b16 %v662
        %v1243 = vunpack.c.h.b16 %v662
        %v1244 = vunpack.c.l.b16 %v663
        %v1245 = vunpack.c.h.b16 %v663
        %v1246 = vunpack.c.l.b16 %v664
        %v1247 = vunpack.c.h.b16 %v664
        %v1248 = vunpack.c.l.b16 %v665
        %v1249 = vunpack.c.h.b16 %v665
        %v1250 = vunpack.c.l.b16 %v666
        %v1251 = vunpack.c.h.b16 %v666
        %v1252 = vunpack.c.l.b16 %v667
        %v1253 = vunpack.c.h.b16 %v667
        %v1254 = vunpack.c.l.b16 %v668
        %v1255 = vunpack.c.h.b16 %v668
        %v1256 = vunpack.c.l.b16 %v669
        %v1257 = vunpack.c.h.b16 %v669
        %v1258 = vunpack.c.l.b16 %v670
        %v1259 = vunpack.c.h.b16 %v670
        %v1260 = vunpack.c.l.b16 %v671
        %v1261 = vunpack.c.h.b16 %v671
        %v1262 = vunpack.c.l.b16 %v672
        %v1263 = vunpack.c.h.b16 %v672
        %v1264 = vunpack.c.l.b16 %v673
        %v1265 = vunpack.c.h.b16 %v673
        %v1266 = vunpack.c.l.b16 %v674
        %v1267 = vunpack.c.h.b16 %v674
        %v1268 = vunpack.c.l.b16 %v675
        %v1269 = vunpack.c.h.b16 %v675
        %v1270 = vunpack.c.l.b16 %v676
        %v1271 = vunpack.c.h.b16 %v676
        %v1272 = vpack.c.b16 %v884, %v880
        %v1273 = vpack.c.b16 %v885, %v881
        %v1274 = vpack.c.b16 %v886, %v882
        %v1275 = vpack.c.b16 %v887, %v883
        %v1276 = vpack.c.b16 %v892, %v888
        %v1277 = vpack.c.b16 %v893, %v889
        %v1278 = vpack.c.b16 %v894, %v890
        %v1279 = vpack.c.b16 %v895, %v891
        %v1280 = vpack.c.b16 %v900, %v896
        %v1281 = vpack.c.b16 %v901, %v897
        %v1282 = vpack.c.b16 %v902, %v898
        %v1283 = vpack.c.b16 %v903, %v899
        %v1284 = vpack.c.b16 %v908, %v904
        %v1285 = vpack.c.b16 %v909, %v905
        %v1286 = vpack.c.b16 %v910, %v906
        %v1287 = vpack.c.b16 %v911, %v907
        %v1288 = vpack.c.b16 %v916, %v912
        %v1289 = vpack.c.b16 %v917, %v913
        %v1290 = vpack.c.b16 %v918, %v914
        %v1291 = vpack.c.b16 %v919, %v915
        %v1292 = vpack.c.b16 %v924, %v920
        %v1293 = vpack.c.b16 %v925, %v921
        %v1294 = vpack.c.b16 %v926, %v922
        %v1295 = vpack.c.b16 %v927, %v923
        %v1296 = vpack.c.b16 %v932, %v928
        %v1297 = vpack.c.b16 %v933, %v929
        %v1298 = vpack.c.b16 %v934, %v930
        %v1299 = vpack.c.b16 %v935, %v931
        %v1300 = vpack.c.b16 %v940, %v936
        %v1301 = vpack.c.b16 %v941, %v937
        %v1302 = vpack.c.b16 %v942, %v938
        %v1303 = vpack.c.b16 %v943, %v939
        %v1304 = vpack.c.b16 %v948, %v944
        %v1305 = vpack.c.b16 %v949, %v945
        %v1306 = vpack.c.b16 %v950, %v946
        %v1307 = vpack.c.b16 %v951, %v947
        %v1308 = vpack.c.b16 %v956, %v952
        %v1309 = vpack.c.b16 %v957, %v953
        %v1310 = vpack.c.b16 %v958, %v954
        %v1311 = vpack.c.b16 %v959, %v955
        %v1312 = vpack.c.b16 %v964, %v960
        %v1313 = vpack.c.b16 %v965, %v961
        %v1314 = vpack.c.b16 %v966, %v962
        %v1315 = vpack.c.b16 %v967, %v963
        %v1316 = vpack.c.b16 %v972, %v968
        %v1317 = vpack.c.b16 %v973, %v969
        %v1318 = vpack.c.b16 %v974, %v970
        %v1319 = vpack.c.b16 %v975, %v971
        %v1320 = vpack.c.b16 %v980, %v976
        %v1321 = vpack.c.b16 %v981, %v977
        %v1322 = vpack.c.b16 %v982, %v978
        %v1323 = vpack.c.b16 %v983, %v979
        %v1324 = vpack.c.b16 %v988, %v984
        %v1325 = vpack.c.b16 %v989, %v985
        %v1326 = vpack.c.b16 %v990, %v986
        %v1327 = vpack.c.b16 %v991, %v987
        %v1328 = vpack.c.b16 %v996, %v992
        %v1329 = vpack.c.b16 %v997, %v993
        %v1330 = vpack.c.b16 %v998, %v994
        %v1331 = vpack.c.b16 %v999, %v995
        %v1332 = vpack.c.b16 %v1004, %v1000
        %v1333 = vpack.c.b16 %v1005, %v1001
        %v1334 = vpack.c.b16 %v1006, %v1002
        %v1335 = vpack.c.b16 %v1007, %v1003
        %v1336 = vpack.c.b16 %v1012, %v1008
        %v1337 = vpack.c.b16 %v1013, %v1009
        %v1338 = vpack.c.b16 %v1014, %v1010
        %v1339 = vpack.c.b16 %v1015, %v1011
        %v1340 = vpack.c.b16 %v1020, %v1016
        %v1341 = vpack.c.b16 %v1021, %v1017
        %v1342 = vpack.c.b16 %v1022, %v1018
        %v1343 = vpack.c.b16 %v1023, %v1019
        %v1344 = vpack.c.b16 %v1028, %v1024
        %v1345 = vpack.c.b16 %v1029, %v1025
        %v1346 = vpack.c.b16 %v1030, %v1026
        %v1347 = vpack.c.b16 %v1031, %v1027
        %v1348 = vpack.c.b16 %v1036, %v1032
        %v1349 = vpack.c.b16 %v1037, %v1033
        %v1350 = vpack.c.b16 %v1038, %v1034
        %v1351 = vpack.c.b16 %v1039, %v1035
        %v1352 = vpack.c.b16 %v1044, %v1040
        %v1353 = vpack.c.b16 %v1045, %v1041
        %v1354 = vpack.c.b16 %v1046, %v1042
        %v1355 = vpack.c.b16 %v1047, %v1043
        %v1356 = vpack.c.b16 %v1052, %v1048
        %v1357 = vpack.c.b16 %v1053, %v1049
        %v1358 = vpack.c.b16 %v1054, %v1050
        %v1359 = vpack.c.b16 %v1055, %v1051
        %v1360 = vpack.c.b16 %v1060, %v1056
        %v1361 = vpack.c.b16 %v1061, %v1057
        %v1362 = vpack.c.b16 %v1062, %v1058
        %v1363 = vpack.c.b16 %v1063, %v1059
        %v1364 = vpack.c.b16 %v1068, %v1064
        %v1365 = vpack.c.b16 %v1069, %v1065
        %v1366 = vpack.c.b16 %v1070, %v1066
        %v1367 = vpack.c.b16 %v1071, %v1067
        %v1368 = vpack.c.b16 %v1076, %v1072
        %v1369 = vpack.c.b16 %v1077, %v1073
        %v1370 = vpack.c.b16 %v1078, %v1074
        %v1371 = vpack.c.b16 %v1079, %v1075
        %v1372 = vpack.c.b16 %v1084, %v1080
        %v1373 = vpack.c.b16 %v1085, %v1081
        %v1374 = vpack.c.b16 %v1086, %v1082
        %v1375 = vpack.c.b16 %v1087, %v1083
        %v1376 = vpack.c.b16 %v1092, %v1088
        %v1377 = vpack.c.b16 %v1093, %v1089
        %v1378 = vpack.c.b16 %v1094, %v1090
        %v1379 = vpack.c.b16 %v1095, %v1091
        %v1380 = vpack.c.b16 %v1100, %v1096
        %v1381 = vpack.c.b16 %v1101, %v1097
        %v1382 = vpack.c.b16 %v1102, %v1098
        %v1383 = vpack.c.b16 %v1103, %v1099
        %v1384 = vpack.c.b16 %v1108, %v1104
        %v1385 = vpack.c.b16 %v1109, %v1105
        %v1386 = vpack.c.b16 %v1110, %v1106
        %v1387 = vpack.c.b16 %v1111, %v1107
        %v1388 = vpack.c.b16 %v1116, %v1112
        %v1389 = vpack.c.b16 %v1117, %v1113
        %v1390 = vpack.c.b16 %v1118, %v1114
        %v1391 = vpack.c.b16 %v1119, %v1115
        %v1392 = vpack.c.b16 %v1124, %v1120
        %v1393 = vpack.c.b16 %v1125, %v1121
        %v1394 = vpack.c.b16 %v1126, %v1122
        %v1395 = vpack.c.b16 %v1127, %v1123
        %v1396 = vpack.c.b16 %v1132, %v1128
        %v1397 = vpack.c.b16 %v1133, %v1129
        %v1398 = vpack.c.b16 %v1134, %v1130
        %v1399 = vpack.c.b16 %v1135, %v1131
        %v1400 = vpack.c.b16 %v1140, %v1136
        %v1401 = vpack.c.b16 %v1141, %v1137
        %v1402 = vpack.c.b16 %v1142, %v1138
        %v1403 = vpack.c.b16 %v1143, %v1139
        %v1404 = vpack.c.b16 %v1148, %v1144
        %v1405 = vpack.c.b16 %v1149, %v1145
        %v1406 = vpack.c.b16 %v1150, %v1146
        %v1407 = vpack.c.b16 %v1151, %v1147
        %v1408 = vpack.c.b16 %v1156, %v1152
        %v1409 = vpack.c.b16 %v1157, %v1153
        %v1410 = vpack.c.b16 %v1158, %v1154
        %v1411 = vpack.c.b16 %v1159, %v1155
        %v1412 = vpack.c.b16 %v1164, %v1160
        %v1413 = vpack.c.b16 %v1165, %v1161
        %v1414 = vpack.c.b16 %v1166, %v1162
        %v1415 = vpack.c.b16 %v1167, %v1163
        %v1416 = vpack.c.b16 %v1172, %v1168
        %v1417 = vpack.c.b16 %v1173, %v1169
        %v1418 = vpack.c.b16 %v1174, %v1170
        %v1419 = vpack.c.b16 %v1175, %v1171
        %v1420 = vpack.c.b16 %v1180, %v1176
        %v1421 = vpack.c.b16 %v1181, %v1177
        %v1422 = vpack.c.b16 %v1182, %v1178
        %v1423 = vpack.c.b16 %v1183, %v1179
        %v1424 = vpack.c.b16 %v1188, %v1184
        %v1425 = vpack.c.b16 %v1189, %v1185
        %v1426 = vpack.c.b16 %v1190, %v1186
        %v1427 = vpack.c.b16 %v1191, %v1187
        %v1428 = vpack.c.b16 %v1196, %v1192
        %v1429 = vpack.c.b16 %v1197, %v1193
        %v1430 = vpack.c.b16 %v1198, %v1194
        %v1431 = vpack.c.b16 %v1199, %v1195
        %v1432 = vpack.c.b16 %v1204, %v1200
        %v1433 = vpack.c.b16 %v1205, %v1201
        %v1434 = vpack.c.b16 %v1206, %v1202
        %v1435 = vpack.c.b16 %v1207, %v1203
        %v1436 = vpack.c.b16 %v1212, %v1208
        %v1437 = vpack.c.b16 %v1213, %v1209
        %v1438 = vpack.c.b16 %v1214, %v1210
        %v1439 = vpack.c.b16 %v1215, %v1211
        %v1440 = vpack.c.b16 %v1220, %v1216
        %v1441 = vpack.c.b16 %v1221, %v1217
        %v1442 = vpack.c.b16 %v1222, %v1218
        %v1443 = vpack.c.b16 %v1223, %v1219
        %v1444 = vpack.c.b16 %v1228, %v1224
        %v1445 = vpack.c.b16 %v1229, %v1225
        %v1446 = vpack.c.b16 %v1230, %v1226
        %v1447 = vpack.c.b16 %v1231, %v1227
        %v1448 = vpack.c.b16 %v1236, %v1232
        %v1449 = vpack.c.b16 %v1237, %v1233
        %v1450 = vpack.c.b16 %v1238, %v1234
        %v1451 = vpack.c.b16 %v1239, %v1235
        %v1452 = vpack.c.b16 %v1244, %v1240
        %v1453 = vpack.c.b16 %v1245, %v1241
        %v1454 = vpack.c.b16 %v1246, %v1242
        %v1455 = vpack.c.b16 %v1247, %v1243
        %v1456 = vpack.c.b16 %v1252, %v1248
        %v1457 = vpack.c.b16 %v1253, %v1249
        %v1458 = vpack.c.b16 %v1254, %v1250
        %v1459 = vpack.c.b16 %v1255, %v1251
        %v1460 = vpack.c.b16 %v1260, %v1256
        %v1461 = vpack.c.b16 %v1261, %v1257
        %v1462 = vpack.c.b16 %v1262, %v1258
        %v1463 = vpack.c.b16 %v1263, %v1259
        %v1464 = vpack.c.b16 %v1268, %v1264
        %v1465 = vpack.c.b16 %v1269, %v1265
        %v1466 = vpack.c.b16 %v1270, %v1266
        %v1467 = vpack.c.b16 %v1271, %v1267
        %vm1664 = vcmask 130048
        %v1666 = vsel %vm1664, %v683, 0
        %1668 = vmatprep.subr.bf16.mxu0 %v1301
        %1669 = vmatpush1.bf16.msra.mxu0 %v1300
        %1670 = vmatprep.subr.bf16.mxu0 %v1297
        %1671 = vmatpush1.bf16.msra.mxu0 %v1296
        %1672 = vmatprep.subr.bf16.mxu0 %v1293
        %1673 = vmatpush1.bf16.msra.mxu0 %v1292
        %1674 = vmatprep.subr.bf16.mxu0 %v1289
        %1675 = vmatpush1.bf16.msra.mxu0 %v1288
        %1676 = vmatprep.subr.bf16.mxu0 %v1285
        %1677 = vmatpush1.bf16.msra.mxu0 %v1284
        %1678 = vmatprep.subr.bf16.mxu0 %v1281
        %1679 = vmatpush1.bf16.msra.mxu0 %v1280
        %1680 = vmatprep.subr.bf16.mxu0 %v1277
        %1681 = vmatpush1.bf16.msra.mxu0 %v1276
        %1682 = vmatprep.subr.bf16.mxu0 %v1273
        %1683 = vmatpush1.bf16.msra.mxu0 %v1272
        %1684 = vmatprep.subr.bf16.mxu0 %v1333
        %1685 = vmatpush2.bf16.msra.mxu0 %v1332
        %1686 = vmatprep.subr.bf16.mxu0 %v1329
        %1687 = vmatpush2.bf16.msra.mxu0 %v1328
        %1688 = vmatprep.subr.bf16.mxu0 %v1325
        %1689 = vmatpush2.bf16.msra.mxu0 %v1324
        %1690 = vmatprep.subr.bf16.mxu0 %v1321
        %1691 = vmatpush2.bf16.msra.mxu0 %v1320
        %1692 = vmatprep.subr.bf16.mxu0 %v1317
        %1693 = vmatpush2.bf16.msra.mxu0 %v1316
        %1694 = vmatprep.subr.bf16.mxu0 %v1313
        %1695 = vmatpush2.bf16.msra.mxu0 %v1312
        %1696 = vmatprep.subr.bf16.mxu0 %v1309
        %1697 = vmatpush2.bf16.msra.mxu0 %v1308
        %1698 = vmatprep.subr.bf16.mxu0 %v1305
        %1699 = vmatpush2.bf16.msra.mxu0 %v1304
        %1700 = vmatprep.mubr.bf16.mxu0 %v678
        %1701 = vmatmul.mubr.bf16.gmra.mxu0 %v677
        %v1702 = vpop.f32.mrf.mxu0
        %v1703 = vadd.f32 %v465, %v1702
        %v1704 = vpop.f32.mrf.mxu0
        %v1705 = vadd.f32 %v466, %v1704
        %v1706 = vpop.f32.mrf.mxu0
        %v1707 = vpop.f32.mrf.mxu0
        %1708 = vdwg.mxu0
        %1709 = vmatprep.subr.bf16.mxu0 %v1365
        %1710 = vmatpush1.bf16.msra.mxu0 %v1364
        %1711 = vmatprep.subr.bf16.mxu0 %v1361
        %1712 = vmatpush1.bf16.msra.mxu0 %v1360
        %1713 = vmatprep.subr.bf16.mxu0 %v1357
        %1714 = vmatpush1.bf16.msra.mxu0 %v1356
        %1715 = vmatprep.subr.bf16.mxu0 %v1353
        %1716 = vmatpush1.bf16.msra.mxu0 %v1352
        %1717 = vmatprep.subr.bf16.mxu0 %v1349
        %1718 = vmatpush1.bf16.msra.mxu0 %v1348
        %1719 = vmatprep.subr.bf16.mxu0 %v1345
        %1720 = vmatpush1.bf16.msra.mxu0 %v1344
        %1721 = vmatprep.subr.bf16.mxu0 %v1341
        %1722 = vmatpush1.bf16.msra.mxu0 %v1340
        %1723 = vmatprep.subr.bf16.mxu0 %v1337
        %1724 = vmatpush1.bf16.msra.mxu0 %v1336
        %1725 = vmatprep.subr.bf16.mxu0 %v1397
        %1726 = vmatpush2.bf16.msra.mxu0 %v1396
        %1727 = vmatprep.subr.bf16.mxu0 %v1393
        %1728 = vmatpush2.bf16.msra.mxu0 %v1392
        %1729 = vmatprep.subr.bf16.mxu0 %v1389
        %1730 = vmatpush2.bf16.msra.mxu0 %v1388
        %1731 = vmatprep.subr.bf16.mxu0 %v1385
        %1732 = vmatpush2.bf16.msra.mxu0 %v1384
        %1733 = vmatprep.subr.bf16.mxu0 %v1381
        %1734 = vmatpush2.bf16.msra.mxu0 %v1380
        %1735 = vmatprep.subr.bf16.mxu0 %v1377
        %1736 = vmatpush2.bf16.msra.mxu0 %v1376
        %1737 = vmatprep.subr.bf16.mxu0 %v1373
        %1738 = vmatpush2.bf16.msra.mxu0 %v1372
        %1739 = vmatprep.subr.bf16.mxu0 %v1369
        %1740 = vmatpush2.bf16.msra.mxu0 %v1368
        %1741 = vmatprep.mubr.bf16.mxu0 %v680
        %1742 = vmatmul.mubr.bf16.gmra.mxu0 %v679
        %v1743 = vpop.f32.mrf.mxu0
        %v1744 = vadd.f32 %v1703, %v1743
        %v1745 = vpop.f32.mrf.mxu0
        %v1746 = vadd.f32 %v1705, %v1745
        %v1747 = vpop.f32.mrf.mxu0
        %v1748 = vpop.f32.mrf.mxu0
        %1749 = vdwg.mxu0
        %1750 = vmatprep.subr.bf16.mxu0 %v1429
        %1751 = vmatpush1.bf16.msra.mxu0 %v1428
        %1752 = vmatprep.subr.bf16.mxu0 %v1425
        %1753 = vmatpush1.bf16.msra.mxu0 %v1424
        %1754 = vmatprep.subr.bf16.mxu0 %v1421
        %1755 = vmatpush1.bf16.msra.mxu0 %v1420
        %1756 = vmatprep.subr.bf16.mxu0 %v1417
        %1757 = vmatpush1.bf16.msra.mxu0 %v1416
        %1758 = vmatprep.subr.bf16.mxu0 %v1413
        %1759 = vmatpush1.bf16.msra.mxu0 %v1412
        %1760 = vmatprep.subr.bf16.mxu0 %v1409
        %1761 = vmatpush1.bf16.msra.mxu0 %v1408
        %1762 = vmatprep.subr.bf16.mxu0 %v1405
        %1763 = vmatpush1.bf16.msra.mxu0 %v1404
        %1764 = vmatprep.subr.bf16.mxu0 %v1401
        %1765 = vmatpush1.bf16.msra.mxu0 %v1400
        %1766 = vmatprep.subr.bf16.mxu0 %v1461
        %1767 = vmatpush2.bf16.msra.mxu0 %v1460
        %1768 = vmatprep.subr.bf16.mxu0 %v1457
        %1769 = vmatpush2.bf16.msra.mxu0 %v1456
        %1770 = vmatprep.subr.bf16.mxu0 %v1453
        %1771 = vmatpush2.bf16.msra.mxu0 %v1452
        %1772 = vmatprep.subr.bf16.mxu0 %v1449
        %1773 = vmatpush2.bf16.msra.mxu0 %v1448
        %1774 = vmatprep.subr.bf16.mxu0 %v1445
        %1775 = vmatpush2.bf16.msra.mxu0 %v1444
        %1776 = vmatprep.subr.bf16.mxu0 %v1441
        %1777 = vmatpush2.bf16.msra.mxu0 %v1440
        %1778 = vmatprep.subr.bf16.mxu0 %v1437
        %1779 = vmatpush2.bf16.msra.mxu0 %v1436
        %1780 = vmatprep.subr.bf16.mxu0 %v1433
        %1781 = vmatpush2.bf16.msra.mxu0 %v1432
        %1782 = vmatprep.mubr.bf16.mxu0 %v682
        %1783 = vmatmul.mubr.bf16.gmra.mxu0 %v681
        %v1784 = vpop.f32.mrf.mxu0
        %v1785 = vadd.f32 %v1744, %v1784
        %v1786 = vpop.f32.mrf.mxu0
        %v1787 = vadd.f32 %v1746, %v1786
        %v1788 = vpop.f32.mrf.mxu0
        %v1789 = vpop.f32.mrf.mxu0
        %1790 = vdwg.mxu0
        %1791 = vmatprep.subr.bf16.mxu0 0
        %1792 = vmatpush1.bf16.msra.mxu0 0
        %1793 = vmatprep.subr.bf16.mxu0 0
        %1794 = vmatpush1.bf16.msra.mxu0 0
        %1795 = vmatprep.subr.bf16.mxu0 0
        %1796 = vmatpush1.bf16.msra.mxu0 0
        %1797 = vmatprep.subr.bf16.mxu0 0
        %1798 = vmatpush1.bf16.msra.mxu0 0
        %1799 = vmatprep.subr.bf16.mxu0 0
        %1800 = vmatpush1.bf16.msra.mxu0 0
        %1801 = vmatprep.subr.bf16.mxu0 0
        %1802 = vmatpush1.bf16.msra.mxu0 0
        %1803 = vmatprep.subr.bf16.mxu0 0
        %1804 = vmatpush1.bf16.msra.mxu0 0
        %1805 = vmatprep.subr.bf16.mxu0 %v1465
        %1806 = vmatpush1.bf16.msra.mxu0 %v1464
        %1807 = vmatprep.subr.bf16.mxu0 0
        %1808 = vmatpush2.bf16.msra.mxu0 0
        %1809 = vmatprep.subr.bf16.mxu0 0
        %1810 = vmatpush2.bf16.msra.mxu0 0
        %1811 = vmatprep.subr.bf16.mxu0 0
        %1812 = vmatpush2.bf16.msra.mxu0 0
        %1813 = vmatprep.subr.bf16.mxu0 0
        %1814 = vmatpush2.bf16.msra.mxu0 0
        %1815 = vmatprep.subr.bf16.mxu0 0
        %1816 = vmatpush2.bf16.msra.mxu0 0
        %1817 = vmatprep.subr.bf16.mxu0 0
        %1818 = vmatpush2.bf16.msra.mxu0 0
        %1819 = vmatprep.subr.bf16.mxu0 0
        %1820 = vmatpush2.bf16.msra.mxu0 0
        %1821 = vmatprep.subr.bf16.mxu0 0
        %1822 = vmatpush2.bf16.msra.mxu0 0
        %1823 = vmatprep.mubr.bf16.mxu0 0
        %1824 = vmatmul.mubr.bf16.gmra.mxu0 %v1666
        %v1825 = vpop.f32.mrf.mxu0
        %v1826 = vadd.f32 %v1785, %v1825
        %v1827 = vpop.f32.mrf.mxu0
        %v1828 = vadd.f32 %v1787, %v1827
        %v1829 = vpop.f32.mrf.mxu0
        %v1830 = vpop.f32.mrf.mxu0
        %1831 = vdwg.mxu0
        %1832 = vmatprep.subr.bf16.mxu0 %v1303
        %1833 = vmatpush1.bf16.msra.mxu0 %v1302
        %1834 = vmatprep.subr.bf16.mxu0 %v1299
        %1835 = vmatpush1.bf16.msra.mxu0 %v1298
        %1836 = vmatprep.subr.bf16.mxu0 %v1295
        %1837 = vmatpush1.bf16.msra.mxu0 %v1294
        %1838 = vmatprep.subr.bf16.mxu0 %v1291
        %1839 = vmatpush1.bf16.msra.mxu0 %v1290
        %1840 = vmatprep.subr.bf16.mxu0 %v1287
        %1841 = vmatpush1.bf16.msra.mxu0 %v1286
        %1842 = vmatprep.subr.bf16.mxu0 %v1283
        %1843 = vmatpush1.bf16.msra.mxu0 %v1282
        %1844 = vmatprep.subr.bf16.mxu0 %v1279
        %1845 = vmatpush1.bf16.msra.mxu0 %v1278
        %1846 = vmatprep.subr.bf16.mxu0 %v1275
        %1847 = vmatpush1.bf16.msra.mxu0 %v1274
        %1848 = vmatprep.subr.bf16.mxu0 %v1335
        %1849 = vmatpush2.bf16.msra.mxu0 %v1334
        %1850 = vmatprep.subr.bf16.mxu0 %v1331
        %1851 = vmatpush2.bf16.msra.mxu0 %v1330
        %1852 = vmatprep.subr.bf16.mxu0 %v1327
        %1853 = vmatpush2.bf16.msra.mxu0 %v1326
        %1854 = vmatprep.subr.bf16.mxu0 %v1323
        %1855 = vmatpush2.bf16.msra.mxu0 %v1322
        %1856 = vmatprep.subr.bf16.mxu0 %v1319
        %1857 = vmatpush2.bf16.msra.mxu0 %v1318
        %1858 = vmatprep.subr.bf16.mxu0 %v1315
        %1859 = vmatpush2.bf16.msra.mxu0 %v1314
        %1860 = vmatprep.subr.bf16.mxu0 %v1311
        %1861 = vmatpush2.bf16.msra.mxu0 %v1310
        %1862 = vmatprep.subr.bf16.mxu0 %v1307
        %1863 = vmatpush2.bf16.msra.mxu0 %v1306
        %1864 = vmatprep.mubr.bf16.mxu0 %v678
        %1865 = vmatmul.mubr.bf16.gmra.mxu0 %v677
        %v1866 = vpop.f32.mrf.mxu0
        %v1867 = vadd.f32 %v467, %v1866
        %v1868 = vpop.f32.mrf.mxu0
        %v1869 = vadd.f32 %v468, %v1868
        %v1870 = vpop.f32.mrf.mxu0
        %v1871 = vpop.f32.mrf.mxu0
        %1872 = vdwg.mxu0
        %1873 = vmatprep.subr.bf16.mxu0 %v1367
        %1874 = vmatpush1.bf16.msra.mxu0 %v1366
        %1875 = vmatprep.subr.bf16.mxu0 %v1363
        %1876 = vmatpush1.bf16.msra.mxu0 %v1362
        %1877 = vmatprep.subr.bf16.mxu0 %v1359
        %1878 = vmatpush1.bf16.msra.mxu0 %v1358
        %1879 = vmatprep.subr.bf16.mxu0 %v1355
        %1880 = vmatpush1.bf16.msra.mxu0 %v1354
        %1881 = vmatprep.subr.bf16.mxu0 %v1351
        %1882 = vmatpush1.bf16.msra.mxu0 %v1350
        %1883 = vmatprep.subr.bf16.mxu0 %v1347
        %1884 = vmatpush1.bf16.msra.mxu0 %v1346
        %1885 = vmatprep.subr.bf16.mxu0 %v1343
        %1886 = vmatpush1.bf16.msra.mxu0 %v1342
        %1887 = vmatprep.subr.bf16.mxu0 %v1339
        %1888 = vmatpush1.bf16.msra.mxu0 %v1338
        %1889 = vmatprep.subr.bf16.mxu0 %v1399
        %1890 = vmatpush2.bf16.msra.mxu0 %v1398
        %1891 = vmatprep.subr.bf16.mxu0 %v1395
        %1892 = vmatpush2.bf16.msra.mxu0 %v1394
        %1893 = vmatprep.subr.bf16.mxu0 %v1391
        %1894 = vmatpush2.bf16.msra.mxu0 %v1390
        %1895 = vmatprep.subr.bf16.mxu0 %v1387
        %1896 = vmatpush2.bf16.msra.mxu0 %v1386
        %1897 = vmatprep.subr.bf16.mxu0 %v1383
        %1898 = vmatpush2.bf16.msra.mxu0 %v1382
        %1899 = vmatprep.subr.bf16.mxu0 %v1379
        %1900 = vmatpush2.bf16.msra.mxu0 %v1378
        %1901 = vmatprep.subr.bf16.mxu0 %v1375
        %1902 = vmatpush2.bf16.msra.mxu0 %v1374
        %1903 = vmatprep.subr.bf16.mxu0 %v1371
        %1904 = vmatpush2.bf16.msra.mxu0 %v1370
        %1905 = vmatprep.mubr.bf16.mxu0 %v680
        %1906 = vmatmul.mubr.bf16.gmra.mxu0 %v679
        %v1907 = vpop.f32.mrf.mxu0
        %v1908 = vadd.f32 %v1867, %v1907
        %v1909 = vpop.f32.mrf.mxu0
        %v1910 = vadd.f32 %v1869, %v1909
        %v1911 = vpop.f32.mrf.mxu0
        %v1912 = vpop.f32.mrf.mxu0
        %1913 = vdwg.mxu0
        %1914 = vmatprep.subr.bf16.mxu0 %v1431
        %1915 = vmatpush1.bf16.msra.mxu0 %v1430
        %1916 = vmatprep.subr.bf16.mxu0 %v1427
        %1917 = vmatpush1.bf16.msra.mxu0 %v1426
        %1918 = vmatprep.subr.bf16.mxu0 %v1423
        %1919 = vmatpush1.bf16.msra.mxu0 %v1422
        %1920 = vmatprep.subr.bf16.mxu0 %v1419
        %1921 = vmatpush1.bf16.msra.mxu0 %v1418
        %1922 = vmatprep.subr.bf16.mxu0 %v1415
        %1923 = vmatpush1.bf16.msra.mxu0 %v1414
        %1924 = vmatprep.subr.bf16.mxu0 %v1411
        %1925 = vmatpush1.bf16.msra.mxu0 %v1410
        %1926 = vmatprep.subr.bf16.mxu0 %v1407
        %1927 = vmatpush1.bf16.msra.mxu0 %v1406
        %1928 = vmatprep.subr.bf16.mxu0 %v1403
        %1929 = vmatpush1.bf16.msra.mxu0 %v1402
        %1930 = vmatprep.subr.bf16.mxu0 %v1463
        %1931 = vmatpush2.bf16.msra.mxu0 %v1462
        %1932 = vmatprep.subr.bf16.mxu0 %v1459
        %1933 = vmatpush2.bf16.msra.mxu0 %v1458
        %1934 = vmatprep.subr.bf16.mxu0 %v1455
        %1935 = vmatpush2.bf16.msra.mxu0 %v1454
        %1936 = vmatprep.subr.bf16.mxu0 %v1451
        %1937 = vmatpush2.bf16.msra.mxu0 %v1450
        %1938 = vmatprep.subr.bf16.mxu0 %v1447
        %1939 = vmatpush2.bf16.msra.mxu0 %v1446
        %1940 = vmatprep.subr.bf16.mxu0 %v1443
        %1941 = vmatpush2.bf16.msra.mxu0 %v1442
        %1942 = vmatprep.subr.bf16.mxu0 %v1439
        %1943 = vmatpush2.bf16.msra.mxu0 %v1438
        %1944 = vmatprep.subr.bf16.mxu0 %v1435
        %1945 = vmatpush2.bf16.msra.mxu0 %v1434
        %1946 = vmatprep.mubr.bf16.mxu0 %v682
        %1947 = vmatmul.mubr.bf16.gmra.mxu0 %v681
        %v1948 = vpop.f32.mrf.mxu0
        %v1949 = vadd.f32 %v1908, %v1948
        %v1950 = vpop.f32.mrf.mxu0
        %v1951 = vadd.f32 %v1910, %v1950
        %v1952 = vpop.f32.mrf.mxu0
        %v1953 = vpop.f32.mrf.mxu0
        %1954 = vdwg.mxu0
        %1955 = vmatprep.subr.bf16.mxu0 0
        %1956 = vmatpush1.bf16.msra.mxu0 0
        %1957 = vmatprep.subr.bf16.mxu0 0
        %1958 = vmatpush1.bf16.msra.mxu0 0
        %1959 = vmatprep.subr.bf16.mxu0 0
        %1960 = vmatpush1.bf16.msra.mxu0 0
        %1961 = vmatprep.subr.bf16.mxu0 0
        %1962 = vmatpush1.bf16.msra.mxu0 0
        %1963 = vmatprep.subr.bf16.mxu0 0
        %1964 = vmatpush1.bf16.msra.mxu0 0
        %1965 = vmatprep.subr.bf16.mxu0 0
        %1966 = vmatpush1.bf16.msra.mxu0 0
        %1967 = vmatprep.subr.bf16.mxu0 0
        %1968 = vmatpush1.bf16.msra.mxu0 0
        %1969 = vmatprep.subr.bf16.mxu0 %v1467
        %1970 = vmatpush1.bf16.msra.mxu0 %v1466
        %1971 = vmatprep.subr.bf16.mxu0 0
        %1972 = vmatpush2.bf16.msra.mxu0 0
        %1973 = vmatprep.subr.bf16.mxu0 0
        %1974 = vmatpush2.bf16.msra.mxu0 0
        %1975 = vmatprep.subr.bf16.mxu0 0
        %1976 = vmatpush2.bf16.msra.mxu0 0
        %1977 = vmatprep.subr.bf16.mxu0 0
        %1978 = vmatpush2.bf16.msra.mxu0 0
        %1979 = vmatprep.subr.bf16.mxu0 0
        %1980 = vmatpush2.bf16.msra.mxu0 0
        %1981 = vmatprep.subr.bf16.mxu0 0
        %1982 = vmatpush2.bf16.msra.mxu0 0
        %1983 = vmatprep.subr.bf16.mxu0 0
        %1984 = vmatpush2.bf16.msra.mxu0 0
        %1985 = vmatprep.subr.bf16.mxu0 0
        %1986 = vmatpush2.bf16.msra.mxu0 0
        %1987 = vmatprep.mubr.bf16.mxu0 0
        %1988 = vmatmul.mubr.bf16.gmra.mxu0 %v1666
        %v1989 = vpop.f32.mrf.mxu0
        %v1990 = vadd.f32 %v1949, %v1989
        %v1991 = vpop.f32.mrf.mxu0
        %v1992 = vadd.f32 %v1951, %v1991
        %v1993 = vpop.f32.mrf.mxu0
        %v1994 = vpop.f32.mrf.mxu0
        %1995 = vdwg.mxu0
        %v1996 = vld [vmem:[%s4] sm:$0xf]
        %v1998 = vlaneseq
        %v1999 = vshrl.u32 %v1998, 7
        %v2000 = vsub.s32 0, %v1999
        %v2001 = vrot.slane %v1996, %v2000
        %v2002 = vlaneseq
        %v2003 = vshrl.u32 %v2002, 7
        %v2004 = vsub.s32 1, %v2003
        %v2005 = vrot.slane %v1996, %v2004
        %v2006 = vlaneseq
        %v2007 = vshrl.u32 %v2006, 7
        %v2008 = vsub.s32 2, %v2007
        %v2009 = vrot.slane %v1996, %v2008
        %v2010 = vlaneseq
        %v2011 = vshrl.u32 %v2010, 7
        %v2012 = vsub.s32 3, %v2011
        %v2013 = vrot.slane %v1996, %v2012
        %v2018 = vadd.f32 %v1826, %v2001
        %v2019 = vadd.f32 %v1828, %v2005
        %v2020 = vadd.f32 %v1990, %v2009
        %v2021 = vadd.f32 %v1992, %v2013
        %v2022 = vmax.f32 %v2018, 0.0
        %v2023 = vmax.f32 %v2019, 0.0
        %v2024 = vmax.f32 %v2020, 0.0
        %v2025 = vmax.f32 %v2021, 0.0
        %v2026 = vld [vmem:[%s5] sm:$0xff]
        %v2027 = vld [vmem:[%s5 + $0x8] sm:$0xff]
        %v2028 = vld [vmem:[%s5 + $0x10] sm:$0xff]
        %v2029 = vld [vmem:[%s5 + $0x18] sm:$0xff]
        %v2030 = vld [vmem:[%s5 + $0x20] sm:$0xff]
        %v2031 = vld [vmem:[%s5 + $0x28] sm:$0xff]
        %v2032 = vld [vmem:[%s5 + $0x30] sm:$0xff]
        %v2033 = vld [vmem:[%s5 + $0x38] sm:$0xff]
        %v2034 = vld [vmem:[%s5 + $0x40] sm:$0xff]
        %v2035 = vld [vmem:[%s5 + $0x48] sm:$0xff]
        %v2036 = vld [vmem:[%s5 + $0x50] sm:$0xff]
        %v2037 = vld [vmem:[%s5 + $0x58] sm:$0xff]
        %v2038 = vld [vmem:[%s5 + $0x60] sm:$0xff]
        %v2039 = vld [vmem:[%s5 + $0x68] sm:$0xff]
        %v2040 = vld [vmem:[%s5 + $0x70] sm:$0xff]
        %v2041 = vld [vmem:[%s5 + $0x78] sm:$0xff]
        %v2042 = vld [vmem:[%s5 + $0x80] sm:$0xff]
        %v2043 = vld [vmem:[%s5 + $0x88] sm:$0xff]
        %v2044 = vld [vmem:[%s5 + $0x90] sm:$0xff]
        %v2045 = vld [vmem:[%s5 + $0x98] sm:$0xff]
        %v2046 = vld [vmem:[%s5 + $0xa0] sm:$0xff]
        %v2047 = vld [vmem:[%s5 + $0xa8] sm:$0xff]
        %v2048 = vld [vmem:[%s5 + $0xb0] sm:$0xff]
        %v2049 = vld [vmem:[%s5 + $0xb8] sm:$0xff]
        %v2050 = vld [vmem:[%s5 + $0xc0] sm:$0xff]
        %v2051 = vld [vmem:[%s5 + $0xc8] sm:$0xff]
        %v2052 = vld [vmem:[%s5 + $0xd0] sm:$0xff]
        %v2053 = vld [vmem:[%s5 + $0xd8] sm:$0xff]
        %v2054 = vld [vmem:[%s5 + $0xe0] sm:$0xff]
        %v2055 = vld [vmem:[%s5 + $0xe8] sm:$0xff]
        %v2056 = vld [vmem:[%s5 + $0xf0] sm:$0xff]
        %v2057 = vld [vmem:[%s5 + $0xf8] sm:$0xff]
        %v2058 = vld [vmem:[%s5 + $0x100] sm:$0xff]
        %v2059 = vld [vmem:[%s5 + $0x108] sm:$0xff]
        %v2060 = vld [vmem:[%s5 + $0x110] sm:$0xff]
        %v2061 = vld [vmem:[%s5 + $0x118] sm:$0xff]
        %v2062 = vld [vmem:[%s5 + $0x120] sm:$0xff]
        %v2063 = vld [vmem:[%s5 + $0x128] sm:$0xff]
        %v2064 = vld [vmem:[%s5 + $0x130] sm:$0xff]
        %v2065 = vld [vmem:[%s5 + $0x138] sm:$0xff]
        %v2066 = vld [vmem:[%s5 + $0x140] sm:$0xff]
        %v2067 = vld [vmem:[%s5 + $0x148] sm:$0xff]
        %v2068 = vld [vmem:[%s5 + $0x150] sm:$0xff]
        %v2069 = vld [vmem:[%s5 + $0x158] sm:$0xff]
        %v2070 = vld [vmem:[%s5 + $0x160] sm:$0xff]
        %v2071 = vld [vmem:[%s5 + $0x168] sm:$0xff]
        %v2072 = vld [vmem:[%s5 + $0x170] sm:$0xff]
        %v2073 = vld [vmem:[%s5 + $0x178] sm:$0xff]
        %v2074 = vld [vmem:[%s5 + $0x180] sm:$0xff]
        %v2075 = vld [vmem:[%s5 + $0x188] sm:$0xff]
        %v2076 = vld [vmem:[%s5 + $0x190] sm:$0xff]
        %v2077 = vld [vmem:[%s5 + $0x198] sm:$0xff]
        %v2078 = vld [vmem:[%s5 + $0x1a0] sm:$0xff]
        %v2079 = vld [vmem:[%s5 + $0x1a8] sm:$0xff]
        %v2080 = vld [vmem:[%s5 + $0x1b0] sm:$0xff]
        %v2081 = vld [vmem:[%s5 + $0x1b8] sm:$0xff]
        %v2082 = vld [vmem:[%s5 + $0x1c0] sm:$0xff]
        %v2083 = vld [vmem:[%s5 + $0x1c8] sm:$0xff]
        %v2084 = vld [vmem:[%s5 + $0x1d0] sm:$0xff]
        %v2085 = vld [vmem:[%s5 + $0x1d8] sm:$0xff]
        %v2086 = vld [vmem:[%s5 + $0x1e0] sm:$0xff]
        %v2087 = vld [vmem:[%s5 + $0x1e8] sm:$0xff]
        %v2088 = vld [vmem:[%s5 + $0x1f0] sm:$0xff]
        %v2089 = vld [vmem:[%s5 + $0x1f8] sm:$0xff]
        %v2090 = vld [vmem:[%s5 + $0x200] sm:$0xff]
        %v2091 = vld [vmem:[%s5 + $0x208] sm:$0xff]
        %v2092 = vld [vmem:[%s5 + $0x210] sm:$0xff]
        %v2093 = vld [vmem:[%s5 + $0x218] sm:$0xff]
        %v2094 = vld [vmem:[%s5 + $0x220] sm:$0xff]
        %v2095 = vld [vmem:[%s5 + $0x228] sm:$0xff]
        %v2096 = vld [vmem:[%s5 + $0x230] sm:$0xff]
        %v2097 = vld [vmem:[%s5 + $0x238] sm:$0xff]
        %v2098 = vld [vmem:[%s5 + $0x240] sm:$0xff]
        %v2099 = vld [vmem:[%s5 + $0x248] sm:$0xff]
        %v2100 = vld [vmem:[%s5 + $0x250] sm:$0xff]
        %v2101 = vld [vmem:[%s5 + $0x258] sm:$0xff]
        %v2102 = vld [vmem:[%s5 + $0x260] sm:$0xff]
        %v2103 = vld [vmem:[%s5 + $0x268] sm:$0xff]
        %v2104 = vld [vmem:[%s5 + $0x270] sm:$0xff]
        %v2105 = vld [vmem:[%s5 + $0x278] sm:$0xff]
        %v2106 = vld [vmem:[%s5 + $0x280] sm:$0xff]
        %v2107 = vld [vmem:[%s5 + $0x288] sm:$0xff]
        %v2108 = vld [vmem:[%s5 + $0x290] sm:$0xff]
        %v2109 = vld [vmem:[%s5 + $0x298] sm:$0xff]
        %v2110 = vld [vmem:[%s5 + $0x2a0] sm:$0xff]
        %v2111 = vld [vmem:[%s5 + $0x2a8] sm:$0xff]
        %v2112 = vld [vmem:[%s5 + $0x2b0] sm:$0xff]
        %v2113 = vld [vmem:[%s5 + $0x2b8] sm:$0xff]
        %v2114 = vld [vmem:[%s5 + $0x2c0] sm:$0xff]
        %v2115 = vld [vmem:[%s5 + $0x2c8] sm:$0xff]
        %v2116 = vld [vmem:[%s5 + $0x2d0] sm:$0xff]
        %v2117 = vld [vmem:[%s5 + $0x2d8] sm:$0xff]
        %v2118 = vld [vmem:[%s5 + $0x2e0] sm:$0xff]
        %v2119 = vld [vmem:[%s5 + $0x2e8] sm:$0xff]
        %v2120 = vld [vmem:[%s5 + $0x2f0] sm:$0xff]
        %v2121 = vld [vmem:[%s5 + $0x2f8] sm:$0xff]
        %v2122 = vld [vmem:[%s5 + $0x300] sm:$0xff]
        %v2123 = vld [vmem:[%s5 + $0x308] sm:$0xff]
        %v2124 = vld [vmem:[%s5 + $0x310] sm:$0xff]
        %v2125 = vld [vmem:[%s5 + $0x318] sm:$0xff]
        %v2126 = vld [vmem:[%s5 + $0x320] sm:$0xff]
        %v2127 = vld [vmem:[%s5 + $0x328] sm:$0xff]
        %v2128 = vld [vmem:[%s5 + $0x330] sm:$0xff]
        %v2129 = vld [vmem:[%s5 + $0x338] sm:$0xff]
        %v2130 = vld [vmem:[%s5 + $0x340] sm:$0xff]
        %v2131 = vld [vmem:[%s5 + $0x348] sm:$0xff]
        %v2132 = vld [vmem:[%s5 + $0x350] sm:$0xff]
        %v2133 = vld [vmem:[%s5 + $0x358] sm:$0xff]
        %v2134 = vld [vmem:[%s5 + $0x360] sm:$0xff]
        %v2135 = vld [vmem:[%s5 + $0x368] sm:$0xff]
        %v2136 = vld [vmem:[%s5 + $0x370] sm:$0xff]
        %v2137 = vld [vmem:[%s5 + $0x378] sm:$0xff]
        %v2138 = vld [vmem:[%s5 + $0x380] sm:$0xff]
        %v2139 = vld [vmem:[%s5 + $0x388] sm:$0xff]
        %v2140 = vld [vmem:[%s5 + $0x390] sm:$0xff]
        %v2141 = vld [vmem:[%s5 + $0x398] sm:$0xff]
        %v2142 = vld [vmem:[%s5 + $0x3a0] sm:$0xff]
        %v2143 = vld [vmem:[%s5 + $0x3a8] sm:$0xff]
        %v2144 = vld [vmem:[%s5 + $0x3b0] sm:$0xff]
        %v2145 = vld [vmem:[%s5 + $0x3b8] sm:$0xff]
        %v2146 = vld [vmem:[%s5 + $0x3c0] sm:$0xff]
        %v2147 = vld [vmem:[%s5 + $0x3c8] sm:$0xff]
        %v2148 = vld [vmem:[%s5 + $0x3d0] sm:$0xff]
        %v2149 = vld [vmem:[%s5 + $0x3d8] sm:$0xff]
        %v2150 = vld [vmem:[%s5 + $0x3e0] sm:$0xff]
        %v2151 = vld [vmem:[%s5 + $0x3e8] sm:$0xff]
        %v2152 = vld [vmem:[%s5 + $0x3f0] sm:$0xff]
        %v2153 = vld [vmem:[%s5 + $0x3f8] sm:$0xff]
        %v2154 = vld [vmem:[%s6] sm:$0x3]
        %v2156 = vlaneseq
        %v2157 = vshrl.u32 %v2156, 7
        %v2158 = vsub.s32 0, %v2157
        %v2159 = vrot.slane %v2154, %v2158
        %v2160 = vlaneseq
        %v2161 = vshrl.u32 %v2160, 7
        %v2162 = vsub.s32 1, %v2161
        %v2163 = vrot.slane %v2154, %v2162
        %2166 = vmatprep.subr.mxu0 %v2057
        %2167 = vmatpush1.msra.mxu0 %v2056
        %2168 = vmatprep.subr.mxu0 %v2055
        %2169 = vmatpush1.msra.mxu0 %v2054
        %2170 = vmatprep.subr.mxu0 %v2053
        %2171 = vmatpush1.msra.mxu0 %v2052
        %2172 = vmatprep.subr.mxu0 %v2051
        %2173 = vmatpush1.msra.mxu0 %v2050
        %2174 = vmatprep.subr.mxu0 %v2049
        %2175 = vmatpush1.msra.mxu0 %v2048
        %2176 = vmatprep.subr.mxu0 %v2047
        %2177 = vmatpush1.msra.mxu0 %v2046
        %2178 = vmatprep.subr.mxu0 %v2045
        %2179 = vmatpush1.msra.mxu0 %v2044
        %2180 = vmatprep.subr.mxu0 %v2043
        %2181 = vmatpush1.msra.mxu0 %v2042
        %2182 = vmatprep.subr.mxu0 %v2041
        %2183 = vmatpush1.msra.mxu0 %v2040
        %2184 = vmatprep.subr.mxu0 %v2039
        %2185 = vmatpush1.msra.mxu0 %v2038
        %2186 = vmatprep.subr.mxu0 %v2037
        %2187 = vmatpush1.msra.mxu0 %v2036
        %2188 = vmatprep.subr.mxu0 %v2035
        %2189 = vmatpush1.msra.mxu0 %v2034
        %2190 = vmatprep.subr.mxu0 %v2033
        %2191 = vmatpush1.msra.mxu0 %v2032
        %2192 = vmatprep.subr.mxu0 %v2031
        %2193 = vmatpush1.msra.mxu0 %v2030
        %2194 = vmatprep.subr.mxu0 %v2029
        %2195 = vmatpush1.msra.mxu0 %v2028
        %2196 = vmatprep.subr.mxu0 %v2027
        %2197 = vmatpush1.msra.mxu0 %v2026
        %2198 = vmatprep.subr.mxu0 %v2089
        %2199 = vmatpush2.msra.mxu0 %v2088
        %2200 = vmatprep.subr.mxu0 %v2087
        %2201 = vmatpush2.msra.mxu0 %v2086
        %2202 = vmatprep.subr.mxu0 %v2085
        %2203 = vmatpush2.msra.mxu0 %v2084
        %2204 = vmatprep.subr.mxu0 %v2083
        %2205 = vmatpush2.msra.mxu0 %v2082
        %2206 = vmatprep.subr.mxu0 %v2081
        %2207 = vmatpush2.msra.mxu0 %v2080
        %2208 = vmatprep.subr.mxu0 %v2079
        %2209 = vmatpush2.msra.mxu0 %v2078
        %2210 = vmatprep.subr.mxu0 %v2077
        %2211 = vmatpush2.msra.mxu0 %v2076
        %2212 = vmatprep.subr.mxu0 %v2075
        %2213 = vmatpush2.msra.mxu0 %v2074
        %2214 = vmatprep.subr.mxu0 %v2073
        %2215 = vmatpush2.msra.mxu0 %v2072
        %2216 = vmatprep.subr.mxu0 %v2071
        %2217 = vmatpush2.msra.mxu0 %v2070
        %2218 = vmatprep.subr.mxu0 %v2069
        %2219 = vmatpush2.msra.mxu0 %v2068
        %2220 = vmatprep.subr.mxu0 %v2067
        %2221 = vmatpush2.msra.mxu0 %v2066
        %2222 = vmatprep.subr.mxu0 %v2065
        %2223 = vmatpush2.msra.mxu0 %v2064
        %2224 = vmatprep.subr.mxu0 %v2063
        %2225 = vmatpush2.msra.mxu0 %v2062
        %2226 = vmatprep.subr.mxu0 %v2061
        %2227 = vmatpush2.msra.mxu0 %v2060
        %2228 = vmatprep.subr.mxu0 %v2059
        %2229 = vmatpush2.msra.mxu0 %v2058
        %2230 = vmatprep.mubr.f32.mxu0 %v2023
        %2231 = vmatmul.mubr.f32.gmra.mxu0 %v2022
        %v2232 = vpop.f32.mrf.mxu0
        %v2233 = vadd.f32 %v2159, %v2232
        %v2234 = vpop.f32.mrf.mxu0
        %v2235 = vadd.f32 %v2163, %v2234
        %2236 = vdwg.mxu0
        %2237 = vmatprep.subr.mxu0 %v2121
        %2238 = vmatpush1.msra.mxu0 %v2120
        %2239 = vmatprep.subr.mxu0 %v2119
        %2240 = vmatpush1.msra.mxu0 %v2118
        %2241 = vmatprep.subr.mxu0 %v2117
        %2242 = vmatpush1.msra.mxu0 %v2116
        %2243 = vmatprep.subr.mxu0 %v2115
        %2244 = vmatpush1.msra.mxu0 %v2114
        %2245 = vmatprep.subr.mxu0 %v2113
        %2246 = vmatpush1.msra.mxu0 %v2112
        %2247 = vmatprep.subr.mxu0 %v2111
        %2248 = vmatpush1.msra.mxu0 %v2110
        %2249 = vmatprep.subr.mxu0 %v2109
        %2250 = vmatpush1.msra.mxu0 %v2108
        %2251 = vmatprep.subr.mxu0 %v2107
        %2252 = vmatpush1.msra.mxu0 %v2106
        %2253 = vmatprep.subr.mxu0 %v2105
        %2254 = vmatpush1.msra.mxu0 %v2104
        %2255 = vmatprep.subr.mxu0 %v2103
        %2256 = vmatpush1.msra.mxu0 %v2102
        %2257 = vmatprep.subr.mxu0 %v2101
        %2258 = vmatpush1.msra.mxu0 %v2100
        %2259 = vmatprep.subr.mxu0 %v2099
        %2260 = vmatpush1.msra.mxu0 %v2098
        %2261 = vmatprep.subr.mxu0 %v2097
        %2262 = vmatpush1.msra.mxu0 %v2096
        %2263 = vmatprep.subr.mxu0 %v2095
        %2264 = vmatpush1.msra.mxu0 %v2094
        %2265 = vmatprep.subr.mxu0 %v2093
        %2266 = vmatpush1.msra.mxu0 %v2092
        %2267 = vmatprep.subr.mxu0 %v2091
        %2268 = vmatpush1.msra.mxu0 %v2090
        %2269 = vmatprep.subr.mxu0 %v2153
        %2270 = vmatpush2.msra.mxu0 %v2152
        %2271 = vmatprep.subr.mxu0 %v2151
        %2272 = vmatpush2.msra.mxu0 %v2150
        %2273 = vmatprep.subr.mxu0 %v2149
        %2274 = vmatpush2.msra.mxu0 %v2148
        %2275 = vmatprep.subr.mxu0 %v2147
        %2276 = vmatpush2.msra.mxu0 %v2146
        %2277 = vmatprep.subr.mxu0 %v2145
        %2278 = vmatpush2.msra.mxu0 %v2144
        %2279 = vmatprep.subr.mxu0 %v2143
        %2280 = vmatpush2.msra.mxu0 %v2142
        %2281 = vmatprep.subr.mxu0 %v2141
        %2282 = vmatpush2.msra.mxu0 %v2140
        %2283 = vmatprep.subr.mxu0 %v2139
        %2284 = vmatpush2.msra.mxu0 %v2138
        %2285 = vmatprep.subr.mxu0 %v2137
        %2286 = vmatpush2.msra.mxu0 %v2136
        %2287 = vmatprep.subr.mxu0 %v2135
        %2288 = vmatpush2.msra.mxu0 %v2134
        %2289 = vmatprep.subr.mxu0 %v2133
        %2290 = vmatpush2.msra.mxu0 %v2132
        %2291 = vmatprep.subr.mxu0 %v2131
        %2292 = vmatpush2.msra.mxu0 %v2130
        %2293 = vmatprep.subr.mxu0 %v2129
        %2294 = vmatpush2.msra.mxu0 %v2128
        %2295 = vmatprep.subr.mxu0 %v2127
        %2296 = vmatpush2.msra.mxu0 %v2126
        %2297 = vmatprep.subr.mxu0 %v2125
        %2298 = vmatpush2.msra.mxu0 %v2124
        %2299 = vmatprep.subr.mxu0 %v2123
        %2300 = vmatpush2.msra.mxu0 %v2122
        %2301 = vmatprep.mubr.f32.mxu0 %v2025
        %2302 = vmatmul.mubr.f32.gmra.mxu0 %v2024
        %v2303 = vpop.f32.mrf.mxu0
        %v2304 = vadd.f32 %v2233, %v2303
        %v2305 = vpop.f32.mrf.mxu0
        %v2306 = vadd.f32 %v2235, %v2305
        %2307 = vdwg.mxu0
        %2308 = vst [vmem:[%s445] sm:$0xff] %v2304
        %2309 = vst [vmem:[%s445 + $0x8] sm:$0xff] %v2306
        %v2310 = vmul.f32 %v2306, 0.5
        %v2311 = vmul.f32 %v2310, 1.442695
        %v2312 = vpow.pop %v2311
        %v2313 = vmul.f32 %v480, %v2312
        %v2314 = vadd.f32 %v2304, %v2313
        %v2315 = vpack.c.bf16 %v2314, %v2314
        %v2316 = vld [vmem:[%s7] sm:$0xff]
        %v2317 = vld [vmem:[%s7 + $0x8] sm:$0xff]
        %v2318 = vld [vmem:[%s7 + $0x10] sm:$0xff]
        %v2319 = vld [vmem:[%s7 + $0x18] sm:$0xff]
        %v2320 = vld [vmem:[%s7 + $0x20] sm:$0xff]
        %v2321 = vld [vmem:[%s7 + $0x28] sm:$0xff]
        %v2322 = vld [vmem:[%s7 + $0x30] sm:$0xff]
        %v2323 = vld [vmem:[%s7 + $0x38] sm:$0xff]
        %v2324 = vld [vmem:[%s7 + $0x40] sm:$0xff]
        %v2325 = vld [vmem:[%s7 + $0x48] sm:$0xff]
        %v2326 = vld [vmem:[%s7 + $0x50] sm:$0xff]
        %v2327 = vld [vmem:[%s7 + $0x58] sm:$0xff]
        %v2328 = vld [vmem:[%s7 + $0x60] sm:$0xff]
        %v2329 = vld [vmem:[%s7 + $0x68] sm:$0xff]
        %v2330 = vld [vmem:[%s7 + $0x70] sm:$0xff]
        %v2331 = vld [vmem:[%s7 + $0x78] sm:$0xff]
        %v2332 = vld [vmem:[%s7 + $0x80] sm:$0xff]
        %v2333 = vld [vmem:[%s7 + $0x88] sm:$0xff]
        %v2334 = vld [vmem:[%s7 + $0x90] sm:$0xff]
        %v2335 = vld [vmem:[%s7 + $0x98] sm:$0xff]
        %v2336 = vld [vmem:[%s7 + $0xa0] sm:$0xff]
        %v2337 = vld [vmem:[%s7 + $0xa8] sm:$0xff]
        %v2338 = vld [vmem:[%s7 + $0xb0] sm:$0xff]
        %v2339 = vld [vmem:[%s7 + $0xb8] sm:$0xff]
        %v2340 = vld [vmem:[%s7 + $0xc0] sm:$0xff]
        %v2341 = vld [vmem:[%s7 + $0xc8] sm:$0xff]
        %v2342 = vld [vmem:[%s7 + $0xd0] sm:$0xff]
        %v2343 = vld [vmem:[%s7 + $0xd8] sm:$0xff]
        %v2344 = vld [vmem:[%s7 + $0xe0] sm:$0xff]
        %v2345 = vld [vmem:[%s7 + $0xe8] sm:$0xff]
        %v2346 = vld [vmem:[%s7 + $0xf0] sm:$0xff]
        %v2347 = vld [vmem:[%s7 + $0xf8] sm:$0xff]
        %v2380 = vunpack.c.l.b16 %v2316
        %v2381 = vunpack.c.h.b16 %v2316
        %v2382 = vunpack.c.l.b16 %v2317
        %v2383 = vunpack.c.h.b16 %v2317
        %v2384 = vunpack.c.l.b16 %v2318
        %v2385 = vunpack.c.h.b16 %v2318
        %v2386 = vunpack.c.l.b16 %v2319
        %v2387 = vunpack.c.h.b16 %v2319
        %v2388 = vunpack.c.l.b16 %v2320
        %v2389 = vunpack.c.h.b16 %v2320
        %v2390 = vunpack.c.l.b16 %v2321
        %v2391 = vunpack.c.h.b16 %v2321
        %v2392 = vunpack.c.l.b16 %v2322
        %v2393 = vunpack.c.h.b16 %v2322
        %v2394 = vunpack.c.l.b16 %v2323
        %v2395 = vunpack.c.h.b16 %v2323
        %v2396 = vunpack.c.l.b16 %v2324
        %v2397 = vunpack.c.h.b16 %v2324
        %v2398 = vunpack.c.l.b16 %v2325
        %v2399 = vunpack.c.h.b16 %v2325
        %v2400 = vunpack.c.l.b16 %v2326
        %v2401 = vunpack.c.h.b16 %v2326
        %v2402 = vunpack.c.l.b16 %v2327
        %v2403 = vunpack.c.h.b16 %v2327
        %v2404 = vunpack.c.l.b16 %v2328
        %v2405 = vunpack.c.h.b16 %v2328
        %v2406 = vunpack.c.l.b16 %v2329
        %v2407 = vunpack.c.h.b16 %v2329
        %v2408 = vunpack.c.l.b16 %v2330
        %v2409 = vunpack.c.h.b16 %v2330
        %v2410 = vunpack.c.l.b16 %v2331
        %v2411 = vunpack.c.h.b16 %v2331
        %v2412 = vunpack.c.l.b16 %v2332
        %v2413 = vunpack.c.h.b16 %v2332
        %v2414 = vunpack.c.l.b16 %v2333
        %v2415 = vunpack.c.h.b16 %v2333
        %v2416 = vunpack.c.l.b16 %v2334
        %v2417 = vunpack.c.h.b16 %v2334
        %v2418 = vunpack.c.l.b16 %v2335
        %v2419 = vunpack.c.h.b16 %v2335
        %v2420 = vunpack.c.l.b16 %v2336
        %v2421 = vunpack.c.h.b16 %v2336
        %v2422 = vunpack.c.l.b16 %v2337
        %v2423 = vunpack.c.h.b16 %v2337
        %v2424 = vunpack.c.l.b16 %v2338
        %v2425 = vunpack.c.h.b16 %v2338
        %v2426 = vunpack.c.l.b16 %v2339
        %v2427 = vunpack.c.h.b16 %v2339
        %v2428 = vunpack.c.l.b16 %v2340
        %v2429 = vunpack.c.h.b16 %v2340
        %v2430 = vunpack.c.l.b16 %v2341
        %v2431 = vunpack.c.h.b16 %v2341
        %v2432 = vunpack.c.l.b16 %v2342
        %v2433 = vunpack.c.h.b16 %v2342
        %v2434 = vunpack.c.l.b16 %v2343
        %v2435 = vunpack.c.h.b16 %v2343
        %v2436 = vunpack.c.l.b16 %v2344
        %v2437 = vunpack.c.h.b16 %v2344
        %v2438 = vunpack.c.l.b16 %v2345
        %v2439 = vunpack.c.h.b16 %v2345
        %v2440 = vunpack.c.l.b16 %v2346
        %v2441 = vunpack.c.h.b16 %v2346
        %v2442 = vunpack.c.l.b16 %v2347
        %v2443 = vunpack.c.h.b16 %v2347
        %v2444 = vpack.c.b16 %v2384, %v2380
        %v2445 = vpack.c.b16 %v2385, %v2381
        %v2446 = vpack.c.b16 %v2386, %v2382
        %v2447 = vpack.c.b16 %v2387, %v2383
        %v2448 = vpack.c.b16 %v2392, %v2388
        %v2449 = vpack.c.b16 %v2393, %v2389
        %v2450 = vpack.c.b16 %v2394, %v2390
        %v2451 = vpack.c.b16 %v2395, %v2391
        %v2452 = vpack.c.b16 %v2400, %v2396
        %v2453 = vpack.c.b16 %v2401, %v2397
        %v2454 = vpack.c.b16 %v2402, %v2398
        %v2455 = vpack.c.b16 %v2403, %v2399
        %v2456 = vpack.c.b16 %v2408, %v2404
        %v2457 = vpack.c.b16 %v2409, %v2405
        %v2458 = vpack.c.b16 %v2410, %v2406
        %v2459 = vpack.c.b16 %v2411, %v2407
        %v2460 = vpack.c.b16 %v2416, %v2412
        %v2461 = vpack.c.b16 %v2417, %v2413
        %v2462 = vpack.c.b16 %v2418, %v2414
        %v2463 = vpack.c.b16 %v2419, %v2415
        %v2464 = vpack.c.b16 %v2424, %v2420
        %v2465 = vpack.c.b16 %v2425, %v2421
        %v2466 = vpack.c.b16 %v2426, %v2422
        %v2467 = vpack.c.b16 %v2427, %v2423
        %v2468 = vpack.c.b16 %v2432, %v2428
        %v2469 = vpack.c.b16 %v2433, %v2429
        %v2470 = vpack.c.b16 %v2434, %v2430
        %v2471 = vpack.c.b16 %v2435, %v2431
        %v2472 = vpack.c.b16 %v2440, %v2436
        %v2473 = vpack.c.b16 %v2441, %v2437
        %v2474 = vpack.c.b16 %v2442, %v2438
        %v2475 = vpack.c.b16 %v2443, %v2439
        %2508 = vmatprep.subr.bf16.mxu0 %v2473
        %2509 = vmatpush1.bf16.msra.mxu0 %v2472
        %2510 = vmatprep.subr.bf16.mxu0 %v2469
        %2511 = vmatpush1.bf16.msra.mxu0 %v2468
        %2512 = vmatprep.subr.bf16.mxu0 %v2465
        %2513 = vmatpush1.bf16.msra.mxu0 %v2464
        %2514 = vmatprep.subr.bf16.mxu0 %v2461
        %2515 = vmatpush1.bf16.msra.mxu0 %v2460
        %2516 = vmatprep.subr.bf16.mxu0 %v2457
        %2517 = vmatpush1.bf16.msra.mxu0 %v2456
        %2518 = vmatprep.subr.bf16.mxu0 %v2453
        %2519 = vmatpush1.bf16.msra.mxu0 %v2452
        %2520 = vmatprep.subr.bf16.mxu0 %v2449
        %2521 = vmatpush1.bf16.msra.mxu0 %v2448
        %2522 = vmatprep.subr.bf16.mxu0 %v2445
        %2523 = vmatpush1.bf16.msra.mxu0 %v2444
        %2524 = vmatprep.subr.bf16.mxu0 0
        %2525 = vmatpush2.bf16.msra.mxu0 0
        %2526 = vmatprep.subr.bf16.mxu0 0
        %2527 = vmatpush2.bf16.msra.mxu0 0
        %2528 = vmatprep.subr.bf16.mxu0 0
        %2529 = vmatpush2.bf16.msra.mxu0 0
        %2530 = vmatprep.subr.bf16.mxu0 0
        %2531 = vmatpush2.bf16.msra.mxu0 0
        %2532 = vmatprep.subr.bf16.mxu0 0
        %2533 = vmatpush2.bf16.msra.mxu0 0
        %2534 = vmatprep.subr.bf16.mxu0 0
        %2535 = vmatpush2.bf16.msra.mxu0 0
        %2536 = vmatprep.subr.bf16.mxu0 0
        %2537 = vmatpush2.bf16.msra.mxu0 0
        %2538 = vmatprep.subr.bf16.mxu0 0
        %2539 = vmatpush2.bf16.msra.mxu0 0
        %2540 = vmatprep.mubr.bf16.mxu0 0
        %2541 = vmatmul.mubr.bf16.gmra.mxu0 %v2315
        %v2542 = vpop.f32.mrf.mxu0
        %v2543 = vadd.f32 %v469, %v2542
        %v2544 = vpop.f32.mrf.mxu0
        %v2545 = vadd.f32 %v470, %v2544
        %v2546 = vpop.f32.mrf.mxu0
        %v2547 = vpop.f32.mrf.mxu0
        %2548 = vdwg.mxu0
        %2549 = vmatprep.subr.bf16.mxu0 %v2475
        %2550 = vmatpush1.bf16.msra.mxu0 %v2474
        %2551 = vmatprep.subr.bf16.mxu0 %v2471
        %2552 = vmatpush1.bf16.msra.mxu0 %v2470
        %2553 = vmatprep.subr.bf16.mxu0 %v2467
        %2554 = vmatpush1.bf16.msra.mxu0 %v2466
        %2555 = vmatprep.subr.bf16.mxu0 %v2463
        %2556 = vmatpush1.bf16.msra.mxu0 %v2462
        %2557 = vmatprep.subr.bf16.mxu0 %v2459
        %2558 = vmatpush1.bf16.msra.mxu0 %v2458
        %2559 = vmatprep.subr.bf16.mxu0 %v2455
        %2560 = vmatpush1.bf16.msra.mxu0 %v2454
        %2561 = vmatprep.subr.bf16.mxu0 %v2451
        %2562 = vmatpush1.bf16.msra.mxu0 %v2450
        %2563 = vmatprep.subr.bf16.mxu0 %v2447
        %2564 = vmatpush1.bf16.msra.mxu0 %v2446
        %2565 = vmatprep.subr.bf16.mxu0 0
        %2566 = vmatpush2.bf16.msra.mxu0 0
        %2567 = vmatprep.subr.bf16.mxu0 0
        %2568 = vmatpush2.bf16.msra.mxu0 0
        %2569 = vmatprep.subr.bf16.mxu0 0
        %2570 = vmatpush2.bf16.msra.mxu0 0
        %2571 = vmatprep.subr.bf16.mxu0 0
        %2572 = vmatpush2.bf16.msra.mxu0 0
        %2573 = vmatprep.subr.bf16.mxu0 0
        %2574 = vmatpush2.bf16.msra.mxu0 0
        %2575 = vmatprep.subr.bf16.mxu0 0
        %2576 = vmatpush2.bf16.msra.mxu0 0
        %2577 = vmatprep.subr.bf16.mxu0 0
        %2578 = vmatpush2.bf16.msra.mxu0 0
        %2579 = vmatprep.subr.bf16.mxu0 0
        %2580 = vmatpush2.bf16.msra.mxu0 0
        %2581 = vmatprep.mubr.bf16.mxu0 0
        %2582 = vmatmul.mubr.bf16.gmra.mxu0 %v2315
        %v2583 = vpop.f32.mrf.mxu0
        %v2584 = vadd.f32 %v471, %v2583
        %v2585 = vpop.f32.mrf.mxu0
        %v2586 = vadd.f32 %v472, %v2585
        %v2587 = vpop.f32.mrf.mxu0
        %v2588 = vpop.f32.mrf.mxu0
        %2589 = vdwg.mxu0
        %v2590 = vld [vmem:[%s8] sm:$0xf]
        %v2592 = vlaneseq
        %v2593 = vshrl.u32 %v2592, 7
        %v2594 = vsub.s32 0, %v2593
        %v2595 = vrot.slane %v2590, %v2594
        %v2596 = vlaneseq
        %v2597 = vshrl.u32 %v2596, 7
        %v2598 = vsub.s32 1, %v2597
        %v2599 = vrot.slane %v2590, %v2598
        %v2600 = vlaneseq
        %v2601 = vshrl.u32 %v2600, 7
        %v2602 = vsub.s32 2, %v2601
        %v2603 = vrot.slane %v2590, %v2602
        %v2604 = vlaneseq
        %v2605 = vshrl.u32 %v2604, 7
        %v2606 = vsub.s32 3, %v2605
        %v2607 = vrot.slane %v2590, %v2606
        %v2612 = vadd.f32 %v2543, %v2595
        %v2613 = vadd.f32 %v2545, %v2599
        %v2614 = vadd.f32 %v2584, %v2603
        %v2615 = vadd.f32 %v2586, %v2607
        %v2616 = vmax.f32 %v2612, 0.0
        %v2617 = vmax.f32 %v2613, 0.0
        %v2618 = vmax.f32 %v2614, 0.0
        %v2619 = vmax.f32 %v2615, 0.0
        %v2620 = vpack.c.bf16 %v2616, %v2616
        %v2621 = vpack.c.bf16 %v2617, %v2617
        %v2622 = vpack.c.bf16 %v2618, %v2618
        %v2623 = vpack.c.bf16 %v2619, %v2619
        %v2624 = vld [vmem:[%s9] sm:$0xff]
        %v2625 = vld [vmem:[%s9 + $0x8] sm:$0xff]
        %v2626 = vld [vmem:[%s9 + $0x10] sm:$0xff]
        %v2627 = vld [vmem:[%s9 + $0x18] sm:$0xf]
        %v2628 = vld [vmem:[%s9 + $0x1c] sm:$0xff]
        %v2629 = vld [vmem:[%s9 + $0x24] sm:$0xff]
        %v2630 = vld [vmem:[%s9 + $0x2c] sm:$0xff]
        %v2631 = vld [vmem:[%s9 + $0x34] sm:$0xf]
        %v2632 = vld [vmem:[%s9 + $0x38] sm:$0xff]
        %v2633 = vld [vmem:[%s9 + $0x40] sm:$0xff]
        %v2634 = vld [vmem:[%s9 + $0x48] sm:$0xff]
        %v2635 = vld [vmem:[%s9 + $0x50] sm:$0xf]
        %v2636 = vld [vmem:[%s9 + $0x54] sm:$0xff]
        %v2637 = vld [vmem:[%s9 + $0x5c] sm:$0xff]
        %v2638 = vld [vmem:[%s9 + $0x64] sm:$0xff]
        %v2639 = vld [vmem:[%s9 + $0x6c] sm:$0xf]
        %v2640 = vld [vmem:[%s9 + $0x70] sm:$0xff]
        %v2641 = vld [vmem:[%s9 + $0x78] sm:$0xff]
        %v2642 = vld [vmem:[%s9 + $0x80] sm:$0xff]
        %v2643 = vld [vmem:[%s9 + $0x88] sm:$0xf]
        %v2644 = vld [vmem:[%s9 + $0x8c] sm:$0xff]
        %v2645 = vld [vmem:[%s9 + $0x94] sm:$0xff]
        %v2646 = vld [vmem:[%s9 + $0x9c] sm:$0xff]
        %v2647 = vld [vmem:[%s9 + $0xa4] sm:$0xf]
        %v2648 = vld [vmem:[%s9 + $0xa8] sm:$0xff]
        %v2649 = vld [vmem:[%s9 + $0xb0] sm:$0xff]
        %v2650 = vld [vmem:[%s9 + $0xb8] sm:$0xff]
        %v2651 = vld [vmem:[%s9 + $0xc0] sm:$0xf]
        %v2652 = vld [vmem:[%s9 + $0xc4] sm:$0xff]
        %v2653 = vld [vmem:[%s9 + $0xcc] sm:$0xff]
        %v2654 = vld [vmem:[%s9 + $0xd4] sm:$0xff]
        %v2655 = vld [vmem:[%s9 + $0xdc] sm:$0xf]
        %v2656 = vld [vmem:[%s9 + $0xe0] sm:$0xff]
        %v2657 = vld [vmem:[%s9 + $0xe8] sm:$0xff]
        %v2658 = vld [vmem:[%s9 + $0xf0] sm:$0xff]
        %v2659 = vld [vmem:[%s9 + $0xf8] sm:$0xf]
        %v2660 = vld [vmem:[%s9 + $0xfc] sm:$0xff]
        %v2661 = vld [vmem:[%s9 + $0x104] sm:$0xff]
        %v2662 = vld [vmem:[%s9 + $0x10c] sm:$0xff]
        %v2663 = vld [vmem:[%s9 + $0x114] sm:$0xf]
        %v2664 = vld [vmem:[%s9 + $0x118] sm:$0xff]
        %v2665 = vld [vmem:[%s9 + $0x120] sm:$0xff]
        %v2666 = vld [vmem:[%s9 + $0x128] sm:$0xff]
        %v2667 = vld [vmem:[%s9 + $0x130] sm:$0xf]
        %v2668 = vld [vmem:[%s9 + $0x134] sm:$0xff]
        %v2669 = vld [vmem:[%s9 + $0x13c] sm:$0xff]
        %v2670 = vld [vmem:[%s9 + $0x144] sm:$0xff]
        %v2671 = vld [vmem:[%s9 + $0x14c] sm:$0xf]
        %v2672 = vld [vmem:[%s9 + $0x150] sm:$0xff]
        %v2673 = vld [vmem:[%s9 + $0x158] sm:$0xff]
        %v2674 = vld [vmem:[%s9 + $0x160] sm:$0xff]
        %v2675 = vld [vmem:[%s9 + $0x168] sm:$0xf]
        %v2676 = vld [vmem:[%s9 + $0x16c] sm:$0xff]
        %v2677 = vld [vmem:[%s9 + $0x174] sm:$0xff]
        %v2678 = vld [vmem:[%s9 + $0x17c] sm:$0xff]
        %v2679 = vld [vmem:[%s9 + $0x184] sm:$0xf]
        %v2680 = vld [vmem:[%s9 + $0x188] sm:$0xff]
        %v2681 = vld [vmem:[%s9 + $0x190] sm:$0xff]
        %v2682 = vld [vmem:[%s9 + $0x198] sm:$0xff]
        %v2683 = vld [vmem:[%s9 + $0x1a0] sm:$0xf]
        %v2684 = vld [vmem:[%s9 + $0x1a4] sm:$0xff]
        %v2685 = vld [vmem:[%s9 + $0x1ac] sm:$0xff]
        %v2686 = vld [vmem:[%s9 + $0x1b4] sm:$0xff]
        %v2687 = vld [vmem:[%s9 + $0x1bc] sm:$0xf]
        %v2688 = vld [vmem:[%s9 + $0x1c0] sm:$0xff]
        %v2689 = vld [vmem:[%s9 + $0x1c8] sm:$0xff]
        %v2690 = vld [vmem:[%s9 + $0x1d0] sm:$0xff]
        %v2691 = vld [vmem:[%s9 + $0x1d8] sm:$0xf]
        %v2692 = vld [vmem:[%s9 + $0x1dc] sm:$0xff]
        %v2693 = vld [vmem:[%s9 + $0x1e4] sm:$0xff]
        %v2694 = vld [vmem:[%s9 + $0x1ec] sm:$0xff]
        %v2695 = vld [vmem:[%s9 + $0x1f4] sm:$0xf]
        %v2696 = vld [vmem:[%s9 + $0x1f8] sm:$0xff]
        %v2697 = vld [vmem:[%s9 + $0x200] sm:$0xff]
        %v2698 = vld [vmem:[%s9 + $0x208] sm:$0xff]
        %v2699 = vld [vmem:[%s9 + $0x210] sm:$0xf]
        %v2700 = vld [vmem:[%s9 + $0x214] sm:$0xff]
        %v2701 = vld [vmem:[%s9 + $0x21c] sm:$0xff]
        %v2702 = vld [vmem:[%s9 + $0x224] sm:$0xff]
        %v2703 = vld [vmem:[%s9 + $0x22c] sm:$0xf]
        %v2704 = vld [vmem:[%s9 + $0x230] sm:$0xff]
        %v2705 = vld [vmem:[%s9 + $0x238] sm:$0xff]
        %v2706 = vld [vmem:[%s9 + $0x240] sm:$0xff]
        %v2707 = vld [vmem:[%s9 + $0x248] sm:$0xf]
        %v2708 = vld [vmem:[%s9 + $0x24c] sm:$0xff]
        %v2709 = vld [vmem:[%s9 + $0x254] sm:$0xff]
        %v2710 = vld [vmem:[%s9 + $0x25c] sm:$0xff]
        %v2711 = vld [vmem:[%s9 + $0x264] sm:$0xf]
        %v2712 = vld [vmem:[%s9 + $0x268] sm:$0xff]
        %v2713 = vld [vmem:[%s9 + $0x270] sm:$0xff]
        %v2714 = vld [vmem:[%s9 + $0x278] sm:$0xff]
        %v2715 = vld [vmem:[%s9 + $0x280] sm:$0xf]
        %v2716 = vld [vmem:[%s9 + $0x284] sm:$0xff]
        %v2717 = vld [vmem:[%s9 + $0x28c] sm:$0xff]
        %v2718 = vld [vmem:[%s9 + $0x294] sm:$0xff]
        %v2719 = vld [vmem:[%s9 + $0x29c] sm:$0xf]
        %v2720 = vld [vmem:[%s9 + $0x2a0] sm:$0xff]
        %v2721 = vld [vmem:[%s9 + $0x2a8] sm:$0xff]
        %v2722 = vld [vmem:[%s9 + $0x2b0] sm:$0xff]
        %v2723 = vld [vmem:[%s9 + $0x2b8] sm:$0xf]
        %v2724 = vld [vmem:[%s9 + $0x2bc] sm:$0xff]
        %v2725 = vld [vmem:[%s9 + $0x2c4] sm:$0xff]
        %v2726 = vld [vmem:[%s9 + $0x2cc] sm:$0xff]
        %v2727 = vld [vmem:[%s9 + $0x2d4] sm:$0xf]
        %v2728 = vld [vmem:[%s9 + $0x2d8] sm:$0xff]
        %v2729 = vld [vmem:[%s9 + $0x2e0] sm:$0xff]
        %v2730 = vld [vmem:[%s9 + $0x2e8] sm:$0xff]
        %v2731 = vld [vmem:[%s9 + $0x2f0] sm:$0xf]
        %v2732 = vld [vmem:[%s9 + $0x2f4] sm:$0xff]
        %v2733 = vld [vmem:[%s9 + $0x2fc] sm:$0xff]
        %v2734 = vld [vmem:[%s9 + $0x304] sm:$0xff]
        %v2735 = vld [vmem:[%s9 + $0x30c] sm:$0xf]
        %v2736 = vld [vmem:[%s9 + $0x310] sm:$0xff]
        %v2737 = vld [vmem:[%s9 + $0x318] sm:$0xff]
        %v2738 = vld [vmem:[%s9 + $0x320] sm:$0xff]
        %v2739 = vld [vmem:[%s9 + $0x328] sm:$0xf]
        %v2740 = vld [vmem:[%s9 + $0x32c] sm:$0xff]
        %v2741 = vld [vmem:[%s9 + $0x334] sm:$0xff]
        %v2742 = vld [vmem:[%s9 + $0x33c] sm:$0xff]
        %v2743 = vld [vmem:[%s9 + $0x344] sm:$0xf]
        %v2744 = vld [vmem:[%s9 + $0x348] sm:$0xff]
        %v2745 = vld [vmem:[%s9 + $0x350] sm:$0xff]
        %v2746 = vld [vmem:[%s9 + $0x358] sm:$0xff]
        %v2747 = vld [vmem:[%s9 + $0x360] sm:$0xf]
        %v2748 = vld [vmem:[%s9 + $0x364] sm:$0xff]
        %v2749 = vld [vmem:[%s9 + $0x36c] sm:$0xff]
        %v2750 = vld [vmem:[%s9 + $0x374] sm:$0xff]
        %v2751 = vld [vmem:[%s9 + $0x37c] sm:$0xf]
        %v2752 = vld [vmem:[%s9 + $0x380] sm:$0xff]
        %v2753 = vld [vmem:[%s9 + $0x388] sm:$0xff]
        %v2754 = vld [vmem:[%s9 + $0x390] sm:$0xff]
        %v2755 = vld [vmem:[%s9 + $0x398] sm:$0xf]
        %v2756 = vld [vmem:[%s9 + $0x39c] sm:$0xff]
        %v2757 = vld [vmem:[%s9 + $0x3a4] sm:$0xff]
        %v2758 = vld [vmem:[%s9 + $0x3ac] sm:$0xff]
        %v2759 = vld [vmem:[%s9 + $0x3b4] sm:$0xf]
        %v2760 = vld [vmem:[%s9 + $0x3b8] sm:$0xff]
        %v2761 = vld [vmem:[%s9 + $0x3c0] sm:$0xff]
        %v2762 = vld [vmem:[%s9 + $0x3c8] sm:$0xff]
        %v2763 = vld [vmem:[%s9 + $0x3d0] sm:$0xf]
        %v2764 = vld [vmem:[%s9 + $0x3d4] sm:$0xff]
        %v2765 = vld [vmem:[%s9 + $0x3dc] sm:$0xff]
        %v2766 = vld [vmem:[%s9 + $0x3e4] sm:$0xff]
        %v2767 = vld [vmem:[%s9 + $0x3ec] sm:$0xf]
        %v2768 = vld [vmem:[%s9 + $0x3f0] sm:$0xff]
        %v2769 = vld [vmem:[%s9 + $0x3f8] sm:$0xff]
        %v2770 = vld [vmem:[%s9 + $0x400] sm:$0xff]
        %v2771 = vld [vmem:[%s9 + $0x408] sm:$0xf]
        %v2772 = vld [vmem:[%s9 + $0x40c] sm:$0xff]
        %v2773 = vld [vmem:[%s9 + $0x414] sm:$0xff]
        %v2774 = vld [vmem:[%s9 + $0x41c] sm:$0xff]
        %v2775 = vld [vmem:[%s9 + $0x424] sm:$0xf]
        %v2776 = vld [vmem:[%s9 + $0x428] sm:$0xff]
        %v2777 = vld [vmem:[%s9 + $0x430] sm:$0xff]
        %v2778 = vld [vmem:[%s9 + $0x438] sm:$0xff]
        %v2779 = vld [vmem:[%s9 + $0x440] sm:$0xf]
        %v2780 = vld [vmem:[%s9 + $0x444] sm:$0xff]
        %v2781 = vld [vmem:[%s9 + $0x44c] sm:$0xff]
        %v2782 = vld [vmem:[%s9 + $0x454] sm:$0xff]
        %v2783 = vld [vmem:[%s9 + $0x45c] sm:$0xf]
        %v2784 = vld [vmem:[%s9 + $0x460] sm:$0xff]
        %v2785 = vld [vmem:[%s9 + $0x468] sm:$0xff]
        %v2786 = vld [vmem:[%s9 + $0x470] sm:$0xff]
        %v2787 = vld [vmem:[%s9 + $0x478] sm:$0xf]
        %v2788 = vld [vmem:[%s9 + $0x47c] sm:$0xff]
        %v2789 = vld [vmem:[%s9 + $0x484] sm:$0xff]
        %v2790 = vld [vmem:[%s9 + $0x48c] sm:$0xff]
        %v2791 = vld [vmem:[%s9 + $0x494] sm:$0xf]
        %v2792 = vld [vmem:[%s9 + $0x498] sm:$0xff]
        %v2793 = vld [vmem:[%s9 + $0x4a0] sm:$0xff]
        %v2794 = vld [vmem:[%s9 + $0x4a8] sm:$0xff]
        %v2795 = vld [vmem:[%s9 + $0x4b0] sm:$0xf]
        %v2796 = vld [vmem:[%s9 + $0x4b4] sm:$0xff]
        %v2797 = vld [vmem:[%s9 + $0x4bc] sm:$0xff]
        %v2798 = vld [vmem:[%s9 + $0x4c4] sm:$0xff]
        %v2799 = vld [vmem:[%s9 + $0x4cc] sm:$0xf]
        %v2800 = vld [vmem:[%s9 + $0x4d0] sm:$0xff]
        %v2801 = vld [vmem:[%s9 + $0x4d8] sm:$0xff]
        %v2802 = vld [vmem:[%s9 + $0x4e0] sm:$0xff]
        %v2803 = vld [vmem:[%s9 + $0x4e8] sm:$0xf]
        %v2804 = vld [vmem:[%s9 + $0x4ec] sm:$0xff]
        %v2805 = vld [vmem:[%s9 + $0x4f4] sm:$0xff]
        %v2806 = vld [vmem:[%s9 + $0x4fc] sm:$0xff]
        %v2807 = vld [vmem:[%s9 + $0x504] sm:$0xf]
        %v2808 = vld [vmem:[%s9 + $0x508] sm:$0xff]
        %v2809 = vld [vmem:[%s9 + $0x510] sm:$0xff]
        %v2810 = vld [vmem:[%s9 + $0x518] sm:$0xff]
        %v2811 = vld [vmem:[%s9 + $0x520] sm:$0xf]
        %v2812 = vld [vmem:[%s9 + $0x524] sm:$0xff]
        %v2813 = vld [vmem:[%s9 + $0x52c] sm:$0xff]
        %v2814 = vld [vmem:[%s9 + $0x534] sm:$0xff]
        %v2815 = vld [vmem:[%s9 + $0x53c] sm:$0xf]
        %v2816 = vld [vmem:[%s9 + $0x540] sm:$0xff]
        %v2817 = vld [vmem:[%s9 + $0x548] sm:$0xff]
        %v2818 = vld [vmem:[%s9 + $0x550] sm:$0xff]
        %v2819 = vld [vmem:[%s9 + $0x558] sm:$0xf]
        %v2820 = vld [vmem:[%s9 + $0x55c] sm:$0xff]
        %v2821 = vld [vmem:[%s9 + $0x564] sm:$0xff]
        %v2822 = vld [vmem:[%s9 + $0x56c] sm:$0xff]
        %v2823 = vld [vmem:[%s9 + $0x574] sm:$0xf]
        %v2824 = vld [vmem:[%s9 + $0x578] sm:$0xff]
        %v2825 = vld [vmem:[%s9 + $0x580] sm:$0xff]
        %v2826 = vld [vmem:[%s9 + $0x588] sm:$0xff]
        %v2827 = vld [vmem:[%s9 + $0x590] sm:$0xf]
        %v2828 = vld [vmem:[%s9 + $0x594] sm:$0xff]
        %v2829 = vld [vmem:[%s9 + $0x59c] sm:$0xff]
        %v2830 = vld [vmem:[%s9 + $0x5a4] sm:$0xff]
        %v2831 = vld [vmem:[%s9 + $0x5ac] sm:$0xf]
        %v2832 = vld [vmem:[%s9 + $0x5b0] sm:$0xff]
        %v2833 = vld [vmem:[%s9 + $0x5b8] sm:$0xff]
        %v2834 = vld [vmem:[%s9 + $0x5c0] sm:$0xff]
        %v2835 = vld [vmem:[%s9 + $0x5c8] sm:$0xf]
        %v2836 = vld [vmem:[%s9 + $0x5cc] sm:$0xff]
        %v2837 = vld [vmem:[%s9 + $0x5d4] sm:$0xff]
        %v2838 = vld [vmem:[%s9 + $0x5dc] sm:$0xff]
        %v2839 = vld [vmem:[%s9 + $0x5e4] sm:$0xf]
        %v2840 = vld [vmem:[%s9 + $0x5e8] sm:$0xff]
        %v2841 = vld [vmem:[%s9 + $0x5f0] sm:$0xff]
        %v2842 = vld [vmem:[%s9 + $0x5f8] sm:$0xff]
        %v2843 = vld [vmem:[%s9 + $0x600] sm:$0xf]
        %v2844 = vld [vmem:[%s9 + $0x604] sm:$0xff]
        %v2845 = vld [vmem:[%s9 + $0x60c] sm:$0xff]
        %v2846 = vld [vmem:[%s9 + $0x614] sm:$0xff]
        %v2847 = vld [vmem:[%s9 + $0x61c] sm:$0xf]
        %v2848 = vld [vmem:[%s9 + $0x620] sm:$0xff]
        %v2849 = vld [vmem:[%s9 + $0x628] sm:$0xff]
        %v2850 = vld [vmem:[%s9 + $0x630] sm:$0xff]
        %v2851 = vld [vmem:[%s9 + $0x638] sm:$0xf]
        %v2852 = vld [vmem:[%s9 + $0x63c] sm:$0xff]
        %v2853 = vld [vmem:[%s9 + $0x644] sm:$0xff]
        %v2854 = vld [vmem:[%s9 + $0x64c] sm:$0xff]
        %v2855 = vld [vmem:[%s9 + $0x654] sm:$0xf]
        %v2856 = vld [vmem:[%s9 + $0x658] sm:$0xff]
        %v2857 = vld [vmem:[%s9 + $0x660] sm:$0xff]
        %v2858 = vld [vmem:[%s9 + $0x668] sm:$0xff]
        %v2859 = vld [vmem:[%s9 + $0x670] sm:$0xf]
        %v2860 = vld [vmem:[%s9 + $0x674] sm:$0xff]
        %v2861 = vld [vmem:[%s9 + $0x67c] sm:$0xff]
        %v2862 = vld [vmem:[%s9 + $0x684] sm:$0xff]
        %v2863 = vld [vmem:[%s9 + $0x68c] sm:$0xf]
        %v2864 = vld [vmem:[%s9 + $0x690] sm:$0xff]
        %v2865 = vld [vmem:[%s9 + $0x698] sm:$0xff]
        %v2866 = vld [vmem:[%s9 + $0x6a0] sm:$0xff]
        %v2867 = vld [vmem:[%s9 + $0x6a8] sm:$0xf]
        %v2868 = vld [vmem:[%s9 + $0x6ac] sm:$0xff]
        %v2869 = vld [vmem:[%s9 + $0x6b4] sm:$0xff]
        %v2870 = vld [vmem:[%s9 + $0x6bc] sm:$0xff]
        %v2871 = vld [vmem:[%s9 + $0x6c4] sm:$0xf]
        %v2872 = vld [vmem:[%s9 + $0x6c8] sm:$0xff]
        %v2873 = vld [vmem:[%s9 + $0x6d0] sm:$0xff]
        %v2874 = vld [vmem:[%s9 + $0x6d8] sm:$0xff]
        %v2875 = vld [vmem:[%s9 + $0x6e0] sm:$0xf]
        %v2876 = vld [vmem:[%s9 + $0x6e4] sm:$0xff]
        %v2877 = vld [vmem:[%s9 + $0x6ec] sm:$0xff]
        %v2878 = vld [vmem:[%s9 + $0x6f4] sm:$0xff]
        %v2879 = vld [vmem:[%s9 + $0x6fc] sm:$0xf]
        %v2880 = vld [vmem:[%s10] sm:$0x7f]
        %v2882 = vlaneseq
        %v2883 = vshrl.u32 %v2882, 7
        %v2884 = vsub.s32 0, %v2883
        %v2885 = vrot.slane %v2880, %v2884
        %v2886 = vlaneseq
        %v2887 = vshrl.u32 %v2886, 7
        %v2888 = vsub.s32 1, %v2887
        %v2889 = vrot.slane %v2880, %v2888
        %v2890 = vlaneseq
        %v2891 = vshrl.u32 %v2890, 7
        %v2892 = vsub.s32 2, %v2891
        %v2893 = vrot.slane %v2880, %v2892
        %v2894 = vlaneseq
        %v2895 = vshrl.u32 %v2894, 7
        %v2896 = vsub.s32 3, %v2895
        %v2897 = vrot.slane %v2880, %v2896
        %v2898 = vlaneseq
        %v2899 = vshrl.u32 %v2898, 7
        %v2900 = vsub.s32 4, %v2899
        %v2901 = vrot.slane %v2880, %v2900
        %v2902 = vlaneseq
        %v2903 = vshrl.u32 %v2902, 7
        %v2904 = vsub.s32 5, %v2903
        %v2905 = vrot.slane %v2880, %v2904
        %v2906 = vlaneseq
        %v2907 = vshrl.u32 %v2906, 7
        %v2908 = vsub.s32 6, %v2907
        %v2909 = vrot.slane %v2880, %v2908
        %v3173 = vunpack.c.l.b16 %v2624
        %v3174 = vunpack.c.h.b16 %v2624
        %v3175 = vunpack.c.l.b16 %v2625
        %v3176 = vunpack.c.h.b16 %v2625
        %v3177 = vunpack.c.l.b16 %v2626
        %v3178 = vunpack.c.h.b16 %v2626
        %v3179 = vunpack.c.l.b16 %v2627
        %v3180 = vunpack.c.l.b16 %v2628
        %v3181 = vunpack.c.h.b16 %v2628
        %v3182 = vunpack.c.l.b16 %v2629
        %v3183 = vunpack.c.h.b16 %v2629
        %v3184 = vunpack.c.l.b16 %v2630
        %v3185 = vunpack.c.h.b16 %v2630
        %v3186 = vunpack.c.l.b16 %v2631
        %v3187 = vunpack.c.l.b16 %v2632
        %v3188 = vunpack.c.h.b16 %v2632
        %v3189 = vunpack.c.l.b16 %v2633
        %v3190 = vunpack.c.h.b16 %v2633
        %v3191 = vunpack.c.l.b16 %v2634
        %v3192 = vunpack.c.h.b16 %v2634
        %v3193 = vunpack.c.l.b16 %v2635
        %v3194 = vunpack.c.l.b16 %v2636
        %v3195 = vunpack.c.h.b16 %v2636
        %v3196 = vunpack.c.l.b16 %v2637
        %v3197 = vunpack.c.h.b16 %v2637
        %v3198 = vunpack.c.l.b16 %v2638
        %v3199 = vunpack.c.h.b16 %v2638
        %v3200 = vunpack.c.l.b16 %v2639
        %v3201 = vunpack.c.l.b16 %v2640
        %v3202 = vunpack.c.h.b16 %v2640
        %v3203 = vunpack.c.l.b16 %v2641
        %v3204 = vunpack.c.h.b16 %v2641
        %v3205 = vunpack.c.l.b16 %v2642
        %v3206 = vunpack.c.h.b16 %v2642
        %v3207 = vunpack.c.l.b16 %v2643
        %v3208 = vunpack.c.l.b16 %v2644
        %v3209 = vunpack.c.h.b16 %v2644
        %v3210 = vunpack.c.l.b16 %v2645
        %v3211 = vunpack.c.h.b16 %v2645
        %v3212 = vunpack.c.l.b16 %v2646
        %v3213 = vunpack.c.h.b16 %v2646
        %v3214 = vunpack.c.l.b16 %v2647
        %v3215 = vunpack.c.l.b16 %v2648
        %v3216 = vunpack.c.h.b16 %v2648
        %v3217 = vunpack.c.l.b16 %v2649
        %v3218 = vunpack.c.h.b16 %v2649
        %v3219 = vunpack.c.l.b16 %v2650
        %v3220 = vunpack.c.h.b16 %v2650
        %v3221 = vunpack.c.l.b16 %v2651
        %v3222 = vunpack.c.l.b16 %v2652
        %v3223 = vunpack.c.h.b16 %v2652
        %v3224 = vunpack.c.l.b16 %v2653
        %v3225 = vunpack.c.h.b16 %v2653
        %v3226 = vunpack.c.l.b16 %v2654
        %v3227 = vunpack.c.h.b16 %v2654
        %v3228 = vunpack.c.l.b16 %v2655
        %v3229 = vunpack.c.l.b16 %v2656
        %v3230 = vunpack.c.h.b16 %v2656
        %v3231 = vunpack.c.l.b16 %v2657
        %v3232 = vunpack.c.h.b16 %v2657
        %v3233 = vunpack.c.l.b16 %v2658
        %v3234 = vunpack.c.h.b16 %v2658
        %v3235 = vunpack.c.l.b16 %v2659
        %v3236 = vunpack.c.l.b16 %v2660
        %v3237 = vunpack.c.h.b16 %v2660
        %v3238 = vunpack.c.l.b16 %v2661
        %v3239 = vunpack.c.h.b16 %v2661
        %v3240 = vunpack.c.l.b16 %v2662
        %v3241 = vunpack.c.h.b16 %v2662
        %v3242 = vunpack.c.l.b16 %v2663
        %v3243 = vunpack.c.l.b16 %v2664
        %v3244 = vunpack.c.h.b16 %v2664
        %v3245 = vunpack.c.l.b16 %v2665
        %v3246 = vunpack.c.h.b16 %v2665
        %v3247 = vunpack.c.l.b16 %v2666
        %v3248 = vunpack.c.h.b16 %v2666
        %v3249 = vunpack.c.l.b16 %v2667
        %v3250 = vunpack.c.l.b16 %v2668
        %v3251 = vunpack.c.h.b16 %v2668
        %v3252 = vunpack.c.l.b16 %v2669
        %v3253 = vunpack.c.h.b16 %v2669
        %v3254 = vunpack.c.l.b16 %v2670
        %v3255 = vunpack.c.h.b16 %v2670
        %v3256 = vunpack.c.l.b16 %v2671
        %v3257 = vunpack.c.l.b16 %v2672
        %v3258 = vunpack.c.h.b16 %v2672
        %v3259 = vunpack.c.l.b16 %v2673
        %v3260 = vunpack.c.h.b16 %v2673
        %v3261 = vunpack.c.l.b16 %v2674
        %v3262 = vunpack.c.h.b16 %v2674
        %v3263 = vunpack.c.l.b16 %v2675
        %v3264 = vunpack.c.l.b16 %v2676
        %v3265 = vunpack.c.h.b16 %v2676
        %v3266 = vunpack.c.l.b16 %v2677
        %v3267 = vunpack.c.h.b16 %v2677
        %v3268 = vunpack.c.l.b16 %v2678
        %v3269 = vunpack.c.h.b16 %v2678
        %v3270 = vunpack.c.l.b16 %v2679
        %v3271 = vunpack.c.l.b16 %v2680
        %v3272 = vunpack.c.h.b16 %v2680
        %v3273 = vunpack.c.l.b16 %v2681
        %v3274 = vunpack.c.h.b16 %v2681
        %v3275 = vunpack.c.l.b16 %v2682
        %v3276 = vunpack.c.h.b16 %v2682
        %v3277 = vunpack.c.l.b16 %v2683
        %v3278 = vunpack.c.l.b16 %v2684
        %v3279 = vunpack.c.h.b16 %v2684
        %v3280 = vunpack.c.l.b16 %v2685
        %v3281 = vunpack.c.h.b16 %v2685
        %v3282 = vunpack.c.l.b16 %v2686
        %v3283 = vunpack.c.h.b16 %v2686
        %v3284 = vunpack.c.l.b16 %v2687
        %v3285 = vunpack.c.l.b16 %v2688
        %v3286 = vunpack.c.h.b16 %v2688
        %v3287 = vunpack.c.l.b16 %v2689
        %v3288 = vunpack.c.h.b16 %v2689
        %v3289 = vunpack.c.l.b16 %v2690
        %v3290 = vunpack.c.h.b16 %v2690
        %v3291 = vunpack.c.l.b16 %v2691
        %v3292 = vunpack.c.l.b16 %v2692
        %v3293 = vunpack.c.h.b16 %v2692
        %v3294 = vunpack.c.l.b16 %v2693
        %v3295 = vunpack.c.h.b16 %v2693
        %v3296 = vunpack.c.l.b16 %v2694
        %v3297 = vunpack.c.h.b16 %v2694
        %v3298 = vunpack.c.l.b16 %v2695
        %v3299 = vunpack.c.l.b16 %v2696
        %v3300 = vunpack.c.h.b16 %v2696
        %v3301 = vunpack.c.l.b16 %v2697
        %v3302 = vunpack.c.h.b16 %v2697
        %v3303 = vunpack.c.l.b16 %v2698
        %v3304 = vunpack.c.h.b16 %v2698
        %v3305 = vunpack.c.l.b16 %v2699
        %v3306 = vunpack.c.l.b16 %v2700
        %v3307 = vunpack.c.h.b16 %v2700
        %v3308 = vunpack.c.l.b16 %v2701
        %v3309 = vunpack.c.h.b16 %v2701
        %v3310 = vunpack.c.l.b16 %v2702
        %v3311 = vunpack.c.h.b16 %v2702
        %v3312 = vunpack.c.l.b16 %v2703
        %v3313 = vunpack.c.l.b16 %v2704
        %v3314 = vunpack.c.h.b16 %v2704
        %v3315 = vunpack.c.l.b16 %v2705
        %v3316 = vunpack.c.h.b16 %v2705
        %v3317 = vunpack.c.l.b16 %v2706
        %v3318 = vunpack.c.h.b16 %v2706
        %v3319 = vunpack.c.l.b16 %v2707
        %v3320 = vunpack.c.l.b16 %v2708
        %v3321 = vunpack.c.h.b16 %v2708
        %v3322 = vunpack.c.l.b16 %v2709
        %v3323 = vunpack.c.h.b16 %v2709
        %v3324 = vunpack.c.l.b16 %v2710
        %v3325 = vunpack.c.h.b16 %v2710
        %v3326 = vunpack.c.l.b16 %v2711
        %v3327 = vunpack.c.l.b16 %v2712
        %v3328 = vunpack.c.h.b16 %v2712
        %v3329 = vunpack.c.l.b16 %v2713
        %v3330 = vunpack.c.h.b16 %v2713
        %v3331 = vunpack.c.l.b16 %v2714
        %v3332 = vunpack.c.h.b16 %v2714
        %v3333 = vunpack.c.l.b16 %v2715
        %v3334 = vunpack.c.l.b16 %v2716
        %v3335 = vunpack.c.h.b16 %v2716
        %v3336 = vunpack.c.l.b16 %v2717
        %v3337 = vunpack.c.h.b16 %v2717
        %v3338 = vunpack.c.l.b16 %v2718
        %v3339 = vunpack.c.h.b16 %v2718
        %v3340 = vunpack.c.l.b16 %v2719
        %v3341 = vunpack.c.l.b16 %v2720
        %v3342 = vunpack.c.h.b16 %v2720
        %v3343 = vunpack.c.l.b16 %v2721
        %v3344 = vunpack.c.h.b16 %v2721
        %v3345 = vunpack.c.l.b16 %v2722
        %v3346 = vunpack.c.h.b16 %v2722
        %v3347 = vunpack.c.l.b16 %v2723
        %v3348 = vunpack.c.l.b16 %v2724
        %v3349 = vunpack.c.h.b16 %v2724
        %v3350 = vunpack.c.l.b16 %v2725
        %v3351 = vunpack.c.h.b16 %v2725
        %v3352 = vunpack.c.l.b16 %v2726
        %v3353 = vunpack.c.h.b16 %v2726
        %v3354 = vunpack.c.l.b16 %v2727
        %v3355 = vunpack.c.l.b16 %v2728
        %v3356 = vunpack.c.h.b16 %v2728
        %v3357 = vunpack.c.l.b16 %v2729
        %v3358 = vunpack.c.h.b16 %v2729
        %v3359 = vunpack.c.l.b16 %v2730
        %v3360 = vunpack.c.h.b16 %v2730
        %v3361 = vunpack.c.l.b16 %v2731
        %v3362 = vunpack.c.l.b16 %v2732
        %v3363 = vunpack.c.h.b16 %v2732
        %v3364 = vunpack.c.l.b16 %v2733
        %v3365 = vunpack.c.h.b16 %v2733
        %v3366 = vunpack.c.l.b16 %v2734
        %v3367 = vunpack.c.h.b16 %v2734
        %v3368 = vunpack.c.l.b16 %v2735
        %v3369 = vunpack.c.l.b16 %v2736
        %v3370 = vunpack.c.h.b16 %v2736
        %v3371 = vunpack.c.l.b16 %v2737
        %v3372 = vunpack.c.h.b16 %v2737
        %v3373 = vunpack.c.l.b16 %v2738
        %v3374 = vunpack.c.h.b16 %v2738
        %v3375 = vunpack.c.l.b16 %v2739
        %v3376 = vunpack.c.l.b16 %v2740
        %v3377 = vunpack.c.h.b16 %v2740
        %v3378 = vunpack.c.l.b16 %v2741
        %v3379 = vunpack.c.h.b16 %v2741
        %v3380 = vunpack.c.l.b16 %v2742
        %v3381 = vunpack.c.h.b16 %v2742
        %v3382 = vunpack.c.l.b16 %v2743
        %v3383 = vunpack.c.l.b16 %v2744
        %v3384 = vunpack.c.h.b16 %v2744
        %v3385 = vunpack.c.l.b16 %v2745
        %v3386 = vunpack.c.h.b16 %v2745
        %v3387 = vunpack.c.l.b16 %v2746
        %v3388 = vunpack.c.h.b16 %v2746
        %v3389 = vunpack.c.l.b16 %v2747
        %v3390 = vunpack.c.l.b16 %v2748
        %v3391 = vunpack.c.h.b16 %v2748
        %v3392 = vunpack.c.l.b16 %v2749
        %v3393 = vunpack.c.h.b16 %v2749
        %v3394 = vunpack.c.l.b16 %v2750
        %v3395 = vunpack.c.h.b16 %v2750
        %v3396 = vunpack.c.l.b16 %v2751
        %v3397 = vunpack.c.l.b16 %v2752
        %v3398 = vunpack.c.h.b16 %v2752
        %v3399 = vunpack.c.l.b16 %v2753
        %v3400 = vunpack.c.h.b16 %v2753
        %v3401 = vunpack.c.l.b16 %v2754
        %v3402 = vunpack.c.h.b16 %v2754
        %v3403 = vunpack.c.l.b16 %v2755
        %v3404 = vunpack.c.l.b16 %v2756
        %v3405 = vunpack.c.h.b16 %v2756
        %v3406 = vunpack.c.l.b16 %v2757
        %v3407 = vunpack.c.h.b16 %v2757
        %v3408 = vunpack.c.l.b16 %v2758
        %v3409 = vunpack.c.h.b16 %v2758
        %v3410 = vunpack.c.l.b16 %v2759
        %v3411 = vunpack.c.l.b16 %v2760
        %v3412 = vunpack.c.h.b16 %v2760
        %v3413 = vunpack.c.l.b16 %v2761
        %v3414 = vunpack.c.h.b16 %v2761
        %v3415 = vunpack.c.l.b16 %v2762
        %v3416 = vunpack.c.h.b16 %v2762
        %v3417 = vunpack.c.l.b16 %v2763
        %v3418 = vunpack.c.l.b16 %v2764
        %v3419 = vunpack.c.h.b16 %v2764
        %v3420 = vunpack.c.l.b16 %v2765
        %v3421 = vunpack.c.h.b16 %v2765
        %v3422 = vunpack.c.l.b16 %v2766
        %v3423 = vunpack.c.h.b16 %v2766
        %v3424 = vunpack.c.l.b16 %v2767
        %v3425 = vunpack.c.l.b16 %v2768
        %v3426 = vunpack.c.h.b16 %v2768
        %v3427 = vunpack.c.l.b16 %v2769
        %v3428 = vunpack.c.h.b16 %v2769
        %v3429 = vunpack.c.l.b16 %v2770
        %v3430 = vunpack.c.h.b16 %v2770
        %v3431 = vunpack.c.l.b16 %v2771
        %v3432 = vunpack.c.l.b16 %v2772
        %v3433 = vunpack.c.h.b16 %v2772
        %v3434 = vunpack.c.l.b16 %v2773
        %v3435 = vunpack.c.h.b16 %v2773
        %v3436 = vunpack.c.l.b16 %v2774
        %v3437 = vunpack.c.h.b16 %v2774
        %v3438 = vunpack.c.l.b16 %v2775
        %v3439 = vunpack.c.l.b16 %v2776
        %v3440 = vunpack.c.h.b16 %v2776
        %v3441 = vunpack.c.l.b16 %v2777
        %v3442 = vunpack.c.h.b16 %v2777
        %v3443 = vunpack.c.l.b16 %v2778
        %v3444 = vunpack.c.h.b16 %v2778
        %v3445 = vunpack.c.l.b16 %v2779
        %v3446 = vunpack.c.l.b16 %v2780
        %v3447 = vunpack.c.h.b16 %v2780
        %v3448 = vunpack.c.l.b16 %v2781
        %v3449 = vunpack.c.h.b16 %v2781
        %v3450 = vunpack.c.l.b16 %v2782
        %v3451 = vunpack.c.h.b16 %v2782
        %v3452 = vunpack.c.l.b16 %v2783
        %v3453 = vunpack.c.l.b16 %v2784
        %v3454 = vunpack.c.h.b16 %v2784
        %v3455 = vunpack.c.l.b16 %v2785
        %v3456 = vunpack.c.h.b16 %v2785
        %v3457 = vunpack.c.l.b16 %v2786
        %v3458 = vunpack.c.h.b16 %v2786
        %v3459 = vunpack.c.l.b16 %v2787
        %v3460 = vunpack.c.l.b16 %v2788
        %v3461 = vunpack.c.h.b16 %v2788
        %v3462 = vunpack.c.l.b16 %v2789
        %v3463 = vunpack.c.h.b16 %v2789
        %v3464 = vunpack.c.l.b16 %v2790
        %v3465 = vunpack.c.h.b16 %v2790
        %v3466 = vunpack.c.l.b16 %v2791
        %v3467 = vunpack.c.l.b16 %v2792
        %v3468 = vunpack.c.h.b16 %v2792
        %v3469 = vunpack.c.l.b16 %v2793
        %v3470 = vunpack.c.h.b16 %v2793
        %v3471 = vunpack.c.l.b16 %v2794
        %v3472 = vunpack.c.h.b16 %v2794
        %v3473 = vunpack.c.l.b16 %v2795
        %v3474 = vunpack.c.l.b16 %v2796
        %v3475 = vunpack.c.h.b16 %v2796
        %v3476 = vunpack.c.l.b16 %v2797
        %v3477 = vunpack.c.h.b16 %v2797
        %v3478 = vunpack.c.l.b16 %v2798
        %v3479 = vunpack.c.h.b16 %v2798
        %v3480 = vunpack.c.l.b16 %v2799
        %v3481 = vunpack.c.l.b16 %v2800
        %v3482 = vunpack.c.h.b16 %v2800
        %v3483 = vunpack.c.l.b16 %v2801
        %v3484 = vunpack.c.h.b16 %v2801
        %v3485 = vunpack.c.l.b16 %v2802
        %v3486 = vunpack.c.h.b16 %v2802
        %v3487 = vunpack.c.l.b16 %v2803
        %v3488 = vunpack.c.l.b16 %v2804
        %v3489 = vunpack.c.h.b16 %v2804
        %v3490 = vunpack.c.l.b16 %v2805
        %v3491 = vunpack.c.h.b16 %v2805
        %v3492 = vunpack.c.l.b16 %v2806
        %v3493 = vunpack.c.h.b16 %v2806
        %v3494 = vunpack.c.l.b16 %v2807
        %v3495 = vunpack.c.l.b16 %v2808
        %v3496 = vunpack.c.h.b16 %v2808
        %v3497 = vunpack.c.l.b16 %v2809
        %v3498 = vunpack.c.h.b16 %v2809
        %v3499 = vunpack.c.l.b16 %v2810
        %v3500 = vunpack.c.h.b16 %v2810
        %v3501 = vunpack.c.l.b16 %v2811
        %v3502 = vunpack.c.l.b16 %v2812
        %v3503 = vunpack.c.h.b16 %v2812
        %v3504 = vunpack.c.l.b16 %v2813
        %v3505 = vunpack.c.h.b16 %v2813
        %v3506 = vunpack.c.l.b16 %v2814
        %v3507 = vunpack.c.h.b16 %v2814
        %v3508 = vunpack.c.l.b16 %v2815
        %v3509 = vunpack.c.l.b16 %v2816
        %v3510 = vunpack.c.h.b16 %v2816
        %v3511 = vunpack.c.l.b16 %v2817
        %v3512 = vunpack.c.h.b16 %v2817
        %v3513 = vunpack.c.l.b16 %v2818
        %v3514 = vunpack.c.h.b16 %v2818
        %v3515 = vunpack.c.l.b16 %v2819
        %v3516 = vunpack.c.l.b16 %v2820
        %v3517 = vunpack.c.h.b16 %v2820
        %v3518 = vunpack.c.l.b16 %v2821
        %v3519 = vunpack.c.h.b16 %v2821
        %v3520 = vunpack.c.l.b16 %v2822
        %v3521 = vunpack.c.h.b16 %v2822
        %v3522 = vunpack.c.l.b16 %v2823
        %v3523 = vunpack.c.l.b16 %v2824
        %v3524 = vunpack.c.h.b16 %v2824
        %v3525 = vunpack.c.l.b16 %v2825
        %v3526 = vunpack.c.h.b16 %v2825
        %v3527 = vunpack.c.l.b16 %v2826
        %v3528 = vunpack.c.h.b16 %v2826
        %v3529 = vunpack.c.l.b16 %v2827
        %v3530 = vunpack.c.l.b16 %v2828
        %v3531 = vunpack.c.h.b16 %v2828
        %v3532 = vunpack.c.l.b16 %v2829
        %v3533 = vunpack.c.h.b16 %v2829
        %v3534 = vunpack.c.l.b16 %v2830
        %v3535 = vunpack.c.h.b16 %v2830
        %v3536 = vunpack.c.l.b16 %v2831
        %v3537 = vunpack.c.l.b16 %v2832
        %v3538 = vunpack.c.h.b16 %v2832
        %v3539 = vunpack.c.l.b16 %v2833
        %v3540 = vunpack.c.h.b16 %v2833
        %v3541 = vunpack.c.l.b16 %v2834
        %v3542 = vunpack.c.h.b16 %v2834
        %v3543 = vunpack.c.l.b16 %v2835
        %v3544 = vunpack.c.l.b16 %v2836
        %v3545 = vunpack.c.h.b16 %v2836
        %v3546 = vunpack.c.l.b16 %v2837
        %v3547 = vunpack.c.h.b16 %v2837
        %v3548 = vunpack.c.l.b16 %v2838
        %v3549 = vunpack.c.h.b16 %v2838
        %v3550 = vunpack.c.l.b16 %v2839
        %v3551 = vunpack.c.l.b16 %v2840
        %v3552 = vunpack.c.h.b16 %v2840
        %v3553 = vunpack.c.l.b16 %v2841
        %v3554 = vunpack.c.h.b16 %v2841
        %v3555 = vunpack.c.l.b16 %v2842
        %v3556 = vunpack.c.h.b16 %v2842
        %v3557 = vunpack.c.l.b16 %v2843
        %v3558 = vunpack.c.l.b16 %v2844
        %v3559 = vunpack.c.h.b16 %v2844
        %v3560 = vunpack.c.l.b16 %v2845
        %v3561 = vunpack.c.h.b16 %v2845
        %v3562 = vunpack.c.l.b16 %v2846
        %v3563 = vunpack.c.h.b16 %v2846
        %v3564 = vunpack.c.l.b16 %v2847
        %v3565 = vunpack.c.l.b16 %v2848
        %v3566 = vunpack.c.h.b16 %v2848
        %v3567 = vunpack.c.l.b16 %v2849
        %v3568 = vunpack.c.h.b16 %v2849
        %v3569 = vunpack.c.l.b16 %v2850
        %v3570 = vunpack.c.h.b16 %v2850
        %v3571 = vunpack.c.l.b16 %v2851
        %v3572 = vunpack.c.l.b16 %v2852
        %v3573 = vunpack.c.h.b16 %v2852
        %v3574 = vunpack.c.l.b16 %v2853
        %v3575 = vunpack.c.h.b16 %v2853
        %v3576 = vunpack.c.l.b16 %v2854
        %v3577 = vunpack.c.h.b16 %v2854
        %v3578 = vunpack.c.l.b16 %v2855
        %v3579 = vunpack.c.l.b16 %v2856
        %v3580 = vunpack.c.h.b16 %v2856
        %v3581 = vunpack.c.l.b16 %v2857
        %v3582 = vunpack.c.h.b16 %v2857
        %v3583 = vunpack.c.l.b16 %v2858
        %v3584 = vunpack.c.h.b16 %v2858
        %v3585 = vunpack.c.l.b16 %v2859
        %v3586 = vunpack.c.l.b16 %v2860
        %v3587 = vunpack.c.h.b16 %v2860
        %v3588 = vunpack.c.l.b16 %v2861
        %v3589 = vunpack.c.h.b16 %v2861
        %v3590 = vunpack.c.l.b16 %v2862
        %v3591 = vunpack.c.h.b16 %v2862
        %v3592 = vunpack.c.l.b16 %v2863
        %v3593 = vunpack.c.l.b16 %v2864
        %v3594 = vunpack.c.h.b16 %v2864
        %v3595 = vunpack.c.l.b16 %v2865
        %v3596 = vunpack.c.h.b16 %v2865
        %v3597 = vunpack.c.l.b16 %v2866
        %v3598 = vunpack.c.h.b16 %v2866
        %v3599 = vunpack.c.l.b16 %v2867
        %v3600 = vunpack.c.l.b16 %v2868
        %v3601 = vunpack.c.h.b16 %v2868
        %v3602 = vunpack.c.l.b16 %v2869
        %v3603 = vunpack.c.h.b16 %v2869
        %v3604 = vunpack.c.l.b16 %v2870
        %v3605 = vunpack.c.h.b16 %v2870
        %v3606 = vunpack.c.l.b16 %v2871
        %v3607 = vunpack.c.l.b16 %v2872
        %v3608 = vunpack.c.h.b16 %v2872
        %v3609 = vunpack.c.l.b16 %v2873
        %v3610 = vunpack.c.h.b16 %v2873
        %v3611 = vunpack.c.l.b16 %v2874
        %v3612 = vunpack.c.h.b16 %v2874
        %v3613 = vunpack.c.l.b16 %v2875
        %v3614 = vunpack.c.l.b16 %v2876
        %v3615 = vunpack.c.h.b16 %v2876
        %v3616 = vunpack.c.l.b16 %v2877
        %v3617 = vunpack.c.h.b16 %v2877
        %v3618 = vunpack.c.l.b16 %v2878
        %v3619 = vunpack.c.h.b16 %v2878
        %v3620 = vunpack.c.l.b16 %v2879
        %v3621 = vpack.c.b16 %v3180, %v3173
        %v3622 = vpack.c.b16 %v3181, %v3174
        %v3623 = vpack.c.b16 %v3182, %v3175
        %v3624 = vpack.c.b16 %v3183, %v3176
        %v3625 = vpack.c.b16 %v3184, %v3177
        %v3626 = vpack.c.b16 %v3185, %v3178
        %v3627 = vpack.c.b16 %v3186, %v3179
        %v3628 = vpack.c.b16 %v3194, %v3187
        %v3629 = vpack.c.b16 %v3195, %v3188
        %v3630 = vpack.c.b16 %v3196, %v3189
        %v3631 = vpack.c.b16 %v3197, %v3190
        %v3632 = vpack.c.b16 %v3198, %v3191
        %v3633 = vpack.c.b16 %v3199, %v3192
        %v3634 = vpack.c.b16 %v3200, %v3193
        %v3635 = vpack.c.b16 %v3208, %v3201
        %v3636 = vpack.c.b16 %v3209, %v3202
        %v3637 = vpack.c.b16 %v3210, %v3203
        %v3638 = vpack.c.b16 %v3211, %v3204
        %v3639 = vpack.c.b16 %v3212, %v3205
        %v3640 = vpack.c.b16 %v3213, %v3206
        %v3641 = vpack.c.b16 %v3214, %v3207
        %v3642 = vpack.c.b16 %v3222, %v3215
        %v3643 = vpack.c.b16 %v3223, %v3216
        %v3644 = vpack.c.b16 %v3224, %v3217
        %v3645 = vpack.c.b16 %v3225, %v3218
        %v3646 = vpack.c.b16 %v3226, %v3219
        %v3647 = vpack.c.b16 %v3227, %v3220
        %v3648 = vpack.c.b16 %v3228, %v3221
        %v3649 = vpack.c.b16 %v3236, %v3229
        %v3650 = vpack.c.b16 %v3237, %v3230
        %v3651 = vpack.c.b16 %v3238, %v3231
        %v3652 = vpack.c.b16 %v3239, %v3232
        %v3653 = vpack.c.b16 %v3240, %v3233
        %v3654 = vpack.c.b16 %v3241, %v3234
        %v3655 = vpack.c.b16 %v3242, %v3235
        %v3656 = vpack.c.b16 %v3250, %v3243
        %v3657 = vpack.c.b16 %v3251, %v3244
        %v3658 = vpack.c.b16 %v3252, %v3245
        %v3659 = vpack.c.b16 %v3253, %v3246
        %v3660 = vpack.c.b16 %v3254, %v3247
        %v3661 = vpack.c.b16 %v3255, %v3248
        %v3662 = vpack.c.b16 %v3256, %v3249
        %v3663 = vpack.c.b16 %v3264, %v3257
        %v3664 = vpack.c.b16 %v3265, %v3258
        %v3665 = vpack.c.b16 %v3266, %v3259
        %v3666 = vpack.c.b16 %v3267, %v3260
        %v3667 = vpack.c.b16 %v3268, %v3261
        %v3668 = vpack.c.b16 %v3269, %v3262
        %v3669 = vpack.c.b16 %v3270, %v3263
        %v3670 = vpack.c.b16 %v3278, %v3271
        %v3671 = vpack.c.b16 %v3279, %v3272
        %v3672 = vpack.c.b16 %v3280, %v3273
        %v3673 = vpack.c.b16 %v3281, %v3274
        %v3674 = vpack.c.b16 %v3282, %v3275
        %v3675 = vpack.c.b16 %v3283, %v3276
        %v3676 = vpack.c.b16 %v3284, %v3277
        %v3677 = vpack.c.b16 %v3292, %v3285
        %v3678 = vpack.c.b16 %v3293, %v3286
        %v3679 = vpack.c.b16 %v3294, %v3287
        %v3680 = vpack.c.b16 %v3295, %v3288
        %v3681 = vpack.c.b16 %v3296, %v3289
        %v3682 = vpack.c.b16 %v3297, %v3290
        %v3683 = vpack.c.b16 %v3298, %v3291
        %v3684 = vpack.c.b16 %v3306, %v3299
        %v3685 = vpack.c.b16 %v3307, %v3300
        %v3686 = vpack.c.b16 %v3308, %v3301
        %v3687 = vpack.c.b16 %v3309, %v3302
        %v3688 = vpack.c.b16 %v3310, %v3303
        %v3689 = vpack.c.b16 %v3311, %v3304
        %v3690 = vpack.c.b16 %v3312, %v3305
        %v3691 = vpack.c.b16 %v3320, %v3313
        %v3692 = vpack.c.b16 %v3321, %v3314
        %v3693 = vpack.c.b16 %v3322, %v3315
        %v3694 = vpack.c.b16 %v3323, %v3316
        %v3695 = vpack.c.b16 %v3324, %v3317
        %v3696 = vpack.c.b16 %v3325, %v3318
        %v3697 = vpack.c.b16 %v3326, %v3319
        %v3698 = vpack.c.b16 %v3334, %v3327
        %v3699 = vpack.c.b16 %v3335, %v3328
        %v3700 = vpack.c.b16 %v3336, %v3329
        %v3701 = vpack.c.b16 %v3337, %v3330
        %v3702 = vpack.c.b16 %v3338, %v3331
        %v3703 = vpack.c.b16 %v3339, %v3332
        %v3704 = vpack.c.b16 %v3340, %v3333
        %v3705 = vpack.c.b16 %v3348, %v3341
        %v3706 = vpack.c.b16 %v3349, %v3342
        %v3707 = vpack.c.b16 %v3350, %v3343
        %v3708 = vpack.c.b16 %v3351, %v3344
        %v3709 = vpack.c.b16 %v3352, %v3345
        %v3710 = vpack.c.b16 %v3353, %v3346
        %v3711 = vpack.c.b16 %v3354, %v3347
        %v3712 = vpack.c.b16 %v3362, %v3355
        %v3713 = vpack.c.b16 %v3363, %v3356
        %v3714 = vpack.c.b16 %v3364, %v3357
        %v3715 = vpack.c.b16 %v3365, %v3358
        %v3716 = vpack.c.b16 %v3366, %v3359
        %v3717 = vpack.c.b16 %v3367, %v3360
        %v3718 = vpack.c.b16 %v3368, %v3361
        %v3719 = vpack.c.b16 %v3376, %v3369
        %v3720 = vpack.c.b16 %v3377, %v3370
        %v3721 = vpack.c.b16 %v3378, %v3371
        %v3722 = vpack.c.b16 %v3379, %v3372
        %v3723 = vpack.c.b16 %v3380, %v3373
        %v3724 = vpack.c.b16 %v3381, %v3374
        %v3725 = vpack.c.b16 %v3382, %v3375
        %v3726 = vpack.c.b16 %v3390, %v3383
        %v3727 = vpack.c.b16 %v3391, %v3384
        %v3728 = vpack.c.b16 %v3392, %v3385
        %v3729 = vpack.c.b16 %v3393, %v3386
        %v3730 = vpack.c.b16 %v3394, %v3387
        %v3731 = vpack.c.b16 %v3395, %v3388
        %v3732 = vpack.c.b16 %v3396, %v3389
        %v3733 = vpack.c.b16 %v3404, %v3397
        %v3734 = vpack.c.b16 %v3405, %v3398
        %v3735 = vpack.c.b16 %v3406, %v3399
        %v3736 = vpack.c.b16 %v3407, %v3400
        %v3737 = vpack.c.b16 %v3408, %v3401
        %v3738 = vpack.c.b16 %v3409, %v3402
        %v3739 = vpack.c.b16 %v3410, %v3403
        %v3740 = vpack.c.b16 %v3418, %v3411
        %v3741 = vpack.c.b16 %v3419, %v3412
        %v3742 = vpack.c.b16 %v3420, %v3413
        %v3743 = vpack.c.b16 %v3421, %v3414
        %v3744 = vpack.c.b16 %v3422, %v3415
        %v3745 = vpack.c.b16 %v3423, %v3416
        %v3746 = vpack.c.b16 %v3424, %v3417
        %v3747 = vpack.c.b16 %v3432, %v3425
        %v3748 = vpack.c.b16 %v3433, %v3426
        %v3749 = vpack.c.b16 %v3434, %v3427
        %v3750 = vpack.c.b16 %v3435, %v3428
        %v3751 = vpack.c.b16 %v3436, %v3429
        %v3752 = vpack.c.b16 %v3437, %v3430
        %v3753 = vpack.c.b16 %v3438, %v3431
        %v3754 = vpack.c.b16 %v3446, %v3439
        %v3755 = vpack.c.b16 %v3447, %v3440
        %v3756 = vpack.c.b16 %v3448, %v3441
        %v3757 = vpack.c.b16 %v3449, %v3442
        %v3758 = vpack.c.b16 %v3450, %v3443
        %v3759 = vpack.c.b16 %v3451, %v3444
        %v3760 = vpack.c.b16 %v3452, %v3445
        %v3761 = vpack.c.b16 %v3460, %v3453
        %v3762 = vpack.c.b16 %v3461, %v3454
        %v3763 = vpack.c.b16 %v3462, %v3455
        %v3764 = vpack.c.b16 %v3463, %v3456
        %v3765 = vpack.c.b16 %v3464, %v3457
        %v3766 = vpack.c.b16 %v3465, %v3458
        %v3767 = vpack.c.b16 %v3466, %v3459
        %v3768 = vpack.c.b16 %v3474, %v3467
        %v3769 = vpack.c.b16 %v3475, %v3468
        %v3770 = vpack.c.b16 %v3476, %v3469
        %v3771 = vpack.c.b16 %v3477, %v3470
        %v3772 = vpack.c.b16 %v3478, %v3471
        %v3773 = vpack.c.b16 %v3479, %v3472
        %v3774 = vpack.c.b16 %v3480, %v3473
        %v3775 = vpack.c.b16 %v3488, %v3481
        %v3776 = vpack.c.b16 %v3489, %v3482
        %v3777 = vpack.c.b16 %v3490, %v3483
        %v3778 = vpack.c.b16 %v3491, %v3484
        %v3779 = vpack.c.b16 %v3492, %v3485
        %v3780 = vpack.c.b16 %v3493, %v3486
        %v3781 = vpack.c.b16 %v3494, %v3487
        %v3782 = vpack.c.b16 %v3502, %v3495
        %v3783 = vpack.c.b16 %v3503, %v3496
        %v3784 = vpack.c.b16 %v3504, %v3497
        %v3785 = vpack.c.b16 %v3505, %v3498
        %v3786 = vpack.c.b16 %v3506, %v3499
        %v3787 = vpack.c.b16 %v3507, %v3500
        %v3788 = vpack.c.b16 %v3508, %v3501
        %v3789 = vpack.c.b16 %v3516, %v3509
        %v3790 = vpack.c.b16 %v3517, %v3510
        %v3791 = vpack.c.b16 %v3518, %v3511
        %v3792 = vpack.c.b16 %v3519, %v3512
        %v3793 = vpack.c.b16 %v3520, %v3513
        %v3794 = vpack.c.b16 %v3521, %v3514
        %v3795 = vpack.c.b16 %v3522, %v3515
        %v3796 = vpack.c.b16 %v3530, %v3523
        %v3797 = vpack.c.b16 %v3531, %v3524
        %v3798 = vpack.c.b16 %v3532, %v3525
        %v3799 = vpack.c.b16 %v3533, %v3526
        %v3800 = vpack.c.b16 %v3534, %v3527
        %v3801 = vpack.c.b16 %v3535, %v3528
        %v3802 = vpack.c.b16 %v3536, %v3529
        %v3803 = vpack.c.b16 %v3544, %v3537
        %v3804 = vpack.c.b16 %v3545, %v3538
        %v3805 = vpack.c.b16 %v3546, %v3539
        %v3806 = vpack.c.b16 %v3547, %v3540
        %v3807 = vpack.c.b16 %v3548, %v3541
        %v3808 = vpack.c.b16 %v3549, %v3542
        %v3809 = vpack.c.b16 %v3550, %v3543
        %v3810 = vpack.c.b16 %v3558, %v3551
        %v3811 = vpack.c.b16 %v3559, %v3552
        %v3812 = vpack.c.b16 %v3560, %v3553
        %v3813 = vpack.c.b16 %v3561, %v3554
        %v3814 = vpack.c.b16 %v3562, %v3555
        %v3815 = vpack.c.b16 %v3563, %v3556
        %v3816 = vpack.c.b16 %v3564, %v3557
        %v3817 = vpack.c.b16 %v3572, %v3565
        %v3818 = vpack.c.b16 %v3573, %v3566
        %v3819 = vpack.c.b16 %v3574, %v3567
        %v3820 = vpack.c.b16 %v3575, %v3568
        %v3821 = vpack.c.b16 %v3576, %v3569
        %v3822 = vpack.c.b16 %v3577, %v3570
        %v3823 = vpack.c.b16 %v3578, %v3571
        %v3824 = vpack.c.b16 %v3586, %v3579
        %v3825 = vpack.c.b16 %v3587, %v3580
        %v3826 = vpack.c.b16 %v3588, %v3581
        %v3827 = vpack.c.b16 %v3589, %v3582
        %v3828 = vpack.c.b16 %v3590, %v3583
        %v3829 = vpack.c.b16 %v3591, %v3584
        %v3830 = vpack.c.b16 %v3592, %v3585
        %v3831 = vpack.c.b16 %v3600, %v3593
        %v3832 = vpack.c.b16 %v3601, %v3594
        %v3833 = vpack.c.b16 %v3602, %v3595
        %v3834 = vpack.c.b16 %v3603, %v3596
        %v3835 = vpack.c.b16 %v3604, %v3597
        %v3836 = vpack.c.b16 %v3605, %v3598
        %v3837 = vpack.c.b16 %v3606, %v3599
        %v3838 = vpack.c.b16 %v3614, %v3607
        %v3839 = vpack.c.b16 %v3615, %v3608
        %v3840 = vpack.c.b16 %v3616, %v3609
        %v3841 = vpack.c.b16 %v3617, %v3610
        %v3842 = vpack.c.b16 %v3618, %v3611
        %v3843 = vpack.c.b16 %v3619, %v3612
        %v3844 = vpack.c.b16 %v3620, %v3613
        %4069 = vmatprep.subr.bf16.mxu0 %v3671
        %4070 = vmatpush1.bf16.msra.mxu0 %v3670
        %4071 = vmatprep.subr.bf16.mxu0 %v3664
        %4072 = vmatpush1.bf16.msra.mxu0 %v3663
        %4073 = vmatprep.subr.bf16.mxu0 %v3657
        %4074 = vmatpush1.bf16.msra.mxu0 %v3656
        %4075 = vmatprep.subr.bf16.mxu0 %v3650
        %4076 = vmatpush1.bf16.msra.mxu0 %v3649
        %4077 = vmatprep.subr.bf16.mxu0 %v3643
        %4078 = vmatpush1.bf16.msra.mxu0 %v3642
        %4079 = vmatprep.subr.bf16.mxu0 %v3636
        %4080 = vmatpush1.bf16.msra.mxu0 %v3635
        %4081 = vmatprep.subr.bf16.mxu0 %v3629
        %4082 = vmatpush1.bf16.msra.mxu0 %v3628
        %4083 = vmatprep.subr.bf16.mxu0 %v3622
        %4084 = vmatpush1.bf16.msra.mxu0 %v3621
        %4085 = vmatprep.subr.bf16.mxu0 %v3727
        %4086 = vmatpush2.bf16.msra.mxu0 %v3726
        %4087 = vmatprep.subr.bf16.mxu0 %v3720
        %4088 = vmatpush2.bf16.msra.mxu0 %v3719
        %4089 = vmatprep.subr.bf16.mxu0 %v3713
        %4090 = vmatpush2.bf16.msra.mxu0 %v3712
        %4091 = vmatprep.subr.bf16.mxu0 %v3706
        %4092 = vmatpush2.bf16.msra.mxu0 %v3705
        %4093 = vmatprep.subr.bf16.mxu0 %v3699
        %4094 = vmatpush2.bf16.msra.mxu0 %v3698
        %4095 = vmatprep.subr.bf16.mxu0 %v3692
        %4096 = vmatpush2.bf16.msra.mxu0 %v3691
        %4097 = vmatprep.subr.bf16.mxu0 %v3685
        %4098 = vmatpush2.bf16.msra.mxu0 %v3684
        %4099 = vmatprep.subr.bf16.mxu0 %v3678
        %4100 = vmatpush2.bf16.msra.mxu0 %v3677
        %4101 = vmatprep.mubr.bf16.mxu0 %v2621
        %4102 = vmatmul.mubr.bf16.gmra.mxu0 %v2620
        %v4103 = vpop.f32.mrf.mxu0
        %v4104 = vadd.f32 %v2885, %v4103
        %v4105 = vpop.f32.mrf.mxu0
        %v4106 = vadd.f32 %v2889, %v4105
        %v4107 = vpop.f32.mrf.mxu0
        %v4108 = vpop.f32.mrf.mxu0
        %4109 = vdwg.mxu0
        %4110 = vmatprep.subr.bf16.mxu0 %v3783
        %4111 = vmatpush1.bf16.msra.mxu0 %v3782
        %4112 = vmatprep.subr.bf16.mxu0 %v3776
        %4113 = vmatpush1.bf16.msra.mxu0 %v3775
        %4114 = vmatprep.subr.bf16.mxu0 %v3769
        %4115 = vmatpush1.bf16.msra.mxu0 %v3768
        %4116 = vmatprep.subr.bf16.mxu0 %v3762
        %4117 = vmatpush1.bf16.msra.mxu0 %v3761
        %4118 = vmatprep.subr.bf16.mxu0 %v3755
        %4119 = vmatpush1.bf16.msra.mxu0 %v3754
        %4120 = vmatprep.subr.bf16.mxu0 %v3748
        %4121 = vmatpush1.bf16.msra.mxu0 %v3747
        %4122 = vmatprep.subr.bf16.mxu0 %v3741
        %4123 = vmatpush1.bf16.msra.mxu0 %v3740
        %4124 = vmatprep.subr.bf16.mxu0 %v3734
        %4125 = vmatpush1.bf16.msra.mxu0 %v3733
        %4126 = vmatprep.subr.bf16.mxu0 %v3839
        %4127 = vmatpush2.bf16.msra.mxu0 %v3838
        %4128 = vmatprep.subr.bf16.mxu0 %v3832
        %4129 = vmatpush2.bf16.msra.mxu0 %v3831
        %4130 = vmatprep.subr.bf16.mxu0 %v3825
        %4131 = vmatpush2.bf16.msra.mxu0 %v3824
        %4132 = vmatprep.subr.bf16.mxu0 %v3818
        %4133 = vmatpush2.bf16.msra.mxu0 %v3817
        %4134 = vmatprep.subr.bf16.mxu0 %v3811
        %4135 = vmatpush2.bf16.msra.mxu0 %v3810
        %4136 = vmatprep.subr.bf16.mxu0 %v3804
        %4137 = vmatpush2.bf16.msra.mxu0 %v3803
        %4138 = vmatprep.subr.bf16.mxu0 %v3797
        %4139 = vmatpush2.bf16.msra.mxu0 %v3796
        %4140 = vmatprep.subr.bf16.mxu0 %v3790
        %4141 = vmatpush2.bf16.msra.mxu0 %v3789
        %4142 = vmatprep.mubr.bf16.mxu0 %v2623
        %4143 = vmatmul.mubr.bf16.gmra.mxu0 %v2622
        %v4144 = vpop.f32.mrf.mxu0
        %v4145 = vadd.f32 %v4104, %v4144
        %v4146 = vpop.f32.mrf.mxu0
        %v4147 = vadd.f32 %v4106, %v4146
        %v4148 = vpop.f32.mrf.mxu0
        %v4149 = vpop.f32.mrf.mxu0
        %4150 = vdwg.mxu0
        %4151 = vmatprep.subr.bf16.mxu0 %v3673
        %4152 = vmatpush1.bf16.msra.mxu0 %v3672
        %4153 = vmatprep.subr.bf16.mxu0 %v3666
        %4154 = vmatpush1.bf16.msra.mxu0 %v3665
        %4155 = vmatprep.subr.bf16.mxu0 %v3659
        %4156 = vmatpush1.bf16.msra.mxu0 %v3658
        %4157 = vmatprep.subr.bf16.mxu0 %v3652
        %4158 = vmatpush1.bf16.msra.mxu0 %v3651
        %4159 = vmatprep.subr.bf16.mxu0 %v3645
        %4160 = vmatpush1.bf16.msra.mxu0 %v3644
        %4161 = vmatprep.subr.bf16.mxu0 %v3638
        %4162 = vmatpush1.bf16.msra.mxu0 %v3637
        %4163 = vmatprep.subr.bf16.mxu0 %v3631
        %4164 = vmatpush1.bf16.msra.mxu0 %v3630
        %4165 = vmatprep.subr.bf16.mxu0 %v3624
        %4166 = vmatpush1.bf16.msra.mxu0 %v3623
        %4167 = vmatprep.subr.bf16.mxu0 %v3729
        %4168 = vmatpush2.bf16.msra.mxu0 %v3728
        %4169 = vmatprep.subr.bf16.mxu0 %v3722
        %4170 = vmatpush2.bf16.msra.mxu0 %v3721
        %4171 = vmatprep.subr.bf16.mxu0 %v3715
        %4172 = vmatpush2.bf16.msra.mxu0 %v3714
        %4173 = vmatprep.subr.bf16.mxu0 %v3708
        %4174 = vmatpush2.bf16.msra.mxu0 %v3707
        %4175 = vmatprep.subr.bf16.mxu0 %v3701
        %4176 = vmatpush2.bf16.msra.mxu0 %v3700
        %4177 = vmatprep.subr.bf16.mxu0 %v3694
        %4178 = vmatpush2.bf16.msra.mxu0 %v3693
        %4179 = vmatprep.subr.bf16.mxu0 %v3687
        %4180 = vmatpush2.bf16.msra.mxu0 %v3686
        %4181 = vmatprep.subr.bf16.mxu0 %v3680
        %4182 = vmatpush2.bf16.msra.mxu0 %v3679
        %4183 = vmatprep.mubr.bf16.mxu0 %v2621
        %4184 = vmatmul.mubr.bf16.gmra.mxu0 %v2620
        %v4185 = vpop.f32.mrf.mxu0
        %v4186 = vadd.f32 %v2893, %v4185
        %v4187 = vpop.f32.mrf.mxu0
        %v4188 = vadd.f32 %v2897, %v4187
        %v4189 = vpop.f32.mrf.mxu0
        %v4190 = vpop.f32.mrf.mxu0
        %4191 = vdwg.mxu0
        %4192 = vmatprep.subr.bf16.mxu0 %v3785
        %4193 = vmatpush1.bf16.msra.mxu0 %v3784
        %4194 = vmatprep.subr.bf16.mxu0 %v3778
        %4195 = vmatpush1.bf16.msra.mxu0 %v3777
        %4196 = vmatprep.subr.bf16.mxu0 %v3771
        %4197 = vmatpush1.bf16.msra.mxu0 %v3770
        %4198 = vmatprep.subr.bf16.mxu0 %v3764
        %4199 = vmatpush1.bf16.msra.mxu0 %v3763
        %4200 = vmatprep.subr.bf16.mxu0 %v3757
        %4201 = vmatpush1.bf16.msra.mxu0 %v3756
        %4202 = vmatprep.subr.bf16.mxu0 %v3750
        %4203 = vmatpush1.bf16.msra.mxu0 %v3749
        %4204 = vmatprep.subr.bf16.mxu0 %v3743
        %4205 = vmatpush1.bf16.msra.mxu0 %v3742
        %4206 = vmatprep.subr.bf16.mxu0 %v3736
        %4207 = vmatpush1.bf16.msra.mxu0 %v3735
        %4208 = vmatprep.subr.bf16.mxu0 %v3841
        %4209 = vmatpush2.bf16.msra.mxu0 %v3840
        %4210 = vmatprep.subr.bf16.mxu0 %v3834
        %4211 = vmatpush2.bf16.msra.mxu0 %v3833
        %4212 = vmatprep.subr.bf16.mxu0 %v3827
        %4213 = vmatpush2.bf16.msra.mxu0 %v3826
        %4214 = vmatprep.subr.bf16.mxu0 %v3820
        %4215 = vmatpush2.bf16.msra.mxu0 %v3819
        %4216 = vmatprep.subr.bf16.mxu0 %v3813
        %4217 = vmatpush2.bf16.msra.mxu0 %v3812
        %4218 = vmatprep.subr.bf16.mxu0 %v3806
        %4219 = vmatpush2.bf16.msra.mxu0 %v3805
        %4220 = vmatprep.subr.bf16.mxu0 %v3799
        %4221 = vmatpush2.bf16.msra.mxu0 %v3798
        %4222 = vmatprep.subr.bf16.mxu0 %v3792
        %4223 = vmatpush2.bf16.msra.mxu0 %v3791
        %4224 = vmatprep.mubr.bf16.mxu0 %v2623
        %4225 = vmatmul.mubr.bf16.gmra.mxu0 %v2622
        %v4226 = vpop.f32.mrf.mxu0
        %v4227 = vadd.f32 %v4186, %v4226
        %v4228 = vpop.f32.mrf.mxu0
        %v4229 = vadd.f32 %v4188, %v4228
        %v4230 = vpop.f32.mrf.mxu0
        %v4231 = vpop.f32.mrf.mxu0
        %4232 = vdwg.mxu0
        %4233 = vmatprep.subr.bf16.mxu0 %v3675
        %4234 = vmatpush1.bf16.msra.mxu0 %v3674
        %4235 = vmatprep.subr.bf16.mxu0 %v3668
        %4236 = vmatpush1.bf16.msra.mxu0 %v3667
        %4237 = vmatprep.subr.bf16.mxu0 %v3661
        %4238 = vmatpush1.bf16.msra.mxu0 %v3660
        %4239 = vmatprep.subr.bf16.mxu0 %v3654
        %4240 = vmatpush1.bf16.msra.mxu0 %v3653
        %4241 = vmatprep.subr.bf16.mxu0 %v3647
        %4242 = vmatpush1.bf16.msra.mxu0 %v3646
        %4243 = vmatprep.subr.bf16.mxu0 %v3640
        %4244 = vmatpush1.bf16.msra.mxu0 %v3639
        %4245 = vmatprep.subr.bf16.mxu0 %v3633
        %4246 = vmatpush1.bf16.msra.mxu0 %v3632
        %4247 = vmatprep.subr.bf16.mxu0 %v3626
        %4248 = vmatpush1.bf16.msra.mxu0 %v3625
        %4249 = vmatprep.subr.bf16.mxu0 %v3731
        %4250 = vmatpush2.bf16.msra.mxu0 %v3730
        %4251 = vmatprep.subr.bf16.mxu0 %v3724
        %4252 = vmatpush2.bf16.msra.mxu0 %v3723
        %4253 = vmatprep.subr.bf16.mxu0 %v3717
        %4254 = vmatpush2.bf16.msra.mxu0 %v3716
        %4255 = vmatprep.subr.bf16.mxu0 %v3710
        %4256 = vmatpush2.bf16.msra.mxu0 %v3709
        %4257 = vmatprep.subr.bf16.mxu0 %v3703
        %4258 = vmatpush2.bf16.msra.mxu0 %v3702
        %4259 = vmatprep.subr.bf16.mxu0 %v3696
        %4260 = vmatpush2.bf16.msra.mxu0 %v3695
        %4261 = vmatprep.subr.bf16.mxu0 %v3689
        %4262 = vmatpush2.bf16.msra.mxu0 %v3688
        %4263 = vmatprep.subr.bf16.mxu0 %v3682
        %4264 = vmatpush2.bf16.msra.mxu0 %v3681
        %4265 = vmatprep.mubr.bf16.mxu0 %v2621
        %4266 = vmatmul.mubr.bf16.gmra.mxu0 %v2620
        %v4267 = vpop.f32.mrf.mxu0
        %v4268 = vadd.f32 %v2901, %v4267
        %v4269 = vpop.f32.mrf.mxu0
        %v4270 = vadd.f32 %v2905, %v4269
        %v4271 = vpop.f32.mrf.mxu0
        %v4272 = vpop.f32.mrf.mxu0
        %4273 = vdwg.mxu0
        %4274 = vmatprep.subr.bf16.mxu0 %v3787
        %4275 = vmatpush1.bf16.msra.mxu0 %v3786
        %4276 = vmatprep.subr.bf16.mxu0 %v3780
        %4277 = vmatpush1.bf16.msra.mxu0 %v3779
        %4278 = vmatprep.subr.bf16.mxu0 %v3773
        %4279 = vmatpush1.bf16.msra.mxu0 %v3772
        %4280 = vmatprep.subr.bf16.mxu0 %v3766
        %4281 = vmatpush1.bf16.msra.mxu0 %v3765
        %4282 = vmatprep.subr.bf16.mxu0 %v3759
        %4283 = vmatpush1.bf16.msra.mxu0 %v3758
        %4284 = vmatprep.subr.bf16.mxu0 %v3752
        %4285 = vmatpush1.bf16.msra.mxu0 %v3751
        %4286 = vmatprep.subr.bf16.mxu0 %v3745
        %4287 = vmatpush1.bf16.msra.mxu0 %v3744
        %4288 = vmatprep.subr.bf16.mxu0 %v3738
        %4289 = vmatpush1.bf16.msra.mxu0 %v3737
        %4290 = vmatprep.subr.bf16.mxu0 %v3843
        %4291 = vmatpush2.bf16.msra.mxu0 %v3842
        %4292 = vmatprep.subr.bf16.mxu0 %v3836
        %4293 = vmatpush2.bf16.msra.mxu0 %v3835
        %4294 = vmatprep.subr.bf16.mxu0 %v3829
        %4295 = vmatpush2.bf16.msra.mxu0 %v3828
        %4296 = vmatprep.subr.bf16.mxu0 %v3822
        %4297 = vmatpush2.bf16.msra.mxu0 %v3821
        %4298 = vmatprep.subr.bf16.mxu0 %v3815
        %4299 = vmatpush2.bf16.msra.mxu0 %v3814
        %4300 = vmatprep.subr.bf16.mxu0 %v3808
        %4301 = vmatpush2.bf16.msra.mxu0 %v3807
        %4302 = vmatprep.subr.bf16.mxu0 %v3801
        %4303 = vmatpush2.bf16.msra.mxu0 %v3800
        %4304 = vmatprep.subr.bf16.mxu0 %v3794
        %4305 = vmatpush2.bf16.msra.mxu0 %v3793
        %4306 = vmatprep.mubr.bf16.mxu0 %v2623
        %4307 = vmatmul.mubr.bf16.gmra.mxu0 %v2622
        %v4308 = vpop.f32.mrf.mxu0
        %v4309 = vadd.f32 %v4268, %v4308
        %v4310 = vpop.f32.mrf.mxu0
        %v4311 = vadd.f32 %v4270, %v4310
        %v4312 = vpop.f32.mrf.mxu0
        %v4313 = vpop.f32.mrf.mxu0
        %4314 = vdwg.mxu0
        %4315 = vmatprep.subr.bf16.mxu0 0
        %4316 = vmatpush1.bf16.msra.mxu0 %v3676
        %4317 = vmatprep.subr.bf16.mxu0 0
        %4318 = vmatpush1.bf16.msra.mxu0 %v3669
        %4319 = vmatprep.subr.bf16.mxu0 0
        %4320 = vmatpush1.bf16.msra.mxu0 %v3662
        %4321 = vmatprep.subr.bf16.mxu0 0
        %4322 = vmatpush1.bf16.msra.mxu0 %v3655
        %4323 = vmatprep.subr.bf16.mxu0 0
        %4324 = vmatpush1.bf16.msra.mxu0 %v3648
        %4325 = vmatprep.subr.bf16.mxu0 0
        %4326 = vmatpush1.bf16.msra.mxu0 %v3641
        %4327 = vmatprep.subr.bf16.mxu0 0
        %4328 = vmatpush1.bf16.msra.mxu0 %v3634
        %4329 = vmatprep.subr.bf16.mxu0 0
        %4330 = vmatpush1.bf16.msra.mxu0 %v3627
        %4331 = vmatprep.subr.bf16.mxu0 0
        %4332 = vmatpush2.bf16.msra.mxu0 %v3732
        %4333 = vmatprep.subr.bf16.mxu0 0
        %4334 = vmatpush2.bf16.msra.mxu0 %v3725
        %4335 = vmatprep.subr.bf16.mxu0 0
        %4336 = vmatpush2.bf16.msra.mxu0 %v3718
        %4337 = vmatprep.subr.bf16.mxu0 0
        %4338 = vmatpush2.bf16.msra.mxu0 %v3711
        %4339 = vmatprep.subr.bf16.mxu0 0
        %4340 = vmatpush2.bf16.msra.mxu0 %v3704
        %4341 = vmatprep.subr.bf16.mxu0 0
        %4342 = vmatpush2.bf16.msra.mxu0 %v3697
        %4343 = vmatprep.subr.bf16.mxu0 0
        %4344 = vmatpush2.bf16.msra.mxu0 %v3690
        %4345 = vmatprep.subr.bf16.mxu0 0
        %4346 = vmatpush2.bf16.msra.mxu0 %v3683
        %4347 = vmatprep.mubr.bf16.mxu0 %v2621
        %4348 = vmatmul.mubr.bf16.gmra.mxu0 %v2620
        %v4349 = vpop.f32.mrf.mxu0
        %v4350 = vadd.f32 %v2909, %v4349
        %v4351 = vpop.f32.mrf.mxu0
        %v4352 = vpop.f32.mrf.mxu0
        %v4353 = vpop.f32.mrf.mxu0
        %4354 = vdwg.mxu0
        %4355 = vmatprep.subr.bf16.mxu0 0
        %4356 = vmatpush1.bf16.msra.mxu0 %v3788
        %4357 = vmatprep.subr.bf16.mxu0 0
        %4358 = vmatpush1.bf16.msra.mxu0 %v3781
        %4359 = vmatprep.subr.bf16.mxu0 0
        %4360 = vmatpush1.bf16.msra.mxu0 %v3774
        %4361 = vmatprep.subr.bf16.mxu0 0
        %4362 = vmatpush1.bf16.msra.mxu0 %v3767
        %4363 = vmatprep.subr.bf16.mxu0 0
        %4364 = vmatpush1.bf16.msra.mxu0 %v3760
        %4365 = vmatprep.subr.bf16.mxu0 0
        %4366 = vmatpush1.bf16.msra.mxu0 %v3753
        %4367 = vmatprep.subr.bf16.mxu0 0
        %4368 = vmatpush1.bf16.msra.mxu0 %v3746
        %4369 = vmatprep.subr.bf16.mxu0 0
        %4370 = vmatpush1.bf16.msra.mxu0 %v3739
        %4371 = vmatprep.subr.bf16.mxu0 0
        %4372 = vmatpush2.bf16.msra.mxu0 %v3844
        %4373 = vmatprep.subr.bf16.mxu0 0
        %4374 = vmatpush2.bf16.msra.mxu0 %v3837
        %4375 = vmatprep.subr.bf16.mxu0 0
        %4376 = vmatpush2.bf16.msra.mxu0 %v3830
        %4377 = vmatprep.subr.bf16.mxu0 0
        %4378 = vmatpush2.bf16.msra.mxu0 %v3823
        %4379 = vmatprep.subr.bf16.mxu0 0
        %4380 = vmatpush2.bf16.msra.mxu0 %v3816
        %4381 = vmatprep.subr.bf16.mxu0 0
        %4382 = vmatpush2.bf16.msra.mxu0 %v3809
        %4383 = vmatprep.subr.bf16.mxu0 0
        %4384 = vmatpush2.bf16.msra.mxu0 %v3802
        %4385 = vmatprep.subr.bf16.mxu0 0
        %4386 = vmatpush2.bf16.msra.mxu0 %v3795
        %4387 = vmatprep.mubr.bf16.mxu0 %v2623
        %4388 = vmatmul.mubr.bf16.gmra.mxu0 %v2622
        %v4389 = vpop.f32.mrf.mxu0
        %v4390 = vadd.f32 %v4350, %v4389
        %v4391 = vpop.f32.mrf.mxu0
        %v4392 = vpop.f32.mrf.mxu0
        %v4393 = vpop.f32.mrf.mxu0
        %4394 = vdwg.mxu0
        %v4395 = vxor.u32 %v4145, 2147483648
        %v4396 = vxor.u32 %v4147, 2147483648
        %v4397 = vxor.u32 %v4227, 2147483648
        %v4398 = vxor.u32 %v4229, 2147483648
        %v4399 = vxor.u32 %v4309, 2147483648
        %v4400 = vxor.u32 %v4311, 2147483648
        %v4401 = vxor.u32 %v4390, 2147483648
        %v4402 = vmul.f32 %v4395, 1.442695
        %v4403 = vpow.pop %v4402
        %v4404 = vmul.f32 %v4396, 1.442695
        %v4405 = vpow.pop %v4404
        %v4406 = vmul.f32 %v4397, 1.442695
        %v4407 = vpow.pop %v4406
        %v4408 = vmul.f32 %v4398, 1.442695
        %v4409 = vpow.pop %v4408
        %v4410 = vmul.f32 %v4399, 1.442695
        %v4411 = vpow.pop %v4410
        %v4412 = vmul.f32 %v4400, 1.442695
        %v4413 = vpow.pop %v4412
        %v4414 = vmul.f32 %v4401, 1.442695
        %v4415 = vpow.pop %v4414
        %v4416 = vadd.f32 %v4403, 1.0
        %v4417 = vadd.f32 %v4405, 1.0
        %v4418 = vadd.f32 %v4407, 1.0
        %v4419 = vadd.f32 %v4409, 1.0
        %v4420 = vadd.f32 %v4411, 1.0
        %v4421 = vadd.f32 %v4413, 1.0
        %v4422 = vadd.f32 %v4415, 1.0
        %v4423 = vrcp.pop %v4416
        %v4424 = vmul.f32 1.0, %v4423
        %v4425 = vrcp.pop %v4417
        %v4426 = vmul.f32 1.0, %v4425
        %v4427 = vrcp.pop %v4418
        %v4428 = vmul.f32 1.0, %v4427
        %v4429 = vrcp.pop %v4419
        %v4430 = vmul.f32 1.0, %v4429
        %v4431 = vrcp.pop %v4420
        %v4432 = vmul.f32 1.0, %v4431
        %v4433 = vrcp.pop %v4421
        %v4434 = vmul.f32 1.0, %v4433
        %v4435 = vrcp.pop %v4422
        %v4436 = vmul.f32 1.0, %v4435
        %v4437 = vpack.c.bf16 %v4424, %v4424
        %v4438 = vpack.c.bf16 %v4426, %v4426
        %v4439 = vpack.c.bf16 %v4428, %v4428
        %v4440 = vpack.c.bf16 %v4430, %v4430
        %v4441 = vpack.c.bf16 %v4432, %v4432
        %v4442 = vpack.c.bf16 %v4434, %v4434
        %v4443 = vpack.c.bf16 %v4436, %v4436
        %v4451 = vunpack.c.l.b16 %v4437
        %v4452 = vunpack.c.l.b16 %v4438
        %v4453 = vunpack.c.l.b16 %v4439
        %v4454 = vunpack.c.l.b16 %v4440
        %v4455 = vunpack.c.l.b16 %v4441
        %v4456 = vunpack.c.l.b16 %v4442
        %v4457 = vunpack.c.l.b16 %v4443
        %v4458 = vpack.c.b16 %v4452, %v4451
        %v4459 = vpack.c.b16 %v4454, %v4453
        %v4460 = vpack.c.b16 %v4456, %v4455
        %v4461 = vpack.c.b16 %v4457, %v4457
        %4466 = vst [vmem:[%s438] sm:$0xff] %v4458
        %4467 = vst [vmem:[%s438 + $0x8] sm:$0xff] %v4459
        %4468 = vst [vmem:[%s438 + $0x10] sm:$0xff] %v4460
        %vm4469 = vcmask 125952
        %4470 = vst.msk [vmem:[%s438 + $0x18] sm:$0xf] %vm4469, %v4461
        %s4471 = sand.u32 %s284, 1
        %s4472 = scalar_lea.sflag [#allocation3], %s4471
        %s4473 = sand.u32 %s284, 1
        %s4474 = smul.addr %s4473, 28
        %s4475 = scalar_lea.vmem [#allocation2], %s4474
        %s4476 = sand.u32 %s310, 1
        %s4477 = scalar_lea.sflag [#allocation5], %s4476
        %s4478 = sand.u32 %s310, 1
        %s4479 = smul.addr %s4478, 16
        %s4480 = scalar_lea.vmem [#allocation4], %s4479
        // Predicated region
        $region65: #{tpu_custom_call.1} parent=63 // pred_check
          %p4481 = pneg %p294
        $region66: #{tpu_custom_call.1} parent=63 // pred_check_branch
          %4483 = sbr.rel (%p4481) target = $region68
        $region67: #{tpu_custom_call.1} parent=63 // pred_region
          %s4485 = ssub.s32 448, 448
          %4486 = vsyncadd %s4472, %s4485
          %s4487 = smul.addr %s30, 7
          %s4488 = smul.addr %s4487, 64
          %s4489 = scalar_lea.hbm %s11, %s4488
          %s4491 = sshll.u32 %s4475, 4
          %s4492 = int_to_ptr.vmem [resolvable:$true] %s4491
          %4494 = dma.vmem_to_hbm [thread:$0]  %s4492, 448, %s4489, %s4472
        $region68: #{tpu_custom_call.1} parent=63 // pred_fallthru
          _
        // Predicated region
        $region69: #{tpu_custom_call.1} parent=63 // pred_check
          %p4495 = pneg %p320
        $region70: #{tpu_custom_call.1} parent=63 // pred_check_branch
          %4497 = sbr.rel (%p4495) target = $region72
        $region71: #{tpu_custom_call.1} parent=63 // pred_region
          %s4499 = ssub.s32 256, 256
          %4500 = vsyncadd %s4477, %s4499
          %s4501 = smul.addr %s30, 2
          %s4502 = smul.addr %s4501, 128
          %s4503 = scalar_lea.hbm %s12, %s4502
          %s4505 = sshll.u32 %s4480, 4
          %s4506 = int_to_ptr.vmem [resolvable:$true] %s4505
          %4508 = dma.vmem_to_hbm [thread:$0]  %s4506, 256, %s4503, %s4477
        $region72: #{tpu_custom_call.1} parent=63 // pred_fallthru
          _
      $region64: #{tpu_custom_call.1} parent=5 // pred_fallthru
        _
      %p4509 = scmp.le.s32.totalorder 2, %s25
      // Predicated region
      $region73: #{tpu_custom_call.1} parent=5 // pred_check
        %p4510 = pneg %p4509
      $region74: #{tpu_custom_call.1} parent=5 // pred_check_branch
        %4512 = sbr.rel (%p4510) target = $region76
      $region75: #{tpu_custom_call.1} parent=5 // pred_region
        %s4513 = ssub.s32 %s25, 2
        // Predicated region
        $region77: #{tpu_custom_call.1} parent=75 // pred_check
          %p4514 = pneg %p300
        $region78: #{tpu_custom_call.1} parent=75 // pred_check_branch
          %4516 = sbr.rel (%p4514) target = $region80
        $region79: #{tpu_custom_call.1} parent=75 // pred_region
          %s4517 = sand.u32 %s285, 1
          %s4518 = scalar_lea.sflag [#allocation3], %s4517
          %s4519 = sand.u32 %s285, 1
          %s4520 = smul.addr %s4519, 28
          %s4521 = scalar_lea.vmem [#allocation2], %s4520
          %4522 = dma.done %s4518, 448
        $region80: #{tpu_custom_call.1} parent=75 // pred_fallthru
          _
        // Predicated region
        $region81: #{tpu_custom_call.1} parent=75 // pred_check
          %p4523 = pneg %p326
        $region82: #{tpu_custom_call.1} parent=75 // pred_check_branch
          %4525 = sbr.rel (%p4523) target = $region84
        $region83: #{tpu_custom_call.1} parent=75 // pred_region
          %s4526 = sand.u32 %s311, 1
          %s4527 = scalar_lea.sflag [#allocation5], %s4526
          %s4528 = sand.u32 %s311, 1
          %s4529 = smul.addr %s4528, 16
          %s4530 = scalar_lea.vmem [#allocation4], %s4529
          %4531 = dma.done %s4527, 256
        $region84: #{tpu_custom_call.1} parent=75 // pred_fallthru
          _
      $region76: #{tpu_custom_call.1} parent=5 // pred_fallthru
        _
    $region6: #{tpu_custom_call.1} parent=1 // loop_footer
      %s29 = sadd.s32 1, %s25
    $region7: #{tpu_custom_call.1} parent=1 // loop_footer_branch
      %24 = sbr.rel target = $region3
    $region8: #{tpu_custom_call.1} parent=1 // loop_exit
      _
    %4532 = vsyncpa [#allocation3], 1
    %s4533 = scalar_lea.sflag [#allocation3], 1
    %4534 = vsyncpa %s4533, 1
    %4535 = vsyncpa [#allocation5], 1
    %s4536 = scalar_lea.sflag [#allocation5], 1
    %4537 = vsyncpa %s4536, 1

</llo_original>
